<compile_context>
chip_gen: v5e
topology: v5e:2x2
jax: 0.10.0
libtpu: 0.0.40
codegen_flags: <defaults>
</compile_context>

<pallas_src>
import functools

import numpy as np

import jax
import jax.numpy as jnp
from jax.experimental import pallas as pl
from jax.experimental.pallas import tpu as pltpu


# ----------------------- host-side weight preprocessing ---------------------

def _banded_conv_weights(w, in_w, out_w):
    """Bake the (kw, cin) contraction and the pool's stride-2 column
    subsampling of a 5x5 VALID conv into per-(dw, kh) banded matrices.

    w: (O, I, K, K) torch-layout conv weight (numpy).
    Returns B of shape (2, K, in_w * I, out_w * O) with
      B[dw, kh, w_in * I + ci, w_out * O + co] =
          w[co, ci, kh, w_in - (2 * w_out + dw)]   if 0 <= w_in-(2*w_out+dw) < K
    so that   slab(kh) @ B[dw, kh]   sums over (kw, cin) for pooled column dw.
    """
    O, I, K, _ = w.shape
    B = np.zeros((2, K, in_w, I, out_w, O), np.float32)
    for dw in (0, 1):
        for kh in range(K):
            for pw in range(out_w):
                for kw in range(K):
                    B[dw, kh, 2 * pw + dw + kw, :, pw, :] = w[:, :, kh, kw].T
    return B.reshape(2, K, in_w * I, out_w * O)


def prepare_lenet_params(params):
    """One-time host-side prep of torch-layout weights into kernel-ready form
    (banded conv matrices, channel-tiled bias rows, pre-transposed/permuted FC
    weights).  Hoist this out of the hot path."""
    w1 = np.asarray(params["conv1_w"], np.float32)      # (6, 1, 5, 5)
    b1 = np.asarray(params["conv1_b"], np.float32)      # (6,)
    w2 = np.asarray(params["conv2_w"], np.float32)      # (16, 6, 5, 5)
    b2 = np.asarray(params["conv2_b"], np.float32)      # (16,)
    f1w = np.asarray(params["f1_w"], np.float32)        # (120, 400)
    f2w = np.asarray(params["f2_w"], np.float32)        # (84, 120)
    f3w = np.asarray(params["f3_w"], np.float32)        # (10, 84)

    prep = {
        "b1": _banded_conv_weights(w1, in_w=32, out_w=14),   # (2, 5, 32, 84)
        "c1b": np.tile(b1, 14).reshape(1, 84),               # cols = (pw, c)
        "b2": _banded_conv_weights(w2, in_w=14, out_w=5),    # (2, 5, 84, 80)
        "c2b": np.tile(b2, 5).reshape(1, 80),
        # fc1 columns permuted from torch's (c, h, w) flatten order to this
        # kernel's (h, (w, c)) pooled layout, split per pooled row.
        "f1w": f1w.reshape(120, 16, 5, 5)
                  .transpose(2, 3, 1, 0).reshape(5, 80, 120),
        "f1b": np.asarray(params["f1_b"], np.float32).reshape(1, 120),
        "f2w": np.ascontiguousarray(f2w.T),                  # (120, 84)
        "f2b": np.asarray(params["f2_b"], np.float32).reshape(1, 84),
        "f3w": np.ascontiguousarray(f3w.T),                  # (84, 10)
        "f3b": np.asarray(params["f3_b"], np.float32).reshape(1, 10),
    }
    return {k: jnp.asarray(v) for k, v in prep.items()}


# ------------------------------ fused kernel --------------------------------

def _lenet_kernel(x_ref, b1_ref, c1b_ref, b2_ref, c2b_ref,
                  f1w_ref, f1b_ref, f2w_ref, f2b_ref, f3w_ref, f3b_ref,
                  o_ref, p1_ref, pool2_ref):
    # x_ref: (1, 4, 8, 32) row-phase-split input: x_ref[0, r, i, w] = x[4*i+r, w]

    # ---- conv1 (1->6, 5x5) + ReLU + 2x2 maxpool, row-parity-split output ----
    # p1_ref[par][q, pw*6 + c] = pooled value at pooled row (2*q + par).
    c1b = c1b_ref[...]                                             # (1, 84)
    for par in (0, 1):
        best = None
        for dh in (0, 1):
            acc = [None, None]
            for kh in range(5):
                s = 2 * par + dh + kh                              # input row offset
                slab = x_ref[0, s % 4, (s // 4):(s // 4) + 7, :]   # (7, 32)
                for dw in (0, 1):
                    t = jnp.dot(slab, b1_ref[dw, kh],
                                preferred_element_type=jnp.float32)  # (7, 84)
                    acc[dw] = t if acc[dw] is None else acc[dw] + t
            for dw in (0, 1):
                y = jnp.maximum(acc[dw] + c1b, 0.0)
                best = y if best is None else jnp.maximum(best, y)
        p1_ref[par] = best                                         # (7, 84)

    # ---- conv2 (6->16, 5x5) + ReLU + 2x2 maxpool -> (5, 80) -----------------
    c2b = c2b_ref[...]                                             # (1, 80)
    pool2 = None
    for dh in (0, 1):
        acc = [None, None]
        for kh in range(5):
            s = dh + kh
            slab = p1_ref[s % 2, (s // 2):(s // 2) + 5, :]         # (5, 84)
            for dw in (0, 1):
                t = jnp.dot(slab, b2_ref[dw, kh],
                            preferred_element_type=jnp.float32)    # (5, 80)
                acc[dw] = t if acc[dw] is None else acc[dw] + t
        for dw in (0, 1):
            y = jnp.maximum(acc[dw] + c2b, 0.0)
            pool2 = y if pool2 is None else jnp.maximum(pool2, y)
    pool2_ref[...] = pool2                          # rows = h, cols = (w, c)

    # ---- fc1 (400 -> 120) + ReLU: sum of 5 (1,80)x(80,120) matmuls ----------
    acc = None
    for ph in range(5):
        t = jnp.dot(pool2_ref[ph:ph + 1, :], f1w_ref[ph],
                    preferred_element_type=jnp.float32)            # (1, 120)
        acc = t if acc is None else acc + t
    h = jnp.maximum(acc + f1b_ref[...], 0.0)                       # (1, 120)

    # ---- fc2 (120 -> 84) + ReLU ---------------------------------------------
    h = jnp.maximum(
        jnp.dot(h, f2w_ref[...], preferred_element_type=jnp.float32)
        + f2b_ref[...], 0.0)                                       # (1, 84)

    # ---- fc3 (84 -> 10) + log_softmax ---------------------------------------
    logits = jnp.dot(h, f3w_ref[...],
                     preferred_element_type=jnp.float32) + f3b_ref[...]  # (1, 10)
    m = jnp.max(logits, axis=-1, keepdims=True)
    shifted = logits - m
    lse = jnp.log(jnp.sum(jnp.exp(shifted), axis=-1, keepdims=True))
    o_ref[0] = (shifted - lse).astype(o_ref.dtype)


# -------------------------------- wrapper ------------------------------------

@jax.jit
def lenet_apply(prep, x):
    n = x.shape[0]
    # Row-phase split of the 32x32 input so every in-kernel row access (conv
    # window + pool stride-2) is a contiguous static slice.  Layout plumbing on
    # the raw 4 KB/sample input only.
    xs = x.reshape(n, 8, 4, 32).transpose(0, 2, 1, 3)              # (n, 4, 8, 32)

    out = pl.pallas_call(
        _lenet_kernel,
        out_shape=jax.ShapeDtypeStruct((n, 1, 10), jnp.float32),
        grid=(n,),
        in_specs=[
            pl.BlockSpec((1, 4, 8, 32), lambda b: (b, 0, 0, 0)),    # x (per sample)
            pl.BlockSpec((2, 5, 32, 84), lambda b: (0, 0, 0, 0)),   # conv1 banded W
            pl.BlockSpec((1, 84), lambda b: (0, 0)),                # conv1 bias row
            pl.BlockSpec((2, 5, 84, 80), lambda b: (0, 0, 0, 0)),   # conv2 banded W
            pl.BlockSpec((1, 80), lambda b: (0, 0)),                # conv2 bias row
            pl.BlockSpec((5, 80, 120), lambda b: (0, 0, 0)),        # fc1 W (permuted)
            pl.BlockSpec((1, 120), lambda b: (0, 0)),               # fc1 b
            pl.BlockSpec((120, 84), lambda b: (0, 0)),              # fc2 W.T
            pl.BlockSpec((1, 84), lambda b: (0, 0)),                # fc2 b
            pl.BlockSpec((84, 10), lambda b: (0, 0)),               # fc3 W.T
            pl.BlockSpec((1, 10), lambda b: (0, 0)),                # fc3 b
        ],
        out_specs=pl.BlockSpec((1, 1, 10), lambda b: (b, 0, 0)),
        scratch_shapes=[
            pltpu.VMEM((2, 7, 84), jnp.float32),   # parity-split pool1 output
            pltpu.VMEM((5, 80), jnp.float32),      # pool2 output
        ],
        compiler_params=pltpu.CompilerParams(
            dimension_semantics=("parallel",)),    # v7x: shard batch over 2 TCs
    )(xs, prep["b1"], prep["c1b"], prep["b2"], prep["c2b"],
      prep["f1w"], prep["f1b"], prep["f2w"], prep["f2b"],
      prep["f3w"], prep["f3b"])
    return out.reshape(n, 10)


def lenet_forward(params, x):
    return lenet_apply(prepare_lenet_params(params), x)


# ------------------------------ reference -----------------------------------

def lenet_reference(params, x):
    def conv(x, w, b):
        y = jax.lax.conv_general_dilated(
            x, w, window_strides=(1, 1), padding="VALID",
            dimension_numbers=("NCHW", "OIHW", "NCHW"))
        return jax.nn.relu(y + b[None, :, None, None])

    def pool(x):
        return jax.lax.reduce_window(x, -jnp.inf, jax.lax.max,
                                     (1, 1, 2, 2), (1, 1, 2, 2), "VALID")

    x = pool(conv(x, params["conv1_w"], params["conv1_b"]))
    x = pool(conv(x, params["conv2_w"], params["conv2_b"]))
    x = x.reshape(x.shape[0], -1)
    x = jax.nn.relu(x @ params["f1_w"].T + params["f1_b"])
    x = jax.nn.relu(x @ params["f2_w"].T + params["f2_b"])
    x = x @ params["f3_w"].T + params["f3_b"]
    return jax.nn.log_softmax(x, axis=-1)


# -------------------------------- params ------------------------------------

def init_lenet_params(key):
    ks = jax.random.split(key, 10)

    def w(k, shape, fan_in):
        return jax.random.normal(k, shape, jnp.float32) / jnp.sqrt(fan_in)

    return {
        "conv1_w": w(ks[0], (6, 1, 5, 5), 25.0),
        "conv1_b": w(ks[1], (6,), 25.0),
        "conv2_w": w(ks[2], (16, 6, 5, 5), 150.0),
        "conv2_b": w(ks[3], (16,), 150.0),
        "f1_w": w(ks[4], (120, 400), 400.0),   # PyTorch Linear: (out, in)
        "f1_b": w(ks[5], (120,), 400.0),
        "f2_w": w(ks[6], (84, 120), 120.0),
        "f2_b": w(ks[7], (84,), 120.0),
        "f3_w": w(ks[8], (10, 84), 84.0),
        "f3_b": w(ks[9], (10,), 84.0),
    }


if __name__ == "__main__":
    key = jax.random.PRNGKey(0)
    pkey, xkey = jax.random.split(key)
    params = init_lenet_params(pkey)
    x = jax.random.normal(xkey, (2, 1, 32, 32), jnp.float32)

    prep = prepare_lenet_params(params)        # one-time weight prep (host)
    out = lenet_apply(prep, x)
    out = jax.block_until_ready(out)

    assert out.shape == (2, 10), out.shape
    assert bool(jnp.all(jnp.isfinite(out)))
    # log_softmax rows should exponentiate-sum to ~1
    assert bool(jnp.allclose(jnp.sum(jnp.exp(out), axis=1), 1.0, atol=1e-4))
    # match the plain-JAX (== PyTorch semantics) reference
    ref = lenet_reference(params, x)
    assert bool(jnp.allclose(out, ref, atol=2e-2, rtol=2e-2)), (
        float(jnp.max(jnp.abs(out - ref))))
    print("KERNEL_OK")
</pallas_src>

<mosaic_0001>
module attributes {stable_mosaic.version = 11 : i64} {
  func.func @_lenet_kernel(%arg0: i32, %arg1: memref<1x4x8x32xf32, #tpu.memory_space<vmem>>, %arg2: memref<2x5x32x84xf32, #tpu.memory_space<vmem>>, %arg3: memref<1x84xf32, #tpu.memory_space<vmem>>, %arg4: memref<2x5x84x80xf32, #tpu.memory_space<vmem>>, %arg5: memref<1x80xf32, #tpu.memory_space<vmem>>, %arg6: memref<5x80x120xf32, #tpu.memory_space<vmem>>, %arg7: memref<1x120xf32, #tpu.memory_space<vmem>>, %arg8: memref<120x84xf32, #tpu.memory_space<vmem>>, %arg9: memref<1x84xf32, #tpu.memory_space<vmem>>, %arg10: memref<84x10xf32, #tpu.memory_space<vmem>>, %arg11: memref<1x10xf32, #tpu.memory_space<vmem>>, %arg12: memref<1x1x10xf32, #tpu.memory_space<vmem>>, %arg13: memref<2x7x84xf32, #tpu.memory_space<vmem>>, %arg14: memref<5x80xf32, #tpu.memory_space<vmem>>) attributes {dimension_semantics = [#tpu.dimension_semantics<parallel>], iteration_bounds = array<i64: 2>, scalar_prefetch = 0 : i64, scratch_operands = 2 : i64, tpu.core_type = #tpu.core_type<tc>, window_params = [{transform_indices = @transform_0, window_bounds = array<i64: 1, 4, 8, 32>}, {pipeline_mode = #tpu.pipeline_mode<synchronous>, transform_indices = @transform_1, window_bounds = array<i64: 2, 5, 32, 84>}, {pipeline_mode = #tpu.pipeline_mode<synchronous>, transform_indices = @transform_2, window_bounds = array<i64: 1, 84>}, {pipeline_mode = #tpu.pipeline_mode<synchronous>, transform_indices = @transform_3, window_bounds = array<i64: 2, 5, 84, 80>}, {pipeline_mode = #tpu.pipeline_mode<synchronous>, transform_indices = @transform_4, window_bounds = array<i64: 1, 80>}, {pipeline_mode = #tpu.pipeline_mode<synchronous>, transform_indices = @transform_5, window_bounds = array<i64: 5, 80, 120>}, {pipeline_mode = #tpu.pipeline_mode<synchronous>, transform_indices = @transform_6, window_bounds = array<i64: 1, 120>}, {pipeline_mode = #tpu.pipeline_mode<synchronous>, transform_indices = @transform_7, window_bounds = array<i64: 120, 84>}, {pipeline_mode = #tpu.pipeline_mode<synchronous>, transform_indices = @transform_8, window_bounds = array<i64: 1, 84>}, {pipeline_mode = #tpu.pipeline_mode<synchronous>, transform_indices = @transform_9, window_bounds = array<i64: 84, 10>}, {pipeline_mode = #tpu.pipeline_mode<synchronous>, transform_indices = @transform_10, window_bounds = array<i64: 1, 10>}, {transform_indices = @transform_11, window_bounds = array<i64: 1, 1, 10>}]} {
    %c0 = arith.constant 0 : index
    %c0_0 = arith.constant 0 : index
    %0 = vector.load %arg3[%c0, %c0_0] : memref<1x84xf32, #tpu.memory_space<vmem>>, vector<1x84xf32>
    %c0_1 = arith.constant 0 : index
    %c0_2 = arith.constant 0 : index
    %c0_3 = arith.constant 0 : index
    %c0_4 = arith.constant 0 : index
    %1 = vector.load %arg1[%c0_1, %c0_2, %c0_3, %c0_4] : memref<1x4x8x32xf32, #tpu.memory_space<vmem>>, vector<1x1x7x32xf32>
    %2 = vector.shape_cast %1 : vector<1x1x7x32xf32> to vector<7x32xf32>
    %c0_5 = arith.constant 0 : index
    %c0_6 = arith.constant 0 : index
    %c0_7 = arith.constant 0 : index
    %c0_8 = arith.constant 0 : index
    %3 = vector.load %arg2[%c0_5, %c0_6, %c0_7, %c0_8] : memref<2x5x32x84xf32, #tpu.memory_space<vmem>>, vector<1x1x32x84xf32>
    %4 = vector.shape_cast %3 : vector<1x1x32x84xf32> to vector<32x84xf32>
    %cst = arith.constant dense<0.000000e+00> : vector<7x84xf32>
    %5 = tpu.matmul %2, %4, %cst {dimension_numbers = #tpu.dot_dimension_numbers<[1], [0], [0], [1], [0, 0, 1, 1], [], []>} : vector<7x32xf32>, vector<32x84xf32>, vector<7x84xf32> -> vector<7x84xf32>
    %c1 = arith.constant 1 : index
    %c0_9 = arith.constant 0 : index
    %c0_10 = arith.constant 0 : index
    %c0_11 = arith.constant 0 : index
    %6 = vector.load %arg2[%c1, %c0_9, %c0_10, %c0_11] : memref<2x5x32x84xf32, #tpu.memory_space<vmem>>, vector<1x1x32x84xf32>
    %7 = vector.shape_cast %6 : vector<1x1x32x84xf32> to vector<32x84xf32>
    %cst_12 = arith.constant dense<0.000000e+00> : vector<7x84xf32>
    %8 = tpu.matmul %2, %7, %cst_12 {dimension_numbers = #tpu.dot_dimension_numbers<[1], [0], [0], [1], [0, 0, 1, 1], [], []>} : vector<7x32xf32>, vector<32x84xf32>, vector<7x84xf32> -> vector<7x84xf32>
    %c0_13 = arith.constant 0 : index
    %c1_14 = arith.constant 1 : index
    %c0_15 = arith.constant 0 : index
    %c0_16 = arith.constant 0 : index
    %9 = vector.load %arg1[%c0_13, %c1_14, %c0_15, %c0_16] : memref<1x4x8x32xf32, #tpu.memory_space<vmem>>, vector<1x1x7x32xf32>
    %10 = vector.shape_cast %9 : vector<1x1x7x32xf32> to vector<7x32xf32>
    %c0_17 = arith.constant 0 : index
    %c1_18 = arith.constant 1 : index
    %c0_19 = arith.constant 0 : index
    %c0_20 = arith.constant 0 : index
    %11 = vector.load %arg2[%c0_17, %c1_18, %c0_19, %c0_20] : memref<2x5x32x84xf32, #tpu.memory_space<vmem>>, vector<1x1x32x84xf32>
    %12 = vector.shape_cast %11 : vector<1x1x32x84xf32> to vector<32x84xf32>
    %cst_21 = arith.constant dense<0.000000e+00> : vector<7x84xf32>
    %13 = tpu.matmul %10, %12, %cst_21 {dimension_numbers = #tpu.dot_dimension_numbers<[1], [0], [0], [1], [0, 0, 1, 1], [], []>} : vector<7x32xf32>, vector<32x84xf32>, vector<7x84xf32> -> vector<7x84xf32>
    %14 = arith.addf %5, %13 : vector<7x84xf32>
    %c1_22 = arith.constant 1 : index
    %c1_23 = arith.constant 1 : index
    %c0_24 = arith.constant 0 : index
    %c0_25 = arith.constant 0 : index
    %15 = vector.load %arg2[%c1_22, %c1_23, %c0_24, %c0_25] : memref<2x5x32x84xf32, #tpu.memory_space<vmem>>, vector<1x1x32x84xf32>
    %16 = vector.shape_cast %15 : vector<1x1x32x84xf32> to vector<32x84xf32>
    %cst_26 = arith.constant dense<0.000000e+00> : vector<7x84xf32>
    %17 = tpu.matmul %10, %16, %cst_26 {dimension_numbers = #tpu.dot_dimension_numbers<[1], [0], [0], [1], [0, 0, 1, 1], [], []>} : vector<7x32xf32>, vector<32x84xf32>, vector<7x84xf32> -> vector<7x84xf32>
    %18 = arith.addf %8, %17 : vector<7x84xf32>
    %c0_27 = arith.constant 0 : index
    %c2 = arith.constant 2 : index
    %c0_28 = arith.constant 0 : index
    %c0_29 = arith.constant 0 : index
    %19 = vector.load %arg1[%c0_27, %c2, %c0_28, %c0_29] : memref<1x4x8x32xf32, #tpu.memory_space<vmem>>, vector<1x1x7x32xf32>
    %20 = vector.shape_cast %19 : vector<1x1x7x32xf32> to vector<7x32xf32>
    %c0_30 = arith.constant 0 : index
    %c2_31 = arith.constant 2 : index
    %c0_32 = arith.constant 0 : index
    %c0_33 = arith.constant 0 : index
    %21 = vector.load %arg2[%c0_30, %c2_31, %c0_32, %c0_33] : memref<2x5x32x84xf32, #tpu.memory_space<vmem>>, vector<1x1x32x84xf32>
    %22 = vector.shape_cast %21 : vector<1x1x32x84xf32> to vector<32x84xf32>
    %cst_34 = arith.constant dense<0.000000e+00> : vector<7x84xf32>
    %23 = tpu.matmul %20, %22, %cst_34 {dimension_numbers = #tpu.dot_dimension_numbers<[1], [0], [0], [1], [0, 0, 1, 1], [], []>} : vector<7x32xf32>, vector<32x84xf32>, vector<7x84xf32> -> vector<7x84xf32>
    %24 = arith.addf %14, %23 : vector<7x84xf32>
    %c1_35 = arith.constant 1 : index
    %c2_36 = arith.constant 2 : index
    %c0_37 = arith.constant 0 : index
    %c0_38 = arith.constant 0 : index
    %25 = vector.load %arg2[%c1_35, %c2_36, %c0_37, %c0_38] : memref<2x5x32x84xf32, #tpu.memory_space<vmem>>, vector<1x1x32x84xf32>
    %26 = vector.shape_cast %25 : vector<1x1x32x84xf32> to vector<32x84xf32>
    %cst_39 = arith.constant dense<0.000000e+00> : vector<7x84xf32>
    %27 = tpu.matmul %20, %26, %cst_39 {dimension_numbers = #tpu.dot_dimension_numbers<[1], [0], [0], [1], [0, 0, 1, 1], [], []>} : vector<7x32xf32>, vector<32x84xf32>, vector<7x84xf32> -> vector<7x84xf32>
    %28 = arith.addf %18, %27 : vector<7x84xf32>
    %c0_40 = arith.constant 0 : index
    %c3 = arith.constant 3 : index
    %c0_41 = arith.constant 0 : index
    %c0_42 = arith.constant 0 : index
    %29 = vector.load %arg1[%c0_40, %c3, %c0_41, %c0_42] : memref<1x4x8x32xf32, #tpu.memory_space<vmem>>, vector<1x1x7x32xf32>
    %30 = vector.shape_cast %29 : vector<1x1x7x32xf32> to vector<7x32xf32>
    %c0_43 = arith.constant 0 : index
    %c3_44 = arith.constant 3 : index
    %c0_45 = arith.constant 0 : index
    %c0_46 = arith.constant 0 : index
    %31 = vector.load %arg2[%c0_43, %c3_44, %c0_45, %c0_46] : memref<2x5x32x84xf32, #tpu.memory_space<vmem>>, vector<1x1x32x84xf32>
    %32 = vector.shape_cast %31 : vector<1x1x32x84xf32> to vector<32x84xf32>
    %cst_47 = arith.constant dense<0.000000e+00> : vector<7x84xf32>
    %33 = tpu.matmul %30, %32, %cst_47 {dimension_numbers = #tpu.dot_dimension_numbers<[1], [0], [0], [1], [0, 0, 1, 1], [], []>} : vector<7x32xf32>, vector<32x84xf32>, vector<7x84xf32> -> vector<7x84xf32>
    %34 = arith.addf %24, %33 : vector<7x84xf32>
    %c1_48 = arith.constant 1 : index
    %c3_49 = arith.constant 3 : index
    %c0_50 = arith.constant 0 : index
    %c0_51 = arith.constant 0 : index
    %35 = vector.load %arg2[%c1_48, %c3_49, %c0_50, %c0_51] : memref<2x5x32x84xf32, #tpu.memory_space<vmem>>, vector<1x1x32x84xf32>
    %36 = vector.shape_cast %35 : vector<1x1x32x84xf32> to vector<32x84xf32>
    %cst_52 = arith.constant dense<0.000000e+00> : vector<7x84xf32>
    %37 = tpu.matmul %30, %36, %cst_52 {dimension_numbers = #tpu.dot_dimension_numbers<[1], [0], [0], [1], [0, 0, 1, 1], [], []>} : vector<7x32xf32>, vector<32x84xf32>, vector<7x84xf32> -> vector<7x84xf32>
    %38 = arith.addf %28, %37 : vector<7x84xf32>
    %c0_53 = arith.constant 0 : index
    %c0_54 = arith.constant 0 : index
    %c1_55 = arith.constant 1 : index
    %c0_56 = arith.constant 0 : index
    %39 = vector.load %arg1[%c0_53, %c0_54, %c1_55, %c0_56] : memref<1x4x8x32xf32, #tpu.memory_space<vmem>>, vector<1x1x7x32xf32>
    %40 = vector.shape_cast %39 : vector<1x1x7x32xf32> to vector<7x32xf32>
    %c0_57 = arith.constant 0 : index
    %c4 = arith.constant 4 : index
    %c0_58 = arith.constant 0 : index
    %c0_59 = arith.constant 0 : index
    %41 = vector.load %arg2[%c0_57, %c4, %c0_58, %c0_59] : memref<2x5x32x84xf32, #tpu.memory_space<vmem>>, vector<1x1x32x84xf32>
    %42 = vector.shape_cast %41 : vector<1x1x32x84xf32> to vector<32x84xf32>
    %cst_60 = arith.constant dense<0.000000e+00> : vector<7x84xf32>
    %43 = tpu.matmul %40, %42, %cst_60 {dimension_numbers = #tpu.dot_dimension_numbers<[1], [0], [0], [1], [0, 0, 1, 1], [], []>} : vector<7x32xf32>, vector<32x84xf32>, vector<7x84xf32> -> vector<7x84xf32>
    %44 = arith.addf %34, %43 : vector<7x84xf32>
    %c1_61 = arith.constant 1 : index
    %c4_62 = arith.constant 4 : index
    %c0_63 = arith.constant 0 : index
    %c0_64 = arith.constant 0 : index
    %45 = vector.load %arg2[%c1_61, %c4_62, %c0_63, %c0_64] : memref<2x5x32x84xf32, #tpu.memory_space<vmem>>, vector<1x1x32x84xf32>
    %46 = vector.shape_cast %45 : vector<1x1x32x84xf32> to vector<32x84xf32>
    %cst_65 = arith.constant dense<0.000000e+00> : vector<7x84xf32>
    %47 = tpu.matmul %40, %46, %cst_65 {dimension_numbers = #tpu.dot_dimension_numbers<[1], [0], [0], [1], [0, 0, 1, 1], [], []>} : vector<7x32xf32>, vector<32x84xf32>, vector<7x84xf32> -> vector<7x84xf32>
    %48 = arith.addf %38, %47 : vector<7x84xf32>
    %49 = vector.broadcast %0 : vector<1x84xf32> to vector<7x84xf32>
    %50 = arith.addf %44, %49 : vector<7x84xf32>
    %cst_66 = arith.constant 0.000000e+00 : f32
    %51 = vector.broadcast %cst_66 : f32 to vector<7x84xf32>
    %52 = arith.maximumf %50, %51 : vector<7x84xf32>
    %53 = vector.broadcast %0 : vector<1x84xf32> to vector<7x84xf32>
    %54 = arith.addf %48, %53 : vector<7x84xf32>
    %cst_67 = arith.constant 0.000000e+00 : f32
    %55 = vector.broadcast %cst_67 : f32 to vector<7x84xf32>
    %56 = arith.maximumf %54, %55 : vector<7x84xf32>
    %57 = arith.maximumf %52, %56 : vector<7x84xf32>
    %c0_68 = arith.constant 0 : index
    %c1_69 = arith.constant 1 : index
    %c0_70 = arith.constant 0 : index
    %c0_71 = arith.constant 0 : index
    %58 = vector.load %arg1[%c0_68, %c1_69, %c0_70, %c0_71] : memref<1x4x8x32xf32, #tpu.memory_space<vmem>>, vector<1x1x7x32xf32>
    %59 = vector.shape_cast %58 : vector<1x1x7x32xf32> to vector<7x32xf32>
    %c0_72 = arith.constant 0 : index
    %c0_73 = arith.constant 0 : index
    %c0_74 = arith.constant 0 : index
    %c0_75 = arith.constant 0 : index
    %60 = vector.load %arg2[%c0_72, %c0_73, %c0_74, %c0_75] : memref<2x5x32x84xf32, #tpu.memory_space<vmem>>, vector<1x1x32x84xf32>
    %61 = vector.shape_cast %60 : vector<1x1x32x84xf32> to vector<32x84xf32>
    %cst_76 = arith.constant dense<0.000000e+00> : vector<7x84xf32>
    %62 = tpu.matmul %59, %61, %cst_76 {dimension_numbers = #tpu.dot_dimension_numbers<[1], [0], [0], [1], [0, 0, 1, 1], [], []>} : vector<7x32xf32>, vector<32x84xf32>, vector<7x84xf32> -> vector<7x84xf32>
    %c1_77 = arith.constant 1 : index
    %c0_78 = arith.constant 0 : index
    %c0_79 = arith.constant 0 : index
    %c0_80 = arith.constant 0 : index
    %63 = vector.load %arg2[%c1_77, %c0_78, %c0_79, %c0_80] : memref<2x5x32x84xf32, #tpu.memory_space<vmem>>, vector<1x1x32x84xf32>
    %64 = vector.shape_cast %63 : vector<1x1x32x84xf32> to vector<32x84xf32>
    %cst_81 = arith.constant dense<0.000000e+00> : vector<7x84xf32>
    %65 = tpu.matmul %59, %64, %cst_81 {dimension_numbers = #tpu.dot_dimension_numbers<[1], [0], [0], [1], [0, 0, 1, 1], [], []>} : vector<7x32xf32>, vector<32x84xf32>, vector<7x84xf32> -> vector<7x84xf32>
    %c0_82 = arith.constant 0 : index
    %c2_83 = arith.constant 2 : index
    %c0_84 = arith.constant 0 : index
    %c0_85 = arith.constant 0 : index
    %66 = vector.load %arg1[%c0_82, %c2_83, %c0_84, %c0_85] : memref<1x4x8x32xf32, #tpu.memory_space<vmem>>, vector<1x1x7x32xf32>
    %67 = vector.shape_cast %66 : vector<1x1x7x32xf32> to vector<7x32xf32>
    %c0_86 = arith.constant 0 : index
    %c1_87 = arith.constant 1 : index
    %c0_88 = arith.constant 0 : index
    %c0_89 = arith.constant 0 : index
    %68 = vector.load %arg2[%c0_86, %c1_87, %c0_88, %c0_89] : memref<2x5x32x84xf32, #tpu.memory_space<vmem>>, vector<1x1x32x84xf32>
    %69 = vector.shape_cast %68 : vector<1x1x32x84xf32> to vector<32x84xf32>
    %cst_90 = arith.constant dense<0.000000e+00> : vector<7x84xf32>
    %70 = tpu.matmul %67, %69, %cst_90 {dimension_numbers = #tpu.dot_dimension_numbers<[1], [0], [0], [1], [0, 0, 1, 1], [], []>} : vector<7x32xf32>, vector<32x84xf32>, vector<7x84xf32> -> vector<7x84xf32>
    %71 = arith.addf %62, %70 : vector<7x84xf32>
    %c1_91 = arith.constant 1 : index
    %c1_92 = arith.constant 1 : index
    %c0_93 = arith.constant 0 : index
    %c0_94 = arith.constant 0 : index
    %72 = vector.load %arg2[%c1_91, %c1_92, %c0_93, %c0_94] : memref<2x5x32x84xf32, #tpu.memory_space<vmem>>, vector<1x1x32x84xf32>
    %73 = vector.shape_cast %72 : vector<1x1x32x84xf32> to vector<32x84xf32>
    %cst_95 = arith.constant dense<0.000000e+00> : vector<7x84xf32>
    %74 = tpu.matmul %67, %73, %cst_95 {dimension_numbers = #tpu.dot_dimension_numbers<[1], [0], [0], [1], [0, 0, 1, 1], [], []>} : vector<7x32xf32>, vector<32x84xf32>, vector<7x84xf32> -> vector<7x84xf32>
    %75 = arith.addf %65, %74 : vector<7x84xf32>
    %c0_96 = arith.constant 0 : index
    %c3_97 = arith.constant 3 : index
    %c0_98 = arith.constant 0 : index
    %c0_99 = arith.constant 0 : index
    %76 = vector.load %arg1[%c0_96, %c3_97, %c0_98, %c0_99] : memref<1x4x8x32xf32, #tpu.memory_space<vmem>>, vector<1x1x7x32xf32>
    %77 = vector.shape_cast %76 : vector<1x1x7x32xf32> to vector<7x32xf32>
    %c0_100 = arith.constant 0 : index
    %c2_101 = arith.constant 2 : index
    %c0_102 = arith.constant 0 : index
    %c0_103 = arith.constant 0 : index
    %78 = vector.load %arg2[%c0_100, %c2_101, %c0_102, %c0_103] : memref<2x5x32x84xf32, #tpu.memory_space<vmem>>, vector<1x1x32x84xf32>
    %79 = vector.shape_cast %78 : vector<1x1x32x84xf32> to vector<32x84xf32>
    %cst_104 = arith.constant dense<0.000000e+00> : vector<7x84xf32>
    %80 = tpu.matmul %77, %79, %cst_104 {dimension_numbers = #tpu.dot_dimension_numbers<[1], [0], [0], [1], [0, 0, 1, 1], [], []>} : vector<7x32xf32>, vector<32x84xf32>, vector<7x84xf32> -> vector<7x84xf32>
    %81 = arith.addf %71, %80 : vector<7x84xf32>
    %c1_105 = arith.constant 1 : index
    %c2_106 = arith.constant 2 : index
    %c0_107 = arith.constant 0 : index
    %c0_108 = arith.constant 0 : index
    %82 = vector.load %arg2[%c1_105, %c2_106, %c0_107, %c0_108] : memref<2x5x32x84xf32, #tpu.memory_space<vmem>>, vector<1x1x32x84xf32>
    %83 = vector.shape_cast %82 : vector<1x1x32x84xf32> to vector<32x84xf32>
    %cst_109 = arith.constant dense<0.000000e+00> : vector<7x84xf32>
    %84 = tpu.matmul %77, %83, %cst_109 {dimension_numbers = #tpu.dot_dimension_numbers<[1], [0], [0], [1], [0, 0, 1, 1], [], []>} : vector<7x32xf32>, vector<32x84xf32>, vector<7x84xf32> -> vector<7x84xf32>
    %85 = arith.addf %75, %84 : vector<7x84xf32>
    %c0_110 = arith.constant 0 : index
    %c0_111 = arith.constant 0 : index
    %c1_112 = arith.constant 1 : index
    %c0_113 = arith.constant 0 : index
    %86 = vector.load %arg1[%c0_110, %c0_111, %c1_112, %c0_113] : memref<1x4x8x32xf32, #tpu.memory_space<vmem>>, vector<1x1x7x32xf32>
    %87 = vector.shape_cast %86 : vector<1x1x7x32xf32> to vector<7x32xf32>
    %c0_114 = arith.constant 0 : index
    %c3_115 = arith.constant 3 : index
    %c0_116 = arith.constant 0 : index
    %c0_117 = arith.constant 0 : index
    %88 = vector.load %arg2[%c0_114, %c3_115, %c0_116, %c0_117] : memref<2x5x32x84xf32, #tpu.memory_space<vmem>>, vector<1x1x32x84xf32>
    %89 = vector.shape_cast %88 : vector<1x1x32x84xf32> to vector<32x84xf32>
    %cst_118 = arith.constant dense<0.000000e+00> : vector<7x84xf32>
    %90 = tpu.matmul %87, %89, %cst_118 {dimension_numbers = #tpu.dot_dimension_numbers<[1], [0], [0], [1], [0, 0, 1, 1], [], []>} : vector<7x32xf32>, vector<32x84xf32>, vector<7x84xf32> -> vector<7x84xf32>
    %91 = arith.addf %81, %90 : vector<7x84xf32>
    %c1_119 = arith.constant 1 : index
    %c3_120 = arith.constant 3 : index
    %c0_121 = arith.constant 0 : index
    %c0_122 = arith.constant 0 : index
    %92 = vector.load %arg2[%c1_119, %c3_120, %c0_121, %c0_122] : memref<2x5x32x84xf32, #tpu.memory_space<vmem>>, vector<1x1x32x84xf32>
    %93 = vector.shape_cast %92 : vector<1x1x32x84xf32> to vector<32x84xf32>
    %cst_123 = arith.constant dense<0.000000e+00> : vector<7x84xf32>
    %94 = tpu.matmul %87, %93, %cst_123 {dimension_numbers = #tpu.dot_dimension_numbers<[1], [0], [0], [1], [0, 0, 1, 1], [], []>} : vector<7x32xf32>, vector<32x84xf32>, vector<7x84xf32> -> vector<7x84xf32>
    %95 = arith.addf %85, %94 : vector<7x84xf32>
    %c0_124 = arith.constant 0 : index
    %c1_125 = arith.constant 1 : index
    %c1_126 = arith.constant 1 : index
    %c0_127 = arith.constant 0 : index
    %96 = vector.load %arg1[%c0_124, %c1_125, %c1_126, %c0_127] : memref<1x4x8x32xf32, #tpu.memory_space<vmem>>, vector<1x1x7x32xf32>
    %97 = vector.shape_cast %96 : vector<1x1x7x32xf32> to vector<7x32xf32>
    %c0_128 = arith.constant 0 : index
    %c4_129 = arith.constant 4 : index
    %c0_130 = arith.constant 0 : index
    %c0_131 = arith.constant 0 : index
    %98 = vector.load %arg2[%c0_128, %c4_129, %c0_130, %c0_131] : memref<2x5x32x84xf32, #tpu.memory_space<vmem>>, vector<1x1x32x84xf32>
    %99 = vector.shape_cast %98 : vector<1x1x32x84xf32> to vector<32x84xf32>
    %cst_132 = arith.constant dense<0.000000e+00> : vector<7x84xf32>
    %100 = tpu.matmul %97, %99, %cst_132 {dimension_numbers = #tpu.dot_dimension_numbers<[1], [0], [0], [1], [0, 0, 1, 1], [], []>} : vector<7x32xf32>, vector<32x84xf32>, vector<7x84xf32> -> vector<7x84xf32>
    %101 = arith.addf %91, %100 : vector<7x84xf32>
    %c1_133 = arith.constant 1 : index
    %c4_134 = arith.constant 4 : index
    %c0_135 = arith.constant 0 : index
    %c0_136 = arith.constant 0 : index
    %102 = vector.load %arg2[%c1_133, %c4_134, %c0_135, %c0_136] : memref<2x5x32x84xf32, #tpu.memory_space<vmem>>, vector<1x1x32x84xf32>
    %103 = vector.shape_cast %102 : vector<1x1x32x84xf32> to vector<32x84xf32>
    %cst_137 = arith.constant dense<0.000000e+00> : vector<7x84xf32>
    %104 = tpu.matmul %97, %103, %cst_137 {dimension_numbers = #tpu.dot_dimension_numbers<[1], [0], [0], [1], [0, 0, 1, 1], [], []>} : vector<7x32xf32>, vector<32x84xf32>, vector<7x84xf32> -> vector<7x84xf32>
    %105 = arith.addf %95, %104 : vector<7x84xf32>
    %106 = vector.broadcast %0 : vector<1x84xf32> to vector<7x84xf32>
    %107 = arith.addf %101, %106 : vector<7x84xf32>
    %cst_138 = arith.constant 0.000000e+00 : f32
    %108 = vector.broadcast %cst_138 : f32 to vector<7x84xf32>
    %109 = arith.maximumf %107, %108 : vector<7x84xf32>
    %110 = arith.maximumf %57, %109 : vector<7x84xf32>
    %111 = vector.broadcast %0 : vector<1x84xf32> to vector<7x84xf32>
    %112 = arith.addf %105, %111 : vector<7x84xf32>
    %cst_139 = arith.constant 0.000000e+00 : f32
    %113 = vector.broadcast %cst_139 : f32 to vector<7x84xf32>
    %114 = arith.maximumf %112, %113 : vector<7x84xf32>
    %115 = arith.maximumf %110, %114 : vector<7x84xf32>
    %c0_140 = arith.constant 0 : index
    %c0_141 = arith.constant 0 : index
    %c0_142 = arith.constant 0 : index
    %116 = vector.load %arg13[%c0_140, %c0_141, %c0_142] : memref<2x7x84xf32, #tpu.memory_space<vmem>>, vector<1x7x84xf32>
    %117 = vector.shape_cast %116 : vector<1x7x84xf32> to vector<7x84xf32>
    %118 = vector.shape_cast %115 : vector<7x84xf32> to vector<1x7x84xf32>
    tpu.vector_store %arg13[%c0_140, %c0_141, %c0_142], %118 {strides = array<i32>} : memref<2x7x84xf32, #tpu.memory_space<vmem>>, vector<1x7x84xf32>,
    %c0_143 = arith.constant 0 : index
    %c2_144 = arith.constant 2 : index
    %c0_145 = arith.constant 0 : index
    %c0_146 = arith.constant 0 : index
    %119 = vector.load %arg1[%c0_143, %c2_144, %c0_145, %c0_146] : memref<1x4x8x32xf32, #tpu.memory_space<vmem>>, vector<1x1x7x32xf32>
    %120 = vector.shape_cast %119 : vector<1x1x7x32xf32> to vector<7x32xf32>
    %c0_147 = arith.constant 0 : index
    %c0_148 = arith.constant 0 : index
    %c0_149 = arith.constant 0 : index
    %c0_150 = arith.constant 0 : index
    %121 = vector.load %arg2[%c0_147, %c0_148, %c0_149, %c0_150] : memref<2x5x32x84xf32, #tpu.memory_space<vmem>>, vector<1x1x32x84xf32>
    %122 = vector.shape_cast %121 : vector<1x1x32x84xf32> to vector<32x84xf32>
    %cst_151 = arith.constant dense<0.000000e+00> : vector<7x84xf32>
    %123 = tpu.matmul %120, %122, %cst_151 {dimension_numbers = #tpu.dot_dimension_numbers<[1], [0], [0], [1], [0, 0, 1, 1], [], []>} : vector<7x32xf32>, vector<32x84xf32>, vector<7x84xf32> -> vector<7x84xf32>
    %c1_152 = arith.constant 1 : index
    %c0_153 = arith.constant 0 : index
    %c0_154 = arith.constant 0 : index
    %c0_155 = arith.constant 0 : index
    %124 = vector.load %arg2[%c1_152, %c0_153, %c0_154, %c0_155] : memref<2x5x32x84xf32, #tpu.memory_space<vmem>>, vector<1x1x32x84xf32>
    %125 = vector.shape_cast %124 : vector<1x1x32x84xf32> to vector<32x84xf32>
    %cst_156 = arith.constant dense<0.000000e+00> : vector<7x84xf32>
    %126 = tpu.matmul %120, %125, %cst_156 {dimension_numbers = #tpu.dot_dimension_numbers<[1], [0], [0], [1], [0, 0, 1, 1], [], []>} : vector<7x32xf32>, vector<32x84xf32>, vector<7x84xf32> -> vector<7x84xf32>
    %c0_157 = arith.constant 0 : index
    %c3_158 = arith.constant 3 : index
    %c0_159 = arith.constant 0 : index
    %c0_160 = arith.constant 0 : index
    %127 = vector.load %arg1[%c0_157, %c3_158, %c0_159, %c0_160] : memref<1x4x8x32xf32, #tpu.memory_space<vmem>>, vector<1x1x7x32xf32>
    %128 = vector.shape_cast %127 : vector<1x1x7x32xf32> to vector<7x32xf32>
    %c0_161 = arith.constant 0 : index
    %c1_162 = arith.constant 1 : index
    %c0_163 = arith.constant 0 : index
    %c0_164 = arith.constant 0 : index
    %129 = vector.load %arg2[%c0_161, %c1_162, %c0_163, %c0_164] : memref<2x5x32x84xf32, #tpu.memory_space<vmem>>, vector<1x1x32x84xf32>
    %130 = vector.shape_cast %129 : vector<1x1x32x84xf32> to vector<32x84xf32>
    %cst_165 = arith.constant dense<0.000000e+00> : vector<7x84xf32>
    %131 = tpu.matmul %128, %130, %cst_165 {dimension_numbers = #tpu.dot_dimension_numbers<[1], [0], [0], [1], [0, 0, 1, 1], [], []>} : vector<7x32xf32>, vector<32x84xf32>, vector<7x84xf32> -> vector<7x84xf32>
    %132 = arith.addf %123, %131 : vector<7x84xf32>
    %c1_166 = arith.constant 1 : index
    %c1_167 = arith.constant 1 : index
    %c0_168 = arith.constant 0 : index
    %c0_169 = arith.constant 0 : index
    %133 = vector.load %arg2[%c1_166, %c1_167, %c0_168, %c0_169] : memref<2x5x32x84xf32, #tpu.memory_space<vmem>>, vector<1x1x32x84xf32>
    %134 = vector.shape_cast %133 : vector<1x1x32x84xf32> to vector<32x84xf32>
    %cst_170 = arith.constant dense<0.000000e+00> : vector<7x84xf32>
    %135 = tpu.matmul %128, %134, %cst_170 {dimension_numbers = #tpu.dot_dimension_numbers<[1], [0], [0], [1], [0, 0, 1, 1], [], []>} : vector<7x32xf32>, vector<32x84xf32>, vector<7x84xf32> -> vector<7x84xf32>
    %136 = arith.addf %126, %135 : vector<7x84xf32>
    %c0_171 = arith.constant 0 : index
    %c0_172 = arith.constant 0 : index
    %c1_173 = arith.constant 1 : index
    %c0_174 = arith.constant 0 : index
    %137 = vector.load %arg1[%c0_171, %c0_172, %c1_173, %c0_174] : memref<1x4x8x32xf32, #tpu.memory_space<vmem>>, vector<1x1x7x32xf32>
    %138 = vector.shape_cast %137 : vector<1x1x7x32xf32> to vector<7x32xf32>
    %c0_175 = arith.constant 0 : index
    %c2_176 = arith.constant 2 : index
    %c0_177 = arith.constant 0 : index
    %c0_178 = arith.constant 0 : index
    %139 = vector.load %arg2[%c0_175, %c2_176, %c0_177, %c0_178] : memref<2x5x32x84xf32, #tpu.memory_space<vmem>>, vector<1x1x32x84xf32>
    %140 = vector.shape_cast %139 : vector<1x1x32x84xf32> to vector<32x84xf32>
    %cst_179 = arith.constant dense<0.000000e+00> : vector<7x84xf32>
    %141 = tpu.matmul %138, %140, %cst_179 {dimension_numbers = #tpu.dot_dimension_numbers<[1], [0], [0], [1], [0, 0, 1, 1], [], []>} : vector<7x32xf32>, vector<32x84xf32>, vector<7x84xf32> -> vector<7x84xf32>
    %142 = arith.addf %132, %141 : vector<7x84xf32>
    %c1_180 = arith.constant 1 : index
    %c2_181 = arith.constant 2 : index
    %c0_182 = arith.constant 0 : index
    %c0_183 = arith.constant 0 : index
    %143 = vector.load %arg2[%c1_180, %c2_181, %c0_182, %c0_183] : memref<2x5x32x84xf32, #tpu.memory_space<vmem>>, vector<1x1x32x84xf32>
    %144 = vector.shape_cast %143 : vector<1x1x32x84xf32> to vector<32x84xf32>
    %cst_184 = arith.constant dense<0.000000e+00> : vector<7x84xf32>
    %145 = tpu.matmul %138, %144, %cst_184 {dimension_numbers = #tpu.dot_dimension_numbers<[1], [0], [0], [1], [0, 0, 1, 1], [], []>} : vector<7x32xf32>, vector<32x84xf32>, vector<7x84xf32> -> vector<7x84xf32>
    %146 = arith.addf %136, %145 : vector<7x84xf32>
    %c0_185 = arith.constant 0 : index
    %c1_186 = arith.constant 1 : index
    %c1_187 = arith.constant 1 : index
    %c0_188 = arith.constant 0 : index
    %147 = vector.load %arg1[%c0_185, %c1_186, %c1_187, %c0_188] : memref<1x4x8x32xf32, #tpu.memory_space<vmem>>, vector<1x1x7x32xf32>
    %148 = vector.shape_cast %147 : vector<1x1x7x32xf32> to vector<7x32xf32>
    %c0_189 = arith.constant 0 : index
    %c3_190 = arith.constant 3 : index
    %c0_191 = arith.constant 0 : index
    %c0_192 = arith.constant 0 : index
    %149 = vector.load %arg2[%c0_189, %c3_190, %c0_191, %c0_192] : memref<2x5x32x84xf32, #tpu.memory_space<vmem>>, vector<1x1x32x84xf32>
    %150 = vector.shape_cast %149 : vector<1x1x32x84xf32> to vector<32x84xf32>
    %cst_193 = arith.constant dense<0.000000e+00> : vector<7x84xf32>
    %151 = tpu.matmul %148, %150, %cst_193 {dimension_numbers = #tpu.dot_dimension_numbers<[1], [0], [0], [1], [0, 0, 1, 1], [], []>} : vector<7x32xf32>, vector<32x84xf32>, vector<7x84xf32> -> vector<7x84xf32>
    %152 = arith.addf %142, %151 : vector<7x84xf32>
    %c1_194 = arith.constant 1 : index
    %c3_195 = arith.constant 3 : index
    %c0_196 = arith.constant 0 : index
    %c0_197 = arith.constant 0 : index
    %153 = vector.load %arg2[%c1_194, %c3_195, %c0_196, %c0_197] : memref<2x5x32x84xf32, #tpu.memory_space<vmem>>, vector<1x1x32x84xf32>
    %154 = vector.shape_cast %153 : vector<1x1x32x84xf32> to vector<32x84xf32>
    %cst_198 = arith.constant dense<0.000000e+00> : vector<7x84xf32>
    %155 = tpu.matmul %148, %154, %cst_198 {dimension_numbers = #tpu.dot_dimension_numbers<[1], [0], [0], [1], [0, 0, 1, 1], [], []>} : vector<7x32xf32>, vector<32x84xf32>, vector<7x84xf32> -> vector<7x84xf32>
    %156 = arith.addf %146, %155 : vector<7x84xf32>
    %c0_199 = arith.constant 0 : index
    %c2_200 = arith.constant 2 : index
    %c1_201 = arith.constant 1 : index
    %c0_202 = arith.constant 0 : index
    %157 = vector.load %arg1[%c0_199, %c2_200, %c1_201, %c0_202] : memref<1x4x8x32xf32, #tpu.memory_space<vmem>>, vector<1x1x7x32xf32>
    %158 = vector.shape_cast %157 : vector<1x1x7x32xf32> to vector<7x32xf32>
    %c0_203 = arith.constant 0 : index
    %c4_204 = arith.constant 4 : index
    %c0_205 = arith.constant 0 : index
    %c0_206 = arith.constant 0 : index
    %159 = vector.load %arg2[%c0_203, %c4_204, %c0_205, %c0_206] : memref<2x5x32x84xf32, #tpu.memory_space<vmem>>, vector<1x1x32x84xf32>
    %160 = vector.shape_cast %159 : vector<1x1x32x84xf32> to vector<32x84xf32>
    %cst_207 = arith.constant dense<0.000000e+00> : vector<7x84xf32>
    %161 = tpu.matmul %158, %160, %cst_207 {dimension_numbers = #tpu.dot_dimension_numbers<[1], [0], [0], [1], [0, 0, 1, 1], [], []>} : vector<7x32xf32>, vector<32x84xf32>, vector<7x84xf32> -> vector<7x84xf32>
    %162 = arith.addf %152, %161 : vector<7x84xf32>
    %c1_208 = arith.constant 1 : index
    %c4_209 = arith.constant 4 : index
    %c0_210 = arith.constant 0 : index
    %c0_211 = arith.constant 0 : index
    %163 = vector.load %arg2[%c1_208, %c4_209, %c0_210, %c0_211] : memref<2x5x32x84xf32, #tpu.memory_space<vmem>>, vector<1x1x32x84xf32>
    %164 = vector.shape_cast %163 : vector<1x1x32x84xf32> to vector<32x84xf32>
    %cst_212 = arith.constant dense<0.000000e+00> : vector<7x84xf32>
    %165 = tpu.matmul %158, %164, %cst_212 {dimension_numbers = #tpu.dot_dimension_numbers<[1], [0], [0], [1], [0, 0, 1, 1], [], []>} : vector<7x32xf32>, vector<32x84xf32>, vector<7x84xf32> -> vector<7x84xf32>
    %166 = arith.addf %156, %165 : vector<7x84xf32>
    %167 = vector.broadcast %0 : vector<1x84xf32> to vector<7x84xf32>
    %168 = arith.addf %162, %167 : vector<7x84xf32>
    %cst_213 = arith.constant 0.000000e+00 : f32
    %169 = vector.broadcast %cst_213 : f32 to vector<7x84xf32>
    %170 = arith.maximumf %168, %169 : vector<7x84xf32>
    %171 = vector.broadcast %0 : vector<1x84xf32> to vector<7x84xf32>
    %172 = arith.addf %166, %171 : vector<7x84xf32>
    %cst_214 = arith.constant 0.000000e+00 : f32
    %173 = vector.broadcast %cst_214 : f32 to vector<7x84xf32>
    %174 = arith.maximumf %172, %173 : vector<7x84xf32>
    %175 = arith.maximumf %170, %174 : vector<7x84xf32>
    %c0_215 = arith.constant 0 : index
    %c3_216 = arith.constant 3 : index
    %c0_217 = arith.constant 0 : index
    %c0_218 = arith.constant 0 : index
    %176 = vector.load %arg1[%c0_215, %c3_216, %c0_217, %c0_218] : memref<1x4x8x32xf32, #tpu.memory_space<vmem>>, vector<1x1x7x32xf32>
    %177 = vector.shape_cast %176 : vector<1x1x7x32xf32> to vector<7x32xf32>
    %c0_219 = arith.constant 0 : index
    %c0_220 = arith.constant 0 : index
    %c0_221 = arith.constant 0 : index
    %c0_222 = arith.constant 0 : index
    %178 = vector.load %arg2[%c0_219, %c0_220, %c0_221, %c0_222] : memref<2x5x32x84xf32, #tpu.memory_space<vmem>>, vector<1x1x32x84xf32>
    %179 = vector.shape_cast %178 : vector<1x1x32x84xf32> to vector<32x84xf32>
    %cst_223 = arith.constant dense<0.000000e+00> : vector<7x84xf32>
    %180 = tpu.matmul %177, %179, %cst_223 {dimension_numbers = #tpu.dot_dimension_numbers<[1], [0], [0], [1], [0, 0, 1, 1], [], []>} : vector<7x32xf32>, vector<32x84xf32>, vector<7x84xf32> -> vector<7x84xf32>
    %c1_224 = arith.constant 1 : index
    %c0_225 = arith.constant 0 : index
    %c0_226 = arith.constant 0 : index
    %c0_227 = arith.constant 0 : index
    %181 = vector.load %arg2[%c1_224, %c0_225, %c0_226, %c0_227] : memref<2x5x32x84xf32, #tpu.memory_space<vmem>>, vector<1x1x32x84xf32>
    %182 = vector.shape_cast %181 : vector<1x1x32x84xf32> to vector<32x84xf32>
    %cst_228 = arith.constant dense<0.000000e+00> : vector<7x84xf32>
    %183 = tpu.matmul %177, %182, %cst_228 {dimension_numbers = #tpu.dot_dimension_numbers<[1], [0], [0], [1], [0, 0, 1, 1], [], []>} : vector<7x32xf32>, vector<32x84xf32>, vector<7x84xf32> -> vector<7x84xf32>
    %c0_229 = arith.constant 0 : index
    %c0_230 = arith.constant 0 : index
    %c1_231 = arith.constant 1 : index
    %c0_232 = arith.constant 0 : index
    %184 = vector.load %arg1[%c0_229, %c0_230, %c1_231, %c0_232] : memref<1x4x8x32xf32, #tpu.memory_space<vmem>>, vector<1x1x7x32xf32>
    %185 = vector.shape_cast %184 : vector<1x1x7x32xf32> to vector<7x32xf32>
    %c0_233 = arith.constant 0 : index
    %c1_234 = arith.constant 1 : index
    %c0_235 = arith.constant 0 : index
    %c0_236 = arith.constant 0 : index
    %186 = vector.load %arg2[%c0_233, %c1_234, %c0_235, %c0_236] : memref<2x5x32x84xf32, #tpu.memory_space<vmem>>, vector<1x1x32x84xf32>
    %187 = vector.shape_cast %186 : vector<1x1x32x84xf32> to vector<32x84xf32>
    %cst_237 = arith.constant dense<0.000000e+00> : vector<7x84xf32>
    %188 = tpu.matmul %185, %187, %cst_237 {dimension_numbers = #tpu.dot_dimension_numbers<[1], [0], [0], [1], [0, 0, 1, 1], [], []>} : vector<7x32xf32>, vector<32x84xf32>, vector<7x84xf32> -> vector<7x84xf32>
    %189 = arith.addf %180, %188 : vector<7x84xf32>
    %c1_238 = arith.constant 1 : index
    %c1_239 = arith.constant 1 : index
    %c0_240 = arith.constant 0 : index
    %c0_241 = arith.constant 0 : index
    %190 = vector.load %arg2[%c1_238, %c1_239, %c0_240, %c0_241] : memref<2x5x32x84xf32, #tpu.memory_space<vmem>>, vector<1x1x32x84xf32>
    %191 = vector.shape_cast %190 : vector<1x1x32x84xf32> to vector<32x84xf32>
    %cst_242 = arith.constant dense<0.000000e+00> : vector<7x84xf32>
    %192 = tpu.matmul %185, %191, %cst_242 {dimension_numbers = #tpu.dot_dimension_numbers<[1], [0], [0], [1], [0, 0, 1, 1], [], []>} : vector<7x32xf32>, vector<32x84xf32>, vector<7x84xf32> -> vector<7x84xf32>
    %193 = arith.addf %183, %192 : vector<7x84xf32>
    %c0_243 = arith.constant 0 : index
    %c1_244 = arith.constant 1 : index
    %c1_245 = arith.constant 1 : index
    %c0_246 = arith.constant 0 : index
    %194 = vector.load %arg1[%c0_243, %c1_244, %c1_245, %c0_246] : memref<1x4x8x32xf32, #tpu.memory_space<vmem>>, vector<1x1x7x32xf32>
    %195 = vector.shape_cast %194 : vector<1x1x7x32xf32> to vector<7x32xf32>
    %c0_247 = arith.constant 0 : index
    %c2_248 = arith.constant 2 : index
    %c0_249 = arith.constant 0 : index
    %c0_250 = arith.constant 0 : index
    %196 = vector.load %arg2[%c0_247, %c2_248, %c0_249, %c0_250] : memref<2x5x32x84xf32, #tpu.memory_space<vmem>>, vector<1x1x32x84xf32>
    %197 = vector.shape_cast %196 : vector<1x1x32x84xf32> to vector<32x84xf32>
    %cst_251 = arith.constant dense<0.000000e+00> : vector<7x84xf32>
    %198 = tpu.matmul %195, %197, %cst_251 {dimension_numbers = #tpu.dot_dimension_numbers<[1], [0], [0], [1], [0, 0, 1, 1], [], []>} : vector<7x32xf32>, vector<32x84xf32>, vector<7x84xf32> -> vector<7x84xf32>
    %199 = arith.addf %189, %198 : vector<7x84xf32>
    %c1_252 = arith.constant 1 : index
    %c2_253 = arith.constant 2 : index
    %c0_254 = arith.constant 0 : index
    %c0_255 = arith.constant 0 : index
    %200 = vector.load %arg2[%c1_252, %c2_253, %c0_254, %c0_255] : memref<2x5x32x84xf32, #tpu.memory_space<vmem>>, vector<1x1x32x84xf32>
    %201 = vector.shape_cast %200 : vector<1x1x32x84xf32> to vector<32x84xf32>
    %cst_256 = arith.constant dense<0.000000e+00> : vector<7x84xf32>
    %202 = tpu.matmul %195, %201, %cst_256 {dimension_numbers = #tpu.dot_dimension_numbers<[1], [0], [0], [1], [0, 0, 1, 1], [], []>} : vector<7x32xf32>, vector<32x84xf32>, vector<7x84xf32> -> vector<7x84xf32>
    %203 = arith.addf %193, %202 : vector<7x84xf32>
    %c0_257 = arith.constant 0 : index
    %c2_258 = arith.constant 2 : index
    %c1_259 = arith.constant 1 : index
    %c0_260 = arith.constant 0 : index
    %204 = vector.load %arg1[%c0_257, %c2_258, %c1_259, %c0_260] : memref<1x4x8x32xf32, #tpu.memory_space<vmem>>, vector<1x1x7x32xf32>
    %205 = vector.shape_cast %204 : vector<1x1x7x32xf32> to vector<7x32xf32>
    %c0_261 = arith.constant 0 : index
    %c3_262 = arith.constant 3 : index
    %c0_263 = arith.constant 0 : index
    %c0_264 = arith.constant 0 : index
    %206 = vector.load %arg2[%c0_261, %c3_262, %c0_263, %c0_264] : memref<2x5x32x84xf32, #tpu.memory_space<vmem>>, vector<1x1x32x84xf32>
    %207 = vector.shape_cast %206 : vector<1x1x32x84xf32> to vector<32x84xf32>
    %cst_265 = arith.constant dense<0.000000e+00> : vector<7x84xf32>
    %208 = tpu.matmul %205, %207, %cst_265 {dimension_numbers = #tpu.dot_dimension_numbers<[1], [0], [0], [1], [0, 0, 1, 1], [], []>} : vector<7x32xf32>, vector<32x84xf32>, vector<7x84xf32> -> vector<7x84xf32>
    %209 = arith.addf %199, %208 : vector<7x84xf32>
    %c1_266 = arith.constant 1 : index
    %c3_267 = arith.constant 3 : index
    %c0_268 = arith.constant 0 : index
    %c0_269 = arith.constant 0 : index
    %210 = vector.load %arg2[%c1_266, %c3_267, %c0_268, %c0_269] : memref<2x5x32x84xf32, #tpu.memory_space<vmem>>, vector<1x1x32x84xf32>
    %211 = vector.shape_cast %210 : vector<1x1x32x84xf32> to vector<32x84xf32>
    %cst_270 = arith.constant dense<0.000000e+00> : vector<7x84xf32>
    %212 = tpu.matmul %205, %211, %cst_270 {dimension_numbers = #tpu.dot_dimension_numbers<[1], [0], [0], [1], [0, 0, 1, 1], [], []>} : vector<7x32xf32>, vector<32x84xf32>, vector<7x84xf32> -> vector<7x84xf32>
    %213 = arith.addf %203, %212 : vector<7x84xf32>
    %c0_271 = arith.constant 0 : index
    %c3_272 = arith.constant 3 : index
    %c1_273 = arith.constant 1 : index
    %c0_274 = arith.constant 0 : index
    %214 = vector.load %arg1[%c0_271, %c3_272, %c1_273, %c0_274] : memref<1x4x8x32xf32, #tpu.memory_space<vmem>>, vector<1x1x7x32xf32>
    %215 = vector.shape_cast %214 : vector<1x1x7x32xf32> to vector<7x32xf32>
    %c0_275 = arith.constant 0 : index
    %c4_276 = arith.constant 4 : index
    %c0_277 = arith.constant 0 : index
    %c0_278 = arith.constant 0 : index
    %216 = vector.load %arg2[%c0_275, %c4_276, %c0_277, %c0_278] : memref<2x5x32x84xf32, #tpu.memory_space<vmem>>, vector<1x1x32x84xf32>
    %217 = vector.shape_cast %216 : vector<1x1x32x84xf32> to vector<32x84xf32>
    %cst_279 = arith.constant dense<0.000000e+00> : vector<7x84xf32>
    %218 = tpu.matmul %215, %217, %cst_279 {dimension_numbers = #tpu.dot_dimension_numbers<[1], [0], [0], [1], [0, 0, 1, 1], [], []>} : vector<7x32xf32>, vector<32x84xf32>, vector<7x84xf32> -> vector<7x84xf32>
    %219 = arith.addf %209, %218 : vector<7x84xf32>
    %c1_280 = arith.constant 1 : index
    %c4_281 = arith.constant 4 : index
    %c0_282 = arith.constant 0 : index
    %c0_283 = arith.constant 0 : index
    %220 = vector.load %arg2[%c1_280, %c4_281, %c0_282, %c0_283] : memref<2x5x32x84xf32, #tpu.memory_space<vmem>>, vector<1x1x32x84xf32>
    %221 = vector.shape_cast %220 : vector<1x1x32x84xf32> to vector<32x84xf32>
    %cst_284 = arith.constant dense<0.000000e+00> : vector<7x84xf32>
    %222 = tpu.matmul %215, %221, %cst_284 {dimension_numbers = #tpu.dot_dimension_numbers<[1], [0], [0], [1], [0, 0, 1, 1], [], []>} : vector<7x32xf32>, vector<32x84xf32>, vector<7x84xf32> -> vector<7x84xf32>
    %223 = arith.addf %213, %222 : vector<7x84xf32>
    %224 = vector.broadcast %0 : vector<1x84xf32> to vector<7x84xf32>
    %225 = arith.addf %219, %224 : vector<7x84xf32>
    %cst_285 = arith.constant 0.000000e+00 : f32
    %226 = vector.broadcast %cst_285 : f32 to vector<7x84xf32>
    %227 = arith.maximumf %225, %226 : vector<7x84xf32>
    %228 = arith.maximumf %175, %227 : vector<7x84xf32>
    %229 = vector.broadcast %0 : vector<1x84xf32> to vector<7x84xf32>
    %230 = arith.addf %223, %229 : vector<7x84xf32>
    %cst_286 = arith.constant 0.000000e+00 : f32
    %231 = vector.broadcast %cst_286 : f32 to vector<7x84xf32>
    %232 = arith.maximumf %230, %231 : vector<7x84xf32>
    %233 = arith.maximumf %228, %232 : vector<7x84xf32>
    %c1_287 = arith.constant 1 : index
    %c0_288 = arith.constant 0 : index
    %c0_289 = arith.constant 0 : index
    %234 = vector.load %arg13[%c1_287, %c0_288, %c0_289] : memref<2x7x84xf32, #tpu.memory_space<vmem>>, vector<1x7x84xf32>
    %235 = vector.shape_cast %234 : vector<1x7x84xf32> to vector<7x84xf32>
    %236 = vector.shape_cast %233 : vector<7x84xf32> to vector<1x7x84xf32>
    tpu.vector_store %arg13[%c1_287, %c0_288, %c0_289], %236 {strides = array<i32>} : memref<2x7x84xf32, #tpu.memory_space<vmem>>, vector<1x7x84xf32>,
    %c0_290 = arith.constant 0 : index
    %c0_291 = arith.constant 0 : index
    %237 = vector.load %arg5[%c0_290, %c0_291] : memref<1x80xf32, #tpu.memory_space<vmem>>, vector<1x80xf32>
    %c0_292 = arith.constant 0 : index
    %c0_293 = arith.constant 0 : index
    %c0_294 = arith.constant 0 : index
    %238 = vector.load %arg13[%c0_292, %c0_293, %c0_294] : memref<2x7x84xf32, #tpu.memory_space<vmem>>, vector<1x5x84xf32>
    %239 = vector.shape_cast %238 : vector<1x5x84xf32> to vector<5x84xf32>
    %c0_295 = arith.constant 0 : index
    %c0_296 = arith.constant 0 : index
    %c0_297 = arith.constant 0 : index
    %c0_298 = arith.constant 0 : index
    %240 = vector.load %arg4[%c0_295, %c0_296, %c0_297, %c0_298] : memref<2x5x84x80xf32, #tpu.memory_space<vmem>>, vector<1x1x84x80xf32>
    %241 = vector.shape_cast %240 : vector<1x1x84x80xf32> to vector<84x80xf32>
    %cst_299 = arith.constant dense<0.000000e+00> : vector<5x80xf32>
    %242 = tpu.matmul %239, %241, %cst_299 {dimension_numbers = #tpu.dot_dimension_numbers<[1], [0], [0], [1], [0, 0, 1, 1], [], []>} : vector<5x84xf32>, vector<84x80xf32>, vector<5x80xf32> -> vector<5x80xf32>
    %c1_300 = arith.constant 1 : index
    %c0_301 = arith.constant 0 : index
    %c0_302 = arith.constant 0 : index
    %c0_303 = arith.constant 0 : index
    %243 = vector.load %arg4[%c1_300, %c0_301, %c0_302, %c0_303] : memref<2x5x84x80xf32, #tpu.memory_space<vmem>>, vector<1x1x84x80xf32>
    %244 = vector.shape_cast %243 : vector<1x1x84x80xf32> to vector<84x80xf32>
    %cst_304 = arith.constant dense<0.000000e+00> : vector<5x80xf32>
    %245 = tpu.matmul %239, %244, %cst_304 {dimension_numbers = #tpu.dot_dimension_numbers<[1], [0], [0], [1], [0, 0, 1, 1], [], []>} : vector<5x84xf32>, vector<84x80xf32>, vector<5x80xf32> -> vector<5x80xf32>
    %c1_305 = arith.constant 1 : index
    %c0_306 = arith.constant 0 : index
    %c0_307 = arith.constant 0 : index
    %246 = vector.load %arg13[%c1_305, %c0_306, %c0_307] : memref<2x7x84xf32, #tpu.memory_space<vmem>>, vector<1x5x84xf32>
    %247 = vector.shape_cast %246 : vector<1x5x84xf32> to vector<5x84xf32>
    %c0_308 = arith.constant 0 : index
    %c1_309 = arith.constant 1 : index
    %c0_310 = arith.constant 0 : index
    %c0_311 = arith.constant 0 : index
    %248 = vector.load %arg4[%c0_308, %c1_309, %c0_310, %c0_311] : memref<2x5x84x80xf32, #tpu.memory_space<vmem>>, vector<1x1x84x80xf32>
    %249 = vector.shape_cast %248 : vector<1x1x84x80xf32> to vector<84x80xf32>
    %cst_312 = arith.constant dense<0.000000e+00> : vector<5x80xf32>
    %250 = tpu.matmul %247, %249, %cst_312 {dimension_numbers = #tpu.dot_dimension_numbers<[1], [0], [0], [1], [0, 0, 1, 1], [], []>} : vector<5x84xf32>, vector<84x80xf32>, vector<5x80xf32> -> vector<5x80xf32>
    %251 = arith.addf %242, %250 : vector<5x80xf32>
    %c1_313 = arith.constant 1 : index
    %c1_314 = arith.constant 1 : index
    %c0_315 = arith.constant 0 : index
    %c0_316 = arith.constant 0 : index
    %252 = vector.load %arg4[%c1_313, %c1_314, %c0_315, %c0_316] : memref<2x5x84x80xf32, #tpu.memory_space<vmem>>, vector<1x1x84x80xf32>
    %253 = vector.shape_cast %252 : vector<1x1x84x80xf32> to vector<84x80xf32>
    %cst_317 = arith.constant dense<0.000000e+00> : vector<5x80xf32>
    %254 = tpu.matmul %247, %253, %cst_317 {dimension_numbers = #tpu.dot_dimension_numbers<[1], [0], [0], [1], [0, 0, 1, 1], [], []>} : vector<5x84xf32>, vector<84x80xf32>, vector<5x80xf32> -> vector<5x80xf32>
    %255 = arith.addf %245, %254 : vector<5x80xf32>
    %c0_318 = arith.constant 0 : index
    %c1_319 = arith.constant 1 : index
    %c0_320 = arith.constant 0 : index
    %256 = vector.load %arg13[%c0_318, %c1_319, %c0_320] : memref<2x7x84xf32, #tpu.memory_space<vmem>>, vector<1x5x84xf32>
    %257 = vector.shape_cast %256 : vector<1x5x84xf32> to vector<5x84xf32>
    %c0_321 = arith.constant 0 : index
    %c2_322 = arith.constant 2 : index
    %c0_323 = arith.constant 0 : index
    %c0_324 = arith.constant 0 : index
    %258 = vector.load %arg4[%c0_321, %c2_322, %c0_323, %c0_324] : memref<2x5x84x80xf32, #tpu.memory_space<vmem>>, vector<1x1x84x80xf32>
    %259 = vector.shape_cast %258 : vector<1x1x84x80xf32> to vector<84x80xf32>
    %cst_325 = arith.constant dense<0.000000e+00> : vector<5x80xf32>
    %260 = tpu.matmul %257, %259, %cst_325 {dimension_numbers = #tpu.dot_dimension_numbers<[1], [0], [0], [1], [0, 0, 1, 1], [], []>} : vector<5x84xf32>, vector<84x80xf32>, vector<5x80xf32> -> vector<5x80xf32>
    %261 = arith.addf %251, %260 : vector<5x80xf32>
    %c1_326 = arith.constant 1 : index
    %c2_327 = arith.constant 2 : index
    %c0_328 = arith.constant 0 : index
    %c0_329 = arith.constant 0 : index
    %262 = vector.load %arg4[%c1_326, %c2_327, %c0_328, %c0_329] : memref<2x5x84x80xf32, #tpu.memory_space<vmem>>, vector<1x1x84x80xf32>
    %263 = vector.shape_cast %262 : vector<1x1x84x80xf32> to vector<84x80xf32>
    %cst_330 = arith.constant dense<0.000000e+00> : vector<5x80xf32>
    %264 = tpu.matmul %257, %263, %cst_330 {dimension_numbers = #tpu.dot_dimension_numbers<[1], [0], [0], [1], [0, 0, 1, 1], [], []>} : vector<5x84xf32>, vector<84x80xf32>, vector<5x80xf32> -> vector<5x80xf32>
    %265 = arith.addf %255, %264 : vector<5x80xf32>
    %c1_331 = arith.constant 1 : index
    %c1_332 = arith.constant 1 : index
    %c0_333 = arith.constant 0 : index
    %266 = vector.load %arg13[%c1_331, %c1_332, %c0_333] : memref<2x7x84xf32, #tpu.memory_space<vmem>>, vector<1x5x84xf32>
    %267 = vector.shape_cast %266 : vector<1x5x84xf32> to vector<5x84xf32>
    %c0_334 = arith.constant 0 : index
    %c3_335 = arith.constant 3 : index
    %c0_336 = arith.constant 0 : index
    %c0_337 = arith.constant 0 : index
    %268 = vector.load %arg4[%c0_334, %c3_335, %c0_336, %c0_337] : memref<2x5x84x80xf32, #tpu.memory_space<vmem>>, vector<1x1x84x80xf32>
    %269 = vector.shape_cast %268 : vector<1x1x84x80xf32> to vector<84x80xf32>
    %cst_338 = arith.constant dense<0.000000e+00> : vector<5x80xf32>
    %270 = tpu.matmul %267, %269, %cst_338 {dimension_numbers = #tpu.dot_dimension_numbers<[1], [0], [0], [1], [0, 0, 1, 1], [], []>} : vector<5x84xf32>, vector<84x80xf32>, vector<5x80xf32> -> vector<5x80xf32>
    %271 = arith.addf %261, %270 : vector<5x80xf32>
    %c1_339 = arith.constant 1 : index
    %c3_340 = arith.constant 3 : index
    %c0_341 = arith.constant 0 : index
    %c0_342 = arith.constant 0 : index
    %272 = vector.load %arg4[%c1_339, %c3_340, %c0_341, %c0_342] : memref<2x5x84x80xf32, #tpu.memory_space<vmem>>, vector<1x1x84x80xf32>
    %273 = vector.shape_cast %272 : vector<1x1x84x80xf32> to vector<84x80xf32>
    %cst_343 = arith.constant dense<0.000000e+00> : vector<5x80xf32>
    %274 = tpu.matmul %267, %273, %cst_343 {dimension_numbers = #tpu.dot_dimension_numbers<[1], [0], [0], [1], [0, 0, 1, 1], [], []>} : vector<5x84xf32>, vector<84x80xf32>, vector<5x80xf32> -> vector<5x80xf32>
    %275 = arith.addf %265, %274 : vector<5x80xf32>
    %c0_344 = arith.constant 0 : index
    %c2_345 = arith.constant 2 : index
    %c0_346 = arith.constant 0 : index
    %276 = vector.load %arg13[%c0_344, %c2_345, %c0_346] : memref<2x7x84xf32, #tpu.memory_space<vmem>>, vector<1x5x84xf32>
    %277 = vector.shape_cast %276 : vector<1x5x84xf32> to vector<5x84xf32>
    %c0_347 = arith.constant 0 : index
    %c4_348 = arith.constant 4 : index
    %c0_349 = arith.constant 0 : index
    %c0_350 = arith.constant 0 : index
    %278 = vector.load %arg4[%c0_347, %c4_348, %c0_349, %c0_350] : memref<2x5x84x80xf32, #tpu.memory_space<vmem>>, vector<1x1x84x80xf32>
    %279 = vector.shape_cast %278 : vector<1x1x84x80xf32> to vector<84x80xf32>
    %cst_351 = arith.constant dense<0.000000e+00> : vector<5x80xf32>
    %280 = tpu.matmul %277, %279, %cst_351 {dimension_numbers = #tpu.dot_dimension_numbers<[1], [0], [0], [1], [0, 0, 1, 1], [], []>} : vector<5x84xf32>, vector<84x80xf32>, vector<5x80xf32> -> vector<5x80xf32>
    %281 = arith.addf %271, %280 : vector<5x80xf32>
    %c1_352 = arith.constant 1 : index
    %c4_353 = arith.constant 4 : index
    %c0_354 = arith.constant 0 : index
    %c0_355 = arith.constant 0 : index
    %282 = vector.load %arg4[%c1_352, %c4_353, %c0_354, %c0_355] : memref<2x5x84x80xf32, #tpu.memory_space<vmem>>, vector<1x1x84x80xf32>
    %283 = vector.shape_cast %282 : vector<1x1x84x80xf32> to vector<84x80xf32>
    %cst_356 = arith.constant dense<0.000000e+00> : vector<5x80xf32>
    %284 = tpu.matmul %277, %283, %cst_356 {dimension_numbers = #tpu.dot_dimension_numbers<[1], [0], [0], [1], [0, 0, 1, 1], [], []>} : vector<5x84xf32>, vector<84x80xf32>, vector<5x80xf32> -> vector<5x80xf32>
    %285 = arith.addf %275, %284 : vector<5x80xf32>
    %286 = vector.broadcast %237 : vector<1x80xf32> to vector<5x80xf32>
    %287 = arith.addf %281, %286 : vector<5x80xf32>
    %cst_357 = arith.constant 0.000000e+00 : f32
    %288 = vector.broadcast %cst_357 : f32 to vector<5x80xf32>
    %289 = arith.maximumf %287, %288 : vector<5x80xf32>
    %290 = vector.broadcast %237 : vector<1x80xf32> to vector<5x80xf32>
    %291 = arith.addf %285, %290 : vector<5x80xf32>
    %cst_358 = arith.constant 0.000000e+00 : f32
    %292 = vector.broadcast %cst_358 : f32 to vector<5x80xf32>
    %293 = arith.maximumf %291, %292 : vector<5x80xf32>
    %294 = arith.maximumf %289, %293 : vector<5x80xf32>
    %c1_359 = arith.constant 1 : index
    %c0_360 = arith.constant 0 : index
    %c0_361 = arith.constant 0 : index
    %295 = vector.load %arg13[%c1_359, %c0_360, %c0_361] : memref<2x7x84xf32, #tpu.memory_space<vmem>>, vector<1x5x84xf32>
    %296 = vector.shape_cast %295 : vector<1x5x84xf32> to vector<5x84xf32>
    %c0_362 = arith.constant 0 : index
    %c0_363 = arith.constant 0 : index
    %c0_364 = arith.constant 0 : index
    %c0_365 = arith.constant 0 : index
    %297 = vector.load %arg4[%c0_362, %c0_363, %c0_364, %c0_365] : memref<2x5x84x80xf32, #tpu.memory_space<vmem>>, vector<1x1x84x80xf32>
    %298 = vector.shape_cast %297 : vector<1x1x84x80xf32> to vector<84x80xf32>
    %cst_366 = arith.constant dense<0.000000e+00> : vector<5x80xf32>
    %299 = tpu.matmul %296, %298, %cst_366 {dimension_numbers = #tpu.dot_dimension_numbers<[1], [0], [0], [1], [0, 0, 1, 1], [], []>} : vector<5x84xf32>, vector<84x80xf32>, vector<5x80xf32> -> vector<5x80xf32>
    %c1_367 = arith.constant 1 : index
    %c0_368 = arith.constant 0 : index
    %c0_369 = arith.constant 0 : index
    %c0_370 = arith.constant 0 : index
    %300 = vector.load %arg4[%c1_367, %c0_368, %c0_369, %c0_370] : memref<2x5x84x80xf32, #tpu.memory_space<vmem>>, vector<1x1x84x80xf32>
    %301 = vector.shape_cast %300 : vector<1x1x84x80xf32> to vector<84x80xf32>
    %cst_371 = arith.constant dense<0.000000e+00> : vector<5x80xf32>
    %302 = tpu.matmul %296, %301, %cst_371 {dimension_numbers = #tpu.dot_dimension_numbers<[1], [0], [0], [1], [0, 0, 1, 1], [], []>} : vector<5x84xf32>, vector<84x80xf32>, vector<5x80xf32> -> vector<5x80xf32>
    %c0_372 = arith.constant 0 : index
    %c1_373 = arith.constant 1 : index
    %c0_374 = arith.constant 0 : index
    %303 = vector.load %arg13[%c0_372, %c1_373, %c0_374] : memref<2x7x84xf32, #tpu.memory_space<vmem>>, vector<1x5x84xf32>
    %304 = vector.shape_cast %303 : vector<1x5x84xf32> to vector<5x84xf32>
    %c0_375 = arith.constant 0 : index
    %c1_376 = arith.constant 1 : index
    %c0_377 = arith.constant 0 : index
    %c0_378 = arith.constant 0 : index
    %305 = vector.load %arg4[%c0_375, %c1_376, %c0_377, %c0_378] : memref<2x5x84x80xf32, #tpu.memory_space<vmem>>, vector<1x1x84x80xf32>
    %306 = vector.shape_cast %305 : vector<1x1x84x80xf32> to vector<84x80xf32>
    %cst_379 = arith.constant dense<0.000000e+00> : vector<5x80xf32>
    %307 = tpu.matmul %304, %306, %cst_379 {dimension_numbers = #tpu.dot_dimension_numbers<[1], [0], [0], [1], [0, 0, 1, 1], [], []>} : vector<5x84xf32>, vector<84x80xf32>, vector<5x80xf32> -> vector<5x80xf32>
    %308 = arith.addf %299, %307 : vector<5x80xf32>
    %c1_380 = arith.constant 1 : index
    %c1_381 = arith.constant 1 : index
    %c0_382 = arith.constant 0 : index
    %c0_383 = arith.constant 0 : index
    %309 = vector.load %arg4[%c1_380, %c1_381, %c0_382, %c0_383] : memref<2x5x84x80xf32, #tpu.memory_space<vmem>>, vector<1x1x84x80xf32>
    %310 = vector.shape_cast %309 : vector<1x1x84x80xf32> to vector<84x80xf32>
    %cst_384 = arith.constant dense<0.000000e+00> : vector<5x80xf32>
    %311 = tpu.matmul %304, %310, %cst_384 {dimension_numbers = #tpu.dot_dimension_numbers<[1], [0], [0], [1], [0, 0, 1, 1], [], []>} : vector<5x84xf32>, vector<84x80xf32>, vector<5x80xf32> -> vector<5x80xf32>
    %312 = arith.addf %302, %311 : vector<5x80xf32>
    %c1_385 = arith.constant 1 : index
    %c1_386 = arith.constant 1 : index
    %c0_387 = arith.constant 0 : index
    %313 = vector.load %arg13[%c1_385, %c1_386, %c0_387] : memref<2x7x84xf32, #tpu.memory_space<vmem>>, vector<1x5x84xf32>
    %314 = vector.shape_cast %313 : vector<1x5x84xf32> to vector<5x84xf32>
    %c0_388 = arith.constant 0 : index
    %c2_389 = arith.constant 2 : index
    %c0_390 = arith.constant 0 : index
    %c0_391 = arith.constant 0 : index
    %315 = vector.load %arg4[%c0_388, %c2_389, %c0_390, %c0_391] : memref<2x5x84x80xf32, #tpu.memory_space<vmem>>, vector<1x1x84x80xf32>
    %316 = vector.shape_cast %315 : vector<1x1x84x80xf32> to vector<84x80xf32>
    %cst_392 = arith.constant dense<0.000000e+00> : vector<5x80xf32>
    %317 = tpu.matmul %314, %316, %cst_392 {dimension_numbers = #tpu.dot_dimension_numbers<[1], [0], [0], [1], [0, 0, 1, 1], [], []>} : vector<5x84xf32>, vector<84x80xf32>, vector<5x80xf32> -> vector<5x80xf32>
    %318 = arith.addf %308, %317 : vector<5x80xf32>
    %c1_393 = arith.constant 1 : index
    %c2_394 = arith.constant 2 : index
    %c0_395 = arith.constant 0 : index
    %c0_396 = arith.constant 0 : index
    %319 = vector.load %arg4[%c1_393, %c2_394, %c0_395, %c0_396] : memref<2x5x84x80xf32, #tpu.memory_space<vmem>>, vector<1x1x84x80xf32>
    %320 = vector.shape_cast %319 : vector<1x1x84x80xf32> to vector<84x80xf32>
    %cst_397 = arith.constant dense<0.000000e+00> : vector<5x80xf32>
    %321 = tpu.matmul %314, %320, %cst_397 {dimension_numbers = #tpu.dot_dimension_numbers<[1], [0], [0], [1], [0, 0, 1, 1], [], []>} : vector<5x84xf32>, vector<84x80xf32>, vector<5x80xf32> -> vector<5x80xf32>
    %322 = arith.addf %312, %321 : vector<5x80xf32>
    %c0_398 = arith.constant 0 : index
    %c2_399 = arith.constant 2 : index
    %c0_400 = arith.constant 0 : index
    %323 = vector.load %arg13[%c0_398, %c2_399, %c0_400] : memref<2x7x84xf32, #tpu.memory_space<vmem>>, vector<1x5x84xf32>
    %324 = vector.shape_cast %323 : vector<1x5x84xf32> to vector<5x84xf32>
    %c0_401 = arith.constant 0 : index
    %c3_402 = arith.constant 3 : index
    %c0_403 = arith.constant 0 : index
    %c0_404 = arith.constant 0 : index
    %325 = vector.load %arg4[%c0_401, %c3_402, %c0_403, %c0_404] : memref<2x5x84x80xf32, #tpu.memory_space<vmem>>, vector<1x1x84x80xf32>
    %326 = vector.shape_cast %325 : vector<1x1x84x80xf32> to vector<84x80xf32>
    %cst_405 = arith.constant dense<0.000000e+00> : vector<5x80xf32>
    %327 = tpu.matmul %324, %326, %cst_405 {dimension_numbers = #tpu.dot_dimension_numbers<[1], [0], [0], [1], [0, 0, 1, 1], [], []>} : vector<5x84xf32>, vector<84x80xf32>, vector<5x80xf32> -> vector<5x80xf32>
    %328 = arith.addf %318, %327 : vector<5x80xf32>
    %c1_406 = arith.constant 1 : index
    %c3_407 = arith.constant 3 : index
    %c0_408 = arith.constant 0 : index
    %c0_409 = arith.constant 0 : index
    %329 = vector.load %arg4[%c1_406, %c3_407, %c0_408, %c0_409] : memref<2x5x84x80xf32, #tpu.memory_space<vmem>>, vector<1x1x84x80xf32>
    %330 = vector.shape_cast %329 : vector<1x1x84x80xf32> to vector<84x80xf32>
    %cst_410 = arith.constant dense<0.000000e+00> : vector<5x80xf32>
    %331 = tpu.matmul %324, %330, %cst_410 {dimension_numbers = #tpu.dot_dimension_numbers<[1], [0], [0], [1], [0, 0, 1, 1], [], []>} : vector<5x84xf32>, vector<84x80xf32>, vector<5x80xf32> -> vector<5x80xf32>
    %332 = arith.addf %322, %331 : vector<5x80xf32>
    %c1_411 = arith.constant 1 : index
    %c2_412 = arith.constant 2 : index
    %c0_413 = arith.constant 0 : index
    %333 = vector.load %arg13[%c1_411, %c2_412, %c0_413] : memref<2x7x84xf32, #tpu.memory_space<vmem>>, vector<1x5x84xf32>
    %334 = vector.shape_cast %333 : vector<1x5x84xf32> to vector<5x84xf32>
    %c0_414 = arith.constant 0 : index
    %c4_415 = arith.constant 4 : index
    %c0_416 = arith.constant 0 : index
    %c0_417 = arith.constant 0 : index
    %335 = vector.load %arg4[%c0_414, %c4_415, %c0_416, %c0_417] : memref<2x5x84x80xf32, #tpu.memory_space<vmem>>, vector<1x1x84x80xf32>
    %336 = vector.shape_cast %335 : vector<1x1x84x80xf32> to vector<84x80xf32>
    %cst_418 = arith.constant dense<0.000000e+00> : vector<5x80xf32>
    %337 = tpu.matmul %334, %336, %cst_418 {dimension_numbers = #tpu.dot_dimension_numbers<[1], [0], [0], [1], [0, 0, 1, 1], [], []>} : vector<5x84xf32>, vector<84x80xf32>, vector<5x80xf32> -> vector<5x80xf32>
    %338 = arith.addf %328, %337 : vector<5x80xf32>
    %c1_419 = arith.constant 1 : index
    %c4_420 = arith.constant 4 : index
    %c0_421 = arith.constant 0 : index
    %c0_422 = arith.constant 0 : index
    %339 = vector.load %arg4[%c1_419, %c4_420, %c0_421, %c0_422] : memref<2x5x84x80xf32, #tpu.memory_space<vmem>>, vector<1x1x84x80xf32>
    %340 = vector.shape_cast %339 : vector<1x1x84x80xf32> to vector<84x80xf32>
    %cst_423 = arith.constant dense<0.000000e+00> : vector<5x80xf32>
    %341 = tpu.matmul %334, %340, %cst_423 {dimension_numbers = #tpu.dot_dimension_numbers<[1], [0], [0], [1], [0, 0, 1, 1], [], []>} : vector<5x84xf32>, vector<84x80xf32>, vector<5x80xf32> -> vector<5x80xf32>
    %342 = arith.addf %332, %341 : vector<5x80xf32>
    %343 = vector.broadcast %237 : vector<1x80xf32> to vector<5x80xf32>
    %344 = arith.addf %338, %343 : vector<5x80xf32>
    %cst_424 = arith.constant 0.000000e+00 : f32
    %345 = vector.broadcast %cst_424 : f32 to vector<5x80xf32>
    %346 = arith.maximumf %344, %345 : vector<5x80xf32>
    %347 = arith.maximumf %294, %346 : vector<5x80xf32>
    %348 = vector.broadcast %237 : vector<1x80xf32> to vector<5x80xf32>
    %349 = arith.addf %342, %348 : vector<5x80xf32>
    %cst_425 = arith.constant 0.000000e+00 : f32
    %350 = vector.broadcast %cst_425 : f32 to vector<5x80xf32>
    %351 = arith.maximumf %349, %350 : vector<5x80xf32>
    %352 = arith.maximumf %347, %351 : vector<5x80xf32>
    %c0_426 = arith.constant 0 : index
    %c0_427 = arith.constant 0 : index
    %353 = vector.load %arg14[%c0_426, %c0_427] : memref<5x80xf32, #tpu.memory_space<vmem>>, vector<5x80xf32>
    tpu.vector_store %arg14[%c0_426, %c0_427], %352 {strides = array<i32>} : memref<5x80xf32, #tpu.memory_space<vmem>>, vector<5x80xf32>,
    %c0_428 = arith.constant 0 : index
    %c0_429 = arith.constant 0 : index
    %354 = vector.load %arg14[%c0_428, %c0_429] : memref<5x80xf32, #tpu.memory_space<vmem>>, vector<1x80xf32>
    %c0_430 = arith.constant 0 : index
    %c0_431 = arith.constant 0 : index
    %c0_432 = arith.constant 0 : index
    %355 = vector.load %arg6[%c0_430, %c0_431, %c0_432] : memref<5x80x120xf32, #tpu.memory_space<vmem>>, vector<1x80x120xf32>
    %356 = vector.shape_cast %355 : vector<1x80x120xf32> to vector<80x120xf32>
    %cst_433 = arith.constant dense<0.000000e+00> : vector<1x120xf32>
    %357 = tpu.matmul %354, %356, %cst_433 {dimension_numbers = #tpu.dot_dimension_numbers<[1], [0], [0], [1], [0, 0, 1, 1], [], []>} : vector<1x80xf32>, vector<80x120xf32>, vector<1x120xf32> -> vector<1x120xf32>
    %c1_434 = arith.constant 1 : index
    %c0_435 = arith.constant 0 : index
    %358 = vector.load %arg14[%c1_434, %c0_435] : memref<5x80xf32, #tpu.memory_space<vmem>>, vector<1x80xf32>
    %c1_436 = arith.constant 1 : index
    %c0_437 = arith.constant 0 : index
    %c0_438 = arith.constant 0 : index
    %359 = vector.load %arg6[%c1_436, %c0_437, %c0_438] : memref<5x80x120xf32, #tpu.memory_space<vmem>>, vector<1x80x120xf32>
    %360 = vector.shape_cast %359 : vector<1x80x120xf32> to vector<80x120xf32>
    %cst_439 = arith.constant dense<0.000000e+00> : vector<1x120xf32>
    %361 = tpu.matmul %358, %360, %cst_439 {dimension_numbers = #tpu.dot_dimension_numbers<[1], [0], [0], [1], [0, 0, 1, 1], [], []>} : vector<1x80xf32>, vector<80x120xf32>, vector<1x120xf32> -> vector<1x120xf32>
    %362 = arith.addf %357, %361 : vector<1x120xf32>
    %c2_440 = arith.constant 2 : index
    %c0_441 = arith.constant 0 : index
    %363 = vector.load %arg14[%c2_440, %c0_441] : memref<5x80xf32, #tpu.memory_space<vmem>>, vector<1x80xf32>
    %c2_442 = arith.constant 2 : index
    %c0_443 = arith.constant 0 : index
    %c0_444 = arith.constant 0 : index
    %364 = vector.load %arg6[%c2_442, %c0_443, %c0_444] : memref<5x80x120xf32, #tpu.memory_space<vmem>>, vector<1x80x120xf32>
    %365 = vector.shape_cast %364 : vector<1x80x120xf32> to vector<80x120xf32>
    %cst_445 = arith.constant dense<0.000000e+00> : vector<1x120xf32>
    %366 = tpu.matmul %363, %365, %cst_445 {dimension_numbers = #tpu.dot_dimension_numbers<[1], [0], [0], [1], [0, 0, 1, 1], [], []>} : vector<1x80xf32>, vector<80x120xf32>, vector<1x120xf32> -> vector<1x120xf32>
    %367 = arith.addf %362, %366 : vector<1x120xf32>
    %c3_446 = arith.constant 3 : index
    %c0_447 = arith.constant 0 : index
    %368 = vector.load %arg14[%c3_446, %c0_447] : memref<5x80xf32, #tpu.memory_space<vmem>>, vector<1x80xf32>
    %c3_448 = arith.constant 3 : index
    %c0_449 = arith.constant 0 : index
    %c0_450 = arith.constant 0 : index
    %369 = vector.load %arg6[%c3_448, %c0_449, %c0_450] : memref<5x80x120xf32, #tpu.memory_space<vmem>>, vector<1x80x120xf32>
    %370 = vector.shape_cast %369 : vector<1x80x120xf32> to vector<80x120xf32>
    %cst_451 = arith.constant dense<0.000000e+00> : vector<1x120xf32>
    %371 = tpu.matmul %368, %370, %cst_451 {dimension_numbers = #tpu.dot_dimension_numbers<[1], [0], [0], [1], [0, 0, 1, 1], [], []>} : vector<1x80xf32>, vector<80x120xf32>, vector<1x120xf32> -> vector<1x120xf32>
    %372 = arith.addf %367, %371 : vector<1x120xf32>
    %c4_452 = arith.constant 4 : index
    %c0_453 = arith.constant 0 : index
    %373 = vector.load %arg14[%c4_452, %c0_453] : memref<5x80xf32, #tpu.memory_space<vmem>>, vector<1x80xf32>
    %c4_454 = arith.constant 4 : index
    %c0_455 = arith.constant 0 : index
    %c0_456 = arith.constant 0 : index
    %374 = vector.load %arg6[%c4_454, %c0_455, %c0_456] : memref<5x80x120xf32, #tpu.memory_space<vmem>>, vector<1x80x120xf32>
    %375 = vector.shape_cast %374 : vector<1x80x120xf32> to vector<80x120xf32>
    %cst_457 = arith.constant dense<0.000000e+00> : vector<1x120xf32>
    %376 = tpu.matmul %373, %375, %cst_457 {dimension_numbers = #tpu.dot_dimension_numbers<[1], [0], [0], [1], [0, 0, 1, 1], [], []>} : vector<1x80xf32>, vector<80x120xf32>, vector<1x120xf32> -> vector<1x120xf32>
    %377 = arith.addf %372, %376 : vector<1x120xf32>
    %c0_458 = arith.constant 0 : index
    %c0_459 = arith.constant 0 : index
    %378 = vector.load %arg7[%c0_458, %c0_459] : memref<1x120xf32, #tpu.memory_space<vmem>>, vector<1x120xf32>
    %379 = arith.addf %377, %378 : vector<1x120xf32>
    %cst_460 = arith.constant 0.000000e+00 : f32
    %380 = vector.broadcast %cst_460 : f32 to vector<1x120xf32>
    %381 = arith.maximumf %379, %380 : vector<1x120xf32>
    %c0_461 = arith.constant 0 : index
    %c0_462 = arith.constant 0 : index
    %382 = vector.load %arg8[%c0_461, %c0_462] : memref<120x84xf32, #tpu.memory_space<vmem>>, vector<120x84xf32>
    %cst_463 = arith.constant dense<0.000000e+00> : vector<1x84xf32>
    %383 = tpu.matmul %381, %382, %cst_463 {dimension_numbers = #tpu.dot_dimension_numbers<[1], [0], [0], [1], [0, 0, 1, 1], [], []>} : vector<1x120xf32>, vector<120x84xf32>, vector<1x84xf32> -> vector<1x84xf32>
    %c0_464 = arith.constant 0 : index
    %c0_465 = arith.constant 0 : index
    %384 = vector.load %arg9[%c0_464, %c0_465] : memref<1x84xf32, #tpu.memory_space<vmem>>, vector<1x84xf32>
    %385 = arith.addf %383, %384 : vector<1x84xf32>
    %cst_466 = arith.constant 0.000000e+00 : f32
    %386 = vector.broadcast %cst_466 : f32 to vector<1x84xf32>
    %387 = arith.maximumf %385, %386 : vector<1x84xf32>
    %c0_467 = arith.constant 0 : index
    %c0_468 = arith.constant 0 : index
    %388 = vector.load %arg10[%c0_467, %c0_468] : memref<84x10xf32, #tpu.memory_space<vmem>>, vector<84x10xf32>
    %cst_469 = arith.constant dense<0.000000e+00> : vector<1x10xf32>
    %389 = tpu.matmul %387, %388, %cst_469 {dimension_numbers = #tpu.dot_dimension_numbers<[1], [0], [0], [1], [0, 0, 1, 1], [], []>} : vector<1x84xf32>, vector<84x10xf32>, vector<1x10xf32> -> vector<1x10xf32>
    %c0_470 = arith.constant 0 : index
    %c0_471 = arith.constant 0 : index
    %390 = vector.load %arg11[%c0_470, %c0_471] : memref<1x10xf32, #tpu.memory_space<vmem>>, vector<1x10xf32>
    %391 = arith.addf %389, %390 : vector<1x10xf32>
    %cst_472 = arith.constant dense<0xFF800000> : vector<1xf32>
    %392 = vector.multi_reduction <maximumf>, %391, %cst_472 [1] : vector<1x10xf32> to vector<1xf32>
    %393 = vector.shape_cast %392 : vector<1xf32> to vector<1x1xf32>
    %394 = vector.broadcast %393 : vector<1x1xf32> to vector<1x10xf32>
    %395 = arith.subf %391, %394 : vector<1x10xf32>
    %396 = math.exp %395 : vector<1x10xf32>
    %cst_473 = arith.constant dense<0.000000e+00> : vector<1xf32>
    %397 = vector.multi_reduction <add>, %396, %cst_473 [1] : vector<1x10xf32> to vector<1xf32>
    %398 = vector.shape_cast %397 : vector<1xf32> to vector<1x1xf32>
    %399 = math.log %398 : vector<1x1xf32>
    %400 = vector.broadcast %399 : vector<1x1xf32> to vector<1x10xf32>
    %401 = arith.subf %395, %400 : vector<1x10xf32>
    %c0_474 = arith.constant 0 : index
    %c0_475 = arith.constant 0 : index
    %c0_476 = arith.constant 0 : index
    %402 = vector.load %arg12[%c0_474, %c0_475, %c0_476] : memref<1x1x10xf32, #tpu.memory_space<vmem>>, vector<1x1x10xf32>
    %403 = vector.shape_cast %402 : vector<1x1x10xf32> to vector<1x10xf32>
    %404 = vector.shape_cast %401 : vector<1x10xf32> to vector<1x1x10xf32>
    tpu.vector_store %arg12[%c0_474, %c0_475, %c0_476], %404 {strides = array<i32>} : memref<1x1x10xf32, #tpu.memory_space<vmem>>, vector<1x1x10xf32>,
    return
  }
  func.func @transform_0(%arg0: i32) -> (i32, i32, i32, i32) {
    %c0_i32 = arith.constant 0 : i32
    %c0_i32_0 = arith.constant 0 : i32
    %c0_i32_1 = arith.constant 0 : i32
    %c0_i32_2 = arith.constant 0 : i32
    return %arg0, %c0_i32, %c0_i32_0, %c0_i32_1 : i32, i32, i32, i32
  }
  func.func @transform_1(%arg0: i32) -> (i32, i32, i32, i32) {
    %c0_i32 = arith.constant 0 : i32
    %c0_i32_0 = arith.constant 0 : i32
    %c0_i32_1 = arith.constant 0 : i32
    %c0_i32_2 = arith.constant 0 : i32
    %c0_i32_3 = arith.constant 0 : i32
    return %c0_i32, %c0_i32_0, %c0_i32_1, %c0_i32_2 : i32, i32, i32, i32
  }
  func.func @transform_2(%arg0: i32) -> (i32, i32) {
    %c0_i32 = arith.constant 0 : i32
    %c0_i32_0 = arith.constant 0 : i32
    %c0_i32_1 = arith.constant 0 : i32
    return %c0_i32, %c0_i32_0 : i32, i32
  }
  func.func @transform_3(%arg0: i32) -> (i32, i32, i32, i32) {
    %c0_i32 = arith.constant 0 : i32
    %c0_i32_0 = arith.constant 0 : i32
    %c0_i32_1 = arith.constant 0 : i32
    %c0_i32_2 = arith.constant 0 : i32
    %c0_i32_3 = arith.constant 0 : i32
    return %c0_i32, %c0_i32_0, %c0_i32_1, %c0_i32_2 : i32, i32, i32, i32
  }
  func.func @transform_4(%arg0: i32) -> (i32, i32) {
    %c0_i32 = arith.constant 0 : i32
    %c0_i32_0 = arith.constant 0 : i32
    %c0_i32_1 = arith.constant 0 : i32
    return %c0_i32, %c0_i32_0 : i32, i32
  }
  func.func @transform_5(%arg0: i32) -> (i32, i32, i32) {
    %c0_i32 = arith.constant 0 : i32
    %c0_i32_0 = arith.constant 0 : i32
    %c0_i32_1 = arith.constant 0 : i32
    %c0_i32_2 = arith.constant 0 : i32
    return %c0_i32, %c0_i32_0, %c0_i32_1 : i32, i32, i32
  }
  func.func @transform_6(%arg0: i32) -> (i32, i32) {
    %c0_i32 = arith.constant 0 : i32
    %c0_i32_0 = arith.constant 0 : i32
    %c0_i32_1 = arith.constant 0 : i32
    return %c0_i32, %c0_i32_0 : i32, i32
  }
  func.func @transform_7(%arg0: i32) -> (i32, i32) {
    %c0_i32 = arith.constant 0 : i32
    %c0_i32_0 = arith.constant 0 : i32
    %c0_i32_1 = arith.constant 0 : i32
    return %c0_i32, %c0_i32_0 : i32, i32
  }
  func.func @transform_8(%arg0: i32) -> (i32, i32) {
    %c0_i32 = arith.constant 0 : i32
    %c0_i32_0 = arith.constant 0 : i32
    %c0_i32_1 = arith.constant 0 : i32
    return %c0_i32, %c0_i32_0 : i32, i32
  }
  func.func @transform_9(%arg0: i32) -> (i32, i32) {
    %c0_i32 = arith.constant 0 : i32
    %c0_i32_0 = arith.constant 0 : i32
    %c0_i32_1 = arith.constant 0 : i32
    return %c0_i32, %c0_i32_0 : i32, i32
  }
  func.func @transform_10(%arg0: i32) -> (i32, i32) {
    %c0_i32 = arith.constant 0 : i32
    %c0_i32_0 = arith.constant 0 : i32
    %c0_i32_1 = arith.constant 0 : i32
    return %c0_i32, %c0_i32_0 : i32, i32
  }
  func.func @transform_11(%arg0: i32) -> (i32, i32, i32) {
    %c0_i32 = arith.constant 0 : i32
    %c0_i32_0 = arith.constant 0 : i32
    %c0_i32_1 = arith.constant 0 : i32
    return %arg0, %c0_i32, %c0_i32_0 : i32, i32, i32
  }
}

</mosaic_0001>

<llo_original>
// kernel: lenet_apply.1
$region0: #{lenet_apply.1}
  #allocation0 [shape = 'u32[]', space=smem, size = 0x4, offset = 0x4, fixed_abs, tag = 'smem constant byte address 0x4 - core index']
  #allocation1 [shape = 'u32[72,128]{1,0:T(1,128)}', space=vmem, size = 0x9000, scoped, tag = 'internal scratch']
  #allocation2 [shape = 'f32[2,7,84]{2,1,0:T(8,128)}', space=vmem, size = 0x2000, scoped, tag = 'scratch operand']
  #allocation3 [shape = 'f32[5,80]{1,0:T(8,128)}', space=vmem, size = 0x1000, scoped, tag = 'scratch operand']
  %s0 = inlined_call_operand.vmem [shape: f32[2,4,8,32], index: 0, kind: input, shape index: {}]
  %s1 = inlined_call_operand.vmem [shape: f32[2,5,32,84], index: 1, kind: input, shape index: {}]
  %s2 = inlined_call_operand.vmem [shape: f32[1,84], index: 2, kind: input, shape index: {}]
  %s3 = inlined_call_operand.vmem [shape: f32[2,5,84,80], index: 3, kind: input, shape index: {}]
  %s4 = inlined_call_operand.vmem [shape: f32[1,80], index: 4, kind: input, shape index: {}]
  %s5 = inlined_call_operand.vmem [shape: f32[5,80,120], index: 5, kind: input, shape index: {}]
  %s6 = inlined_call_operand.vmem [shape: f32[1,120], index: 6, kind: input, shape index: {}]
  %s7 = inlined_call_operand.vmem [shape: f32[120,84], index: 7, kind: input, shape index: {}]
  %s8 = inlined_call_operand.vmem [shape: f32[1,84], index: 8, kind: input, shape index: {}]
  %s9 = inlined_call_operand.vmem [shape: f32[84,10], index: 9, kind: input, shape index: {}]
  %s10 = inlined_call_operand.vmem [shape: f32[1,10], index: 10, kind: input, shape index: {}]
  %s11 = inlined_call_operand.hbm [shape: f32[2,1,10], index: 11, kind: output, shape index: {}]
  %s12 = sld [smem:[#allocation0]]
  $region77: #{lenet_apply.1} parent=0
    _
  %s14 = ssub.s32 1, %s12
  %s15 = scalar_select 0, %s14, %s12
  $region1: #{lenet_apply.1} parent=0
    #allocation4 [shape = 'u8[1024]{0}', space=vmem, size = 0x400, scoped, tag = 'output window, operand 0']
    #allocation5 [shape = 's32[2]{0}', space=sflag, size = 0x8, scoped, tag = 'scoped memory for lenet_apply.1']
    %16 = vsyncpa [#allocation5], 0
    %s17 = scalar_lea.sflag [#allocation5], 1
    %18 = vsyncpa %s17, 0
    loop: start=0, step=1, limit=4
    $region2: #{lenet_apply.1} parent=1 // loop_pre_header
      _
    $region3: #{lenet_apply.1} parent=1 // loop_header
      %s20 = sphi 0, %s24
      %p21 = scmp.ge.s32.totalorder %s20, 4
      %s30 = sphi 0, %s32
      %s33 = sphi 0, %s30
      %s34 = sphi 0, %s33
      %s50 = sphi 0, %s34
      %s54 = sphi 0, %s54
      %s56 = sphi 0, %s54
      %s57 = sphi 0, %s56
      %s71 = sphi 0, %s57
      %s75 = sphi 0, %s75
      %s77 = sphi 0, %s75
      %s78 = sphi 0, %s77
      %s92 = sphi 0, %s78
      %s96 = sphi 0, %s96
      %s98 = sphi 0, %s96
      %s99 = sphi 0, %s98
      %s113 = sphi 0, %s99
      %s117 = sphi 0, %s117
      %s119 = sphi 0, %s117
      %s120 = sphi 0, %s119
      %s134 = sphi 0, %s120
      %s138 = sphi 0, %s138
      %s140 = sphi 0, %s138
      %s141 = sphi 0, %s140
      %s155 = sphi 0, %s141
      %s159 = sphi 0, %s159
      %s161 = sphi 0, %s159
      %s162 = sphi 0, %s161
      %s176 = sphi 0, %s162
      %s180 = sphi 0, %s180
      %s182 = sphi 0, %s180
      %s183 = sphi 0, %s182
      %s197 = sphi 0, %s183
      %s201 = sphi 0, %s201
      %s203 = sphi 0, %s201
      %s204 = sphi 0, %s203
      %s218 = sphi 0, %s204
      %s222 = sphi 0, %s222
      %s224 = sphi 0, %s222
      %s225 = sphi 0, %s224
      %s239 = sphi 0, %s225
      %s243 = sphi 0, %s243
      %s245 = sphi 0, %s243
      %s246 = sphi 0, %s245
      %s260 = sphi 0, %s246
      %s266 = sphi 0, %s268
      %s269 = sphi 0, %s266
      %s270 = sphi 0, %s269
      %s286 = sphi 0, %s270
    $region4: #{lenet_apply.1} parent=1 // loop_header_branch
      %23 = sbr.rel (%p21) target = $region8
    $region5: #{lenet_apply.1} parent=1 // loop_body
      %s25 = ssub.s32 %s20, 1
      %s26 = ssub.s32 %s20, 2
      %s27 = sadd.s32 %s20, 1
      %s28 = ssub.s32 %s20, %s27
      %p29 = scmp.eq.s32.totalorder %s28, 0
      %s31 = sadd.s32 %s30, 1
      %s32 = scalar_select %p29, %s30, %s31
      %p35 = pneg %p29
      %p36 = scmp.eq.s32.totalorder %s20, 1
      %p37 = por %p35, %p36
      %p38 = scmp.ne.s32.totalorder %s30, %s33
      %p39 = scmp.eq.s32.totalorder %s20, 0
      %p40 = por %p38, %p39
      %p41 = scmp.ne.s32.totalorder %s30, %s33
      %p42 = scmp.eq.s32.totalorder %s25, 1
      %p43 = por %p41, %p42
      %p44 = scmp.ne.s32.totalorder %s33, %s34
      %p45 = scmp.eq.s32.totalorder %s25, 0
      %p46 = por %p44, %p45
      %p47 = scmp.ne.s32.totalorder %s33, %s34
      %p48 = scmp.eq.s32.totalorder %s26, 1
      %p49 = por %p47, %p48
      %p51 = scmp.ne.s32.totalorder %s34, %s50
      %p52 = scmp.eq.s32.totalorder %s26, 0
      %p53 = por %p51, %p52
      %s55 = sadd.s32 %s54, 1
      %p58 = scmp.eq.s32.totalorder %s20, 1
      %p59 = scmp.ne.s32.totalorder %s54, %s56
      %p60 = scmp.eq.s32.totalorder %s20, 0
      %p61 = por %p59, %p60
      %p62 = scmp.ne.s32.totalorder %s54, %s56
      %p63 = scmp.eq.s32.totalorder %s25, 1
      %p64 = por %p62, %p63
      %p65 = scmp.ne.s32.totalorder %s56, %s57
      %p66 = scmp.eq.s32.totalorder %s25, 0
      %p67 = por %p65, %p66
      %p68 = scmp.ne.s32.totalorder %s56, %s57
      %p69 = scmp.eq.s32.totalorder %s26, 1
      %p70 = por %p68, %p69
      %p72 = scmp.ne.s32.totalorder %s57, %s71
      %p73 = scmp.eq.s32.totalorder %s26, 0
      %p74 = por %p72, %p73
      %s76 = sadd.s32 %s75, 1
      %p79 = scmp.eq.s32.totalorder %s20, 1
      %p80 = scmp.ne.s32.totalorder %s75, %s77
      %p81 = scmp.eq.s32.totalorder %s20, 0
      %p82 = por %p80, %p81
      %p83 = scmp.ne.s32.totalorder %s75, %s77
      %p84 = scmp.eq.s32.totalorder %s25, 1
      %p85 = por %p83, %p84
      %p86 = scmp.ne.s32.totalorder %s77, %s78
      %p87 = scmp.eq.s32.totalorder %s25, 0
      %p88 = por %p86, %p87
      %p89 = scmp.ne.s32.totalorder %s77, %s78
      %p90 = scmp.eq.s32.totalorder %s26, 1
      %p91 = por %p89, %p90
      %p93 = scmp.ne.s32.totalorder %s78, %s92
      %p94 = scmp.eq.s32.totalorder %s26, 0
      %p95 = por %p93, %p94
      %s97 = sadd.s32 %s96, 1
      %p100 = scmp.eq.s32.totalorder %s20, 1
      %p101 = scmp.ne.s32.totalorder %s96, %s98
      %p102 = scmp.eq.s32.totalorder %s20, 0
      %p103 = por %p101, %p102
      %p104 = scmp.ne.s32.totalorder %s96, %s98
      %p105 = scmp.eq.s32.totalorder %s25, 1
      %p106 = por %p104, %p105
      %p107 = scmp.ne.s32.totalorder %s98, %s99
      %p108 = scmp.eq.s32.totalorder %s25, 0
      %p109 = por %p107, %p108
      %p110 = scmp.ne.s32.totalorder %s98, %s99
      %p111 = scmp.eq.s32.totalorder %s26, 1
      %p112 = por %p110, %p111
      %p114 = scmp.ne.s32.totalorder %s99, %s113
      %p115 = scmp.eq.s32.totalorder %s26, 0
      %p116 = por %p114, %p115
      %s118 = sadd.s32 %s117, 1
      %p121 = scmp.eq.s32.totalorder %s20, 1
      %p122 = scmp.ne.s32.totalorder %s117, %s119
      %p123 = scmp.eq.s32.totalorder %s20, 0
      %p124 = por %p122, %p123
      %p125 = scmp.ne.s32.totalorder %s117, %s119
      %p126 = scmp.eq.s32.totalorder %s25, 1
      %p127 = por %p125, %p126
      %p128 = scmp.ne.s32.totalorder %s119, %s120
      %p129 = scmp.eq.s32.totalorder %s25, 0
      %p130 = por %p128, %p129
      %p131 = scmp.ne.s32.totalorder %s119, %s120
      %p132 = scmp.eq.s32.totalorder %s26, 1
      %p133 = por %p131, %p132
      %p135 = scmp.ne.s32.totalorder %s120, %s134
      %p136 = scmp.eq.s32.totalorder %s26, 0
      %p137 = por %p135, %p136
      %s139 = sadd.s32 %s138, 1
      %p142 = scmp.eq.s32.totalorder %s20, 1
      %p143 = scmp.ne.s32.totalorder %s138, %s140
      %p144 = scmp.eq.s32.totalorder %s20, 0
      %p145 = por %p143, %p144
      %p146 = scmp.ne.s32.totalorder %s138, %s140
      %p147 = scmp.eq.s32.totalorder %s25, 1
      %p148 = por %p146, %p147
      %p149 = scmp.ne.s32.totalorder %s140, %s141
      %p150 = scmp.eq.s32.totalorder %s25, 0
      %p151 = por %p149, %p150
      %p152 = scmp.ne.s32.totalorder %s140, %s141
      %p153 = scmp.eq.s32.totalorder %s26, 1
      %p154 = por %p152, %p153
      %p156 = scmp.ne.s32.totalorder %s141, %s155
      %p157 = scmp.eq.s32.totalorder %s26, 0
      %p158 = por %p156, %p157
      %s160 = sadd.s32 %s159, 1
      %p163 = scmp.eq.s32.totalorder %s20, 1
      %p164 = scmp.ne.s32.totalorder %s159, %s161
      %p165 = scmp.eq.s32.totalorder %s20, 0
      %p166 = por %p164, %p165
      %p167 = scmp.ne.s32.totalorder %s159, %s161
      %p168 = scmp.eq.s32.totalorder %s25, 1
      %p169 = por %p167, %p168
      %p170 = scmp.ne.s32.totalorder %s161, %s162
      %p171 = scmp.eq.s32.totalorder %s25, 0
      %p172 = por %p170, %p171
      %p173 = scmp.ne.s32.totalorder %s161, %s162
      %p174 = scmp.eq.s32.totalorder %s26, 1
      %p175 = por %p173, %p174
      %p177 = scmp.ne.s32.totalorder %s162, %s176
      %p178 = scmp.eq.s32.totalorder %s26, 0
      %p179 = por %p177, %p178
      %s181 = sadd.s32 %s180, 1
      %p184 = scmp.eq.s32.totalorder %s20, 1
      %p185 = scmp.ne.s32.totalorder %s180, %s182
      %p186 = scmp.eq.s32.totalorder %s20, 0
      %p187 = por %p185, %p186
      %p188 = scmp.ne.s32.totalorder %s180, %s182
      %p189 = scmp.eq.s32.totalorder %s25, 1
      %p190 = por %p188, %p189
      %p191 = scmp.ne.s32.totalorder %s182, %s183
      %p192 = scmp.eq.s32.totalorder %s25, 0
      %p193 = por %p191, %p192
      %p194 = scmp.ne.s32.totalorder %s182, %s183
      %p195 = scmp.eq.s32.totalorder %s26, 1
      %p196 = por %p194, %p195
      %p198 = scmp.ne.s32.totalorder %s183, %s197
      %p199 = scmp.eq.s32.totalorder %s26, 0
      %p200 = por %p198, %p199
      %s202 = sadd.s32 %s201, 1
      %p205 = scmp.eq.s32.totalorder %s20, 1
      %p206 = scmp.ne.s32.totalorder %s201, %s203
      %p207 = scmp.eq.s32.totalorder %s20, 0
      %p208 = por %p206, %p207
      %p209 = scmp.ne.s32.totalorder %s201, %s203
      %p210 = scmp.eq.s32.totalorder %s25, 1
      %p211 = por %p209, %p210
      %p212 = scmp.ne.s32.totalorder %s203, %s204
      %p213 = scmp.eq.s32.totalorder %s25, 0
      %p214 = por %p212, %p213
      %p215 = scmp.ne.s32.totalorder %s203, %s204
      %p216 = scmp.eq.s32.totalorder %s26, 1
      %p217 = por %p215, %p216
      %p219 = scmp.ne.s32.totalorder %s204, %s218
      %p220 = scmp.eq.s32.totalorder %s26, 0
      %p221 = por %p219, %p220
      %s223 = sadd.s32 %s222, 1
      %p226 = scmp.eq.s32.totalorder %s20, 1
      %p227 = scmp.ne.s32.totalorder %s222, %s224
      %p228 = scmp.eq.s32.totalorder %s20, 0
      %p229 = por %p227, %p228
      %p230 = scmp.ne.s32.totalorder %s222, %s224
      %p231 = scmp.eq.s32.totalorder %s25, 1
      %p232 = por %p230, %p231
      %p233 = scmp.ne.s32.totalorder %s224, %s225
      %p234 = scmp.eq.s32.totalorder %s25, 0
      %p235 = por %p233, %p234
      %p236 = scmp.ne.s32.totalorder %s224, %s225
      %p237 = scmp.eq.s32.totalorder %s26, 1
      %p238 = por %p236, %p237
      %p240 = scmp.ne.s32.totalorder %s225, %s239
      %p241 = scmp.eq.s32.totalorder %s26, 0
      %p242 = por %p240, %p241
      %s244 = sadd.s32 %s243, 1
      %p247 = scmp.eq.s32.totalorder %s20, 1
      %p248 = scmp.ne.s32.totalorder %s243, %s245
      %p249 = scmp.eq.s32.totalorder %s20, 0
      %p250 = por %p248, %p249
      %p251 = scmp.ne.s32.totalorder %s243, %s245
      %p252 = scmp.eq.s32.totalorder %s25, 1
      %p253 = por %p251, %p252
      %p254 = scmp.ne.s32.totalorder %s245, %s246
      %p255 = scmp.eq.s32.totalorder %s25, 0
      %p256 = por %p254, %p255
      %p257 = scmp.ne.s32.totalorder %s245, %s246
      %p258 = scmp.eq.s32.totalorder %s26, 1
      %p259 = por %p257, %p258
      %p261 = scmp.ne.s32.totalorder %s246, %s260
      %p262 = scmp.eq.s32.totalorder %s26, 0
      %p263 = por %p261, %p262
      %s264 = ssub.s32 %s20, %s27
      %p265 = scmp.eq.s32.totalorder %s264, 0
      %s267 = sadd.s32 %s266, 1
      %s268 = scalar_select %p265, %s266, %s267
      %p271 = pneg %p265
      %p272 = scmp.eq.s32.totalorder %s20, 1
      %p273 = por %p271, %p272
      %p274 = scmp.ne.s32.totalorder %s266, %s269
      %p275 = scmp.eq.s32.totalorder %s20, 0
      %p276 = por %p274, %p275
      %p277 = scmp.ne.s32.totalorder %s266, %s269
      %p278 = scmp.eq.s32.totalorder %s25, 1
      %p279 = por %p277, %p278
      %p280 = scmp.ne.s32.totalorder %s269, %s270
      %p281 = scmp.eq.s32.totalorder %s25, 0
      %p282 = por %p280, %p281
      %p283 = scmp.ne.s32.totalorder %s269, %s270
      %p284 = scmp.eq.s32.totalorder %s26, 1
      %p285 = por %p283, %p284
      %p287 = scmp.ne.s32.totalorder %s270, %s286
      %p288 = scmp.eq.s32.totalorder %s26, 0
      %p289 = por %p287, %p288
      %p290 = scmp.le.s32.totalorder 1, %s20
      %p291 = scmp.lt.s32.totalorder %s20, 3
      %p292 = pnand %p290, %p291
      %p293 = pneg %p292
      // Predicated region
      $region9: #{lenet_apply.1} parent=5 // pred_check
        _
      $region10: #{lenet_apply.1} parent=5 // pred_check_branch
        %295 = sbr.rel (%p292) target = $region12
      $region11: #{lenet_apply.1} parent=5 // pred_region
        %s296 = ssub.s32 %s20, 1
        // Predicated region
        $region13: #{lenet_apply.1} parent=11 // pred_check
          %p297 = pneg %p67
        $region14: #{lenet_apply.1} parent=11 // pred_check_branch
          %299 = sbr.rel (%p297) target = $region16
        $region15: #{lenet_apply.1} parent=11 // pred_region
          _
        $region16: #{lenet_apply.1} parent=11 // pred_fallthru
          _
        // Predicated region
        $region17: #{lenet_apply.1} parent=11 // pred_check
          %p300 = pneg %p88
        $region18: #{lenet_apply.1} parent=11 // pred_check_branch
          %302 = sbr.rel (%p300) target = $region20
        $region19: #{lenet_apply.1} parent=11 // pred_region
          _
        $region20: #{lenet_apply.1} parent=11 // pred_fallthru
          _
        // Predicated region
        $region21: #{lenet_apply.1} parent=11 // pred_check
          %p303 = pneg %p109
        $region22: #{lenet_apply.1} parent=11 // pred_check_branch
          %305 = sbr.rel (%p303) target = $region24
        $region23: #{lenet_apply.1} parent=11 // pred_region
          _
        $region24: #{lenet_apply.1} parent=11 // pred_fallthru
          _
        // Predicated region
        $region25: #{lenet_apply.1} parent=11 // pred_check
          %p306 = pneg %p130
        $region26: #{lenet_apply.1} parent=11 // pred_check_branch
          %308 = sbr.rel (%p306) target = $region28
        $region27: #{lenet_apply.1} parent=11 // pred_region
          _
        $region28: #{lenet_apply.1} parent=11 // pred_fallthru
          _
        // Predicated region
        $region29: #{lenet_apply.1} parent=11 // pred_check
          %p309 = pneg %p151
        $region30: #{lenet_apply.1} parent=11 // pred_check_branch
          %311 = sbr.rel (%p309) target = $region32
        $region31: #{lenet_apply.1} parent=11 // pred_region
          _
        $region32: #{lenet_apply.1} parent=11 // pred_fallthru
          _
        // Predicated region
        $region33: #{lenet_apply.1} parent=11 // pred_check
          %p312 = pneg %p172
        $region34: #{lenet_apply.1} parent=11 // pred_check_branch
          %314 = sbr.rel (%p312) target = $region36
        $region35: #{lenet_apply.1} parent=11 // pred_region
          _
        $region36: #{lenet_apply.1} parent=11 // pred_fallthru
          _
        // Predicated region
        $region37: #{lenet_apply.1} parent=11 // pred_check
          %p315 = pneg %p193
        $region38: #{lenet_apply.1} parent=11 // pred_check_branch
          %317 = sbr.rel (%p315) target = $region40
        $region39: #{lenet_apply.1} parent=11 // pred_region
          _
        $region40: #{lenet_apply.1} parent=11 // pred_fallthru
          _
        // Predicated region
        $region41: #{lenet_apply.1} parent=11 // pred_check
          %p318 = pneg %p214
        $region42: #{lenet_apply.1} parent=11 // pred_check_branch
          %320 = sbr.rel (%p318) target = $region44
        $region43: #{lenet_apply.1} parent=11 // pred_region
          _
        $region44: #{lenet_apply.1} parent=11 // pred_fallthru
          _
        // Predicated region
        $region45: #{lenet_apply.1} parent=11 // pred_check
          %p321 = pneg %p235
        $region46: #{lenet_apply.1} parent=11 // pred_check_branch
          %323 = sbr.rel (%p321) target = $region48
        $region47: #{lenet_apply.1} parent=11 // pred_region
          _
        $region48: #{lenet_apply.1} parent=11 // pred_fallthru
          _
        // Predicated region
        $region49: #{lenet_apply.1} parent=11 // pred_check
          %p324 = pneg %p256
        $region50: #{lenet_apply.1} parent=11 // pred_check_branch
          %326 = sbr.rel (%p324) target = $region52
        $region51: #{lenet_apply.1} parent=11 // pred_region
          _
        $region52: #{lenet_apply.1} parent=11 // pred_fallthru
          _
      $region12: #{lenet_apply.1} parent=5 // pred_fallthru
        _
      %p327 = scmp.lt.s32.totalorder %s20, 2
      // Predicated region
      $region53: #{lenet_apply.1} parent=5 // pred_check
        %p328 = pneg %p327
      $region54: #{lenet_apply.1} parent=5 // pred_check_branch
        %330 = sbr.rel (%p328) target = $region56
      $region55: #{lenet_apply.1} parent=5 // pred_region
        // Predicated region
        $region57: #{lenet_apply.1} parent=55 // pred_check
          %p331 = pneg %p40
        $region58: #{lenet_apply.1} parent=55 // pred_check_branch
          %333 = sbr.rel (%p331) target = $region60
        $region59: #{lenet_apply.1} parent=55 // pred_region
          %p334 = scmp.lt.s32.totalorder %s20, 1
          %s335 = scalar_select %p334, %s20, 1
          %s336 = smul.addr %s335, 4
          %s337 = smul.addr %s336, 8
          %s338 = scalar_lea.vmem %s0, %s337
        $region60: #{lenet_apply.1} parent=55 // pred_fallthru
          _
      $region56: #{lenet_apply.1} parent=5 // pred_fallthru
        _
      %p339 = scmp.le.s32.totalorder 1, %s20
      %p340 = scmp.lt.s32.totalorder %s20, 3
      %p341 = pnand %p339, %p340
      %p342 = pneg %p341
      // Predicated region
      $region61: #{lenet_apply.1} parent=5 // pred_check
        _
      $region62: #{lenet_apply.1} parent=5 // pred_check_branch
        %344 = sbr.rel (%p341) target = $region64
      $region63: #{lenet_apply.1} parent=5 // pred_region
        %s345 = ssub.s32 %s20, 1
        %p346 = scmp.lt.s32.totalorder %s25, 1
        %s347 = scalar_select %p346, %s25, 1
        %s348 = smul.addr %s347, 4
        %s349 = smul.addr %s348, 8
        %s350 = scalar_lea.vmem %s0, %s349
        %p351 = pneg %p46
        %p352 = pneg %p43
        %p353 = pneg %p67
        %p354 = pneg %p64
        %p355 = pneg %p88
        %p356 = pneg %p85
        %p357 = pneg %p109
        %p358 = pneg %p106
        %p359 = pneg %p130
        %p360 = pneg %p127
        %p361 = pneg %p151
        %p362 = pneg %p148
        %p363 = pneg %p172
        %p364 = pneg %p169
        %p365 = pneg %p193
        %p366 = pneg %p190
        %p367 = pneg %p214
        %p368 = pneg %p211
        %p369 = pneg %p235
        %p370 = pneg %p232
        %p371 = pneg %p256
        %p372 = pneg %p253
        %p373 = pneg %p282
        %p374 = pneg %p279
        %s375 = sand.u32 %s269, 1
        %s376 = scalar_lea.sflag [#allocation5], %s375
        %s377 = sand.u32 %s269, 1
        %s378 = scalar_lea.vmem [#allocation4], %s377
        %p379 = scmp.lt.s32.totalorder %s25, 1
        %s380 = scalar_select %p379, %s25, 1
        %s381 = smul.addr %s380, 4
        %s382 = smul.addr %s381, 8
        %s383 = scalar_lea.vmem %s0, %s382
        %v384 = vld [vmem:[%s2] sm:$0x1]
        %v385 = vld [vmem:[%s383] sm:$0x7f]
        %v386 = vld [vmem:[%s1] sm:$0xff]
        %v387 = vld [vmem:[%s1 + $0x8] sm:$0xff]
        %v388 = vld [vmem:[%s1 + $0x10] sm:$0xff]
        %v389 = vld [vmem:[%s1 + $0x18] sm:$0xff]
        %s390 = scalar_lea.vmem %s1, 160
        %v391 = vld [vmem:[%s390] sm:$0xff]
        %v392 = vld [vmem:[%s390 + $0x8] sm:$0xff]
        %v393 = vld [vmem:[%s390 + $0x10] sm:$0xff]
        %v394 = vld [vmem:[%s390 + $0x18] sm:$0xff]
        %s395 = scalar_lea.vmem %s383, 8
        %v396 = vld [vmem:[%s395] sm:$0x7f]
        %s397 = scalar_lea.vmem %s1, 32
        %v398 = vld [vmem:[%s397] sm:$0xff]
        %v399 = vld [vmem:[%s397 + $0x8] sm:$0xff]
        %v400 = vld [vmem:[%s397 + $0x10] sm:$0xff]
        %v401 = vld [vmem:[%s397 + $0x18] sm:$0xff]
        %vm402 = vcmask 261120
        %v404 = vsel %vm402, %v396, 0
        %406 = vmatpush.msra.mxu0 0.0
        %407 = vmatpush.msra.mxu0 0.0
        %408 = vmatpush.msra.mxu0 0.0
        %409 = vmatpush.msra.mxu0 0.0
        %410 = vmatpush.msra.mxu0 0.0
        %411 = vmatpush.msra.mxu0 0.0
        %412 = vmatpush.msra.mxu0 0.0
        %413 = vmatpush.msra.mxu0 0.0
        %414 = vmatpush.msra.mxu0 0.0
        %415 = vmatpush.msra.mxu0 0.0
        %416 = vmatpush.msra.mxu0 0.0
        %417 = vmatpush.msra.mxu0 0.0
        %418 = vmatpush.msra.mxu0 %v401
        %419 = vmatpush.msra.mxu0 %v400
        %420 = vmatpush.msra.mxu0 %v399
        %421 = vmatpush.msra.mxu0 %v398
        %422 = vmatmul.f32.gmra.mxu0 %v404
        %v423 = vpop.f32.mrf.mxu0
        %v424 = vadd.f32 0.0, %v423
        %425 = vdwg.mxu0
        %v427 = vsel %vm402, %v385, 0
        %429 = vmatpush.msra.mxu0 0.0
        %430 = vmatpush.msra.mxu0 0.0
        %431 = vmatpush.msra.mxu0 0.0
        %432 = vmatpush.msra.mxu0 0.0
        %433 = vmatpush.msra.mxu0 0.0
        %434 = vmatpush.msra.mxu0 0.0
        %435 = vmatpush.msra.mxu0 0.0
        %436 = vmatpush.msra.mxu0 0.0
        %437 = vmatpush.msra.mxu0 0.0
        %438 = vmatpush.msra.mxu0 0.0
        %439 = vmatpush.msra.mxu0 0.0
        %440 = vmatpush.msra.mxu0 0.0
        %441 = vmatpush.msra.mxu0 %v389
        %442 = vmatpush.msra.mxu0 %v388
        %443 = vmatpush.msra.mxu0 %v387
        %444 = vmatpush.msra.mxu0 %v386
        %445 = vmatmul.f32.gmra.mxu0 %v427
        %v446 = vpop.f32.mrf.mxu0
        %v447 = vadd.f32 %v424, %v446
        %448 = vdwg.mxu0
        %s449 = scalar_lea.vmem %s1, 192
        %v450 = vld [vmem:[%s449] sm:$0xff]
        %v451 = vld [vmem:[%s449 + $0x8] sm:$0xff]
        %v452 = vld [vmem:[%s449 + $0x10] sm:$0xff]
        %v453 = vld [vmem:[%s449 + $0x18] sm:$0xff]
        %454 = vmatpush.msra.mxu0 0.0
        %455 = vmatpush.msra.mxu0 0.0
        %456 = vmatpush.msra.mxu0 0.0
        %457 = vmatpush.msra.mxu0 0.0
        %458 = vmatpush.msra.mxu0 0.0
        %459 = vmatpush.msra.mxu0 0.0
        %460 = vmatpush.msra.mxu0 0.0
        %461 = vmatpush.msra.mxu0 0.0
        %462 = vmatpush.msra.mxu0 0.0
        %463 = vmatpush.msra.mxu0 0.0
        %464 = vmatpush.msra.mxu0 0.0
        %465 = vmatpush.msra.mxu0 0.0
        %466 = vmatpush.msra.mxu0 %v453
        %467 = vmatpush.msra.mxu0 %v452
        %468 = vmatpush.msra.mxu0 %v451
        %469 = vmatpush.msra.mxu0 %v450
        %470 = vmatmul.f32.gmra.mxu0 %v404
        %v471 = vpop.f32.mrf.mxu0
        %v472 = vadd.f32 0.0, %v471
        %473 = vdwg.mxu0
        %474 = vmatpush.msra.mxu0 0.0
        %475 = vmatpush.msra.mxu0 0.0
        %476 = vmatpush.msra.mxu0 0.0
        %477 = vmatpush.msra.mxu0 0.0
        %478 = vmatpush.msra.mxu0 0.0
        %479 = vmatpush.msra.mxu0 0.0
        %480 = vmatpush.msra.mxu0 0.0
        %481 = vmatpush.msra.mxu0 0.0
        %482 = vmatpush.msra.mxu0 0.0
        %483 = vmatpush.msra.mxu0 0.0
        %484 = vmatpush.msra.mxu0 0.0
        %485 = vmatpush.msra.mxu0 0.0
        %486 = vmatpush.msra.mxu0 %v394
        %487 = vmatpush.msra.mxu0 %v393
        %488 = vmatpush.msra.mxu0 %v392
        %489 = vmatpush.msra.mxu0 %v391
        %490 = vmatmul.f32.gmra.mxu0 %v427
        %v491 = vpop.f32.mrf.mxu0
        %v492 = vadd.f32 %v472, %v491
        %493 = vdwg.mxu0
        %s494 = scalar_lea.vmem %s383, 16
        %v495 = vld [vmem:[%s494] sm:$0x7f]
        %s496 = scalar_lea.vmem %s1, 64
        %v497 = vld [vmem:[%s496] sm:$0xff]
        %v498 = vld [vmem:[%s496 + $0x8] sm:$0xff]
        %v499 = vld [vmem:[%s496 + $0x10] sm:$0xff]
        %v500 = vld [vmem:[%s496 + $0x18] sm:$0xff]
        %v502 = vsel %vm402, %v495, 0
        %504 = vmatpush.msra.mxu0 0.0
        %505 = vmatpush.msra.mxu0 0.0
        %506 = vmatpush.msra.mxu0 0.0
        %507 = vmatpush.msra.mxu0 0.0
        %508 = vmatpush.msra.mxu0 0.0
        %509 = vmatpush.msra.mxu0 0.0
        %510 = vmatpush.msra.mxu0 0.0
        %511 = vmatpush.msra.mxu0 0.0
        %512 = vmatpush.msra.mxu0 0.0
        %513 = vmatpush.msra.mxu0 0.0
        %514 = vmatpush.msra.mxu0 0.0
        %515 = vmatpush.msra.mxu0 0.0
        %516 = vmatpush.msra.mxu0 %v500
        %517 = vmatpush.msra.mxu0 %v499
        %518 = vmatpush.msra.mxu0 %v498
        %519 = vmatpush.msra.mxu0 %v497
        %520 = vmatmul.f32.gmra.mxu0 %v502
        %v521 = vpop.f32.mrf.mxu0
        %v522 = vadd.f32 0.0, %v521
        %523 = vdwg.mxu0
        %v524 = vadd.f32 %v447, %v522
        %s525 = scalar_lea.vmem %s1, 224
        %v526 = vld [vmem:[%s525] sm:$0xff]
        %v527 = vld [vmem:[%s525 + $0x8] sm:$0xff]
        %v528 = vld [vmem:[%s525 + $0x10] sm:$0xff]
        %v529 = vld [vmem:[%s525 + $0x18] sm:$0xff]
        %530 = vmatpush.msra.mxu0 0.0
        %531 = vmatpush.msra.mxu0 0.0
        %532 = vmatpush.msra.mxu0 0.0
        %533 = vmatpush.msra.mxu0 0.0
        %534 = vmatpush.msra.mxu0 0.0
        %535 = vmatpush.msra.mxu0 0.0
        %536 = vmatpush.msra.mxu0 0.0
        %537 = vmatpush.msra.mxu0 0.0
        %538 = vmatpush.msra.mxu0 0.0
        %539 = vmatpush.msra.mxu0 0.0
        %540 = vmatpush.msra.mxu0 0.0
        %541 = vmatpush.msra.mxu0 0.0
        %542 = vmatpush.msra.mxu0 %v529
        %543 = vmatpush.msra.mxu0 %v528
        %544 = vmatpush.msra.mxu0 %v527
        %545 = vmatpush.msra.mxu0 %v526
        %546 = vmatmul.f32.gmra.mxu0 %v502
        %v547 = vpop.f32.mrf.mxu0
        %v548 = vadd.f32 0.0, %v547
        %549 = vdwg.mxu0
        %v550 = vadd.f32 %v492, %v548
        %s551 = scalar_lea.vmem %s383, 24
        %v552 = vld [vmem:[%s551] sm:$0x7f]
        %s553 = scalar_lea.vmem %s1, 96
        %v554 = vld [vmem:[%s553] sm:$0xff]
        %v555 = vld [vmem:[%s553 + $0x8] sm:$0xff]
        %v556 = vld [vmem:[%s553 + $0x10] sm:$0xff]
        %v557 = vld [vmem:[%s553 + $0x18] sm:$0xff]
        %v559 = vsel %vm402, %v552, 0
        %561 = vmatpush.msra.mxu0 0.0
        %562 = vmatpush.msra.mxu0 0.0
        %563 = vmatpush.msra.mxu0 0.0
        %564 = vmatpush.msra.mxu0 0.0
        %565 = vmatpush.msra.mxu0 0.0
        %566 = vmatpush.msra.mxu0 0.0
        %567 = vmatpush.msra.mxu0 0.0
        %568 = vmatpush.msra.mxu0 0.0
        %569 = vmatpush.msra.mxu0 0.0
        %570 = vmatpush.msra.mxu0 0.0
        %571 = vmatpush.msra.mxu0 0.0
        %572 = vmatpush.msra.mxu0 0.0
        %573 = vmatpush.msra.mxu0 %v557
        %574 = vmatpush.msra.mxu0 %v556
        %575 = vmatpush.msra.mxu0 %v555
        %576 = vmatpush.msra.mxu0 %v554
        %577 = vmatmul.f32.gmra.mxu0 %v559
        %v578 = vpop.f32.mrf.mxu0
        %v579 = vadd.f32 0.0, %v578
        %580 = vdwg.mxu0
        %v581 = vadd.f32 %v524, %v579
        %s582 = scalar_lea.vmem %s1, 256
        %v583 = vld [vmem:[%s582] sm:$0xff]
        %v584 = vld [vmem:[%s582 + $0x8] sm:$0xff]
        %v585 = vld [vmem:[%s582 + $0x10] sm:$0xff]
        %v586 = vld [vmem:[%s582 + $0x18] sm:$0xff]
        %587 = vmatpush.msra.mxu0 0.0
        %588 = vmatpush.msra.mxu0 0.0
        %589 = vmatpush.msra.mxu0 0.0
        %590 = vmatpush.msra.mxu0 0.0
        %591 = vmatpush.msra.mxu0 0.0
        %592 = vmatpush.msra.mxu0 0.0
        %593 = vmatpush.msra.mxu0 0.0
        %594 = vmatpush.msra.mxu0 0.0
        %595 = vmatpush.msra.mxu0 0.0
        %596 = vmatpush.msra.mxu0 0.0
        %597 = vmatpush.msra.mxu0 0.0
        %598 = vmatpush.msra.mxu0 0.0
        %599 = vmatpush.msra.mxu0 %v586
        %600 = vmatpush.msra.mxu0 %v585
        %601 = vmatpush.msra.mxu0 %v584
        %602 = vmatpush.msra.mxu0 %v583
        %603 = vmatmul.f32.gmra.mxu0 %v559
        %v604 = vpop.f32.mrf.mxu0
        %v605 = vadd.f32 0.0, %v604
        %606 = vdwg.mxu0
        %v607 = vadd.f32 %v550, %v605
        %v608 = vld [vmem:[%s383 + $0x1] sm:$0x7f]
        %s609 = scalar_lea.vmem %s1, 128
        %v610 = vld [vmem:[%s609] sm:$0xff]
        %v611 = vld [vmem:[%s609 + $0x8] sm:$0xff]
        %v612 = vld [vmem:[%s609 + $0x10] sm:$0xff]
        %v613 = vld [vmem:[%s609 + $0x18] sm:$0xff]
        %v615 = vsel %vm402, %v608, 0
        %617 = vmatpush.msra.mxu0 0.0
        %618 = vmatpush.msra.mxu0 0.0
        %619 = vmatpush.msra.mxu0 0.0
        %620 = vmatpush.msra.mxu0 0.0
        %621 = vmatpush.msra.mxu0 0.0
        %622 = vmatpush.msra.mxu0 0.0
        %623 = vmatpush.msra.mxu0 0.0
        %624 = vmatpush.msra.mxu0 0.0
        %625 = vmatpush.msra.mxu0 0.0
        %626 = vmatpush.msra.mxu0 0.0
        %627 = vmatpush.msra.mxu0 0.0
        %628 = vmatpush.msra.mxu0 0.0
        %629 = vmatpush.msra.mxu0 %v613
        %630 = vmatpush.msra.mxu0 %v612
        %631 = vmatpush.msra.mxu0 %v611
        %632 = vmatpush.msra.mxu0 %v610
        %633 = vmatmul.f32.gmra.mxu0 %v615
        %v634 = vpop.f32.mrf.mxu0
        %v635 = vadd.f32 0.0, %v634
        %636 = vdwg.mxu0
        %v637 = vadd.f32 %v581, %v635
        %s638 = scalar_lea.vmem %s1, 288
        %v639 = vld [vmem:[%s638] sm:$0xff]
        %v640 = vld [vmem:[%s638 + $0x8] sm:$0xff]
        %v641 = vld [vmem:[%s638 + $0x10] sm:$0xff]
        %v642 = vld [vmem:[%s638 + $0x18] sm:$0xff]
        %643 = vmatpush.msra.mxu0 0.0
        %644 = vmatpush.msra.mxu0 0.0
        %645 = vmatpush.msra.mxu0 0.0
        %646 = vmatpush.msra.mxu0 0.0
        %647 = vmatpush.msra.mxu0 0.0
        %648 = vmatpush.msra.mxu0 0.0
        %649 = vmatpush.msra.mxu0 0.0
        %650 = vmatpush.msra.mxu0 0.0
        %651 = vmatpush.msra.mxu0 0.0
        %652 = vmatpush.msra.mxu0 0.0
        %653 = vmatpush.msra.mxu0 0.0
        %654 = vmatpush.msra.mxu0 0.0
        %655 = vmatpush.msra.mxu0 %v642
        %656 = vmatpush.msra.mxu0 %v641
        %657 = vmatpush.msra.mxu0 %v640
        %658 = vmatpush.msra.mxu0 %v639
        %659 = vmatmul.f32.gmra.mxu0 %v615
        %v660 = vpop.f32.mrf.mxu0
        %v661 = vadd.f32 0.0, %v660
        %662 = vdwg.mxu0
        %v663 = vadd.f32 %v607, %v661
        %v665 = vperm.slane %v384, 0
        %v667 = vadd.f32 %v637, %v665
        %v668 = vmax.f32 %v667, 0.0
        %v669 = vadd.f32 %v663, %v665
        %v670 = vmax.f32 %v669, 0.0
        %v671 = vmax.f32 %v668, %v670
        %672 = vmatpush.msra.mxu0 0.0
        %673 = vmatpush.msra.mxu0 0.0
        %674 = vmatpush.msra.mxu0 0.0
        %675 = vmatpush.msra.mxu0 0.0
        %676 = vmatpush.msra.mxu0 0.0
        %677 = vmatpush.msra.mxu0 0.0
        %678 = vmatpush.msra.mxu0 0.0
        %679 = vmatpush.msra.mxu0 0.0
        %680 = vmatpush.msra.mxu0 0.0
        %681 = vmatpush.msra.mxu0 0.0
        %682 = vmatpush.msra.mxu0 0.0
        %683 = vmatpush.msra.mxu0 0.0
        %684 = vmatpush.msra.mxu0 %v401
        %685 = vmatpush.msra.mxu0 %v400
        %686 = vmatpush.msra.mxu0 %v399
        %687 = vmatpush.msra.mxu0 %v398
        %688 = vmatmul.f32.gmra.mxu0 %v502
        %v689 = vpop.f32.mrf.mxu0
        %v690 = vadd.f32 0.0, %v689
        %691 = vdwg.mxu0
        %692 = vmatpush.msra.mxu0 0.0
        %693 = vmatpush.msra.mxu0 0.0
        %694 = vmatpush.msra.mxu0 0.0
        %695 = vmatpush.msra.mxu0 0.0
        %696 = vmatpush.msra.mxu0 0.0
        %697 = vmatpush.msra.mxu0 0.0
        %698 = vmatpush.msra.mxu0 0.0
        %699 = vmatpush.msra.mxu0 0.0
        %700 = vmatpush.msra.mxu0 0.0
        %701 = vmatpush.msra.mxu0 0.0
        %702 = vmatpush.msra.mxu0 0.0
        %703 = vmatpush.msra.mxu0 0.0
        %704 = vmatpush.msra.mxu0 %v389
        %705 = vmatpush.msra.mxu0 %v388
        %706 = vmatpush.msra.mxu0 %v387
        %707 = vmatpush.msra.mxu0 %v386
        %708 = vmatmul.f32.gmra.mxu0 %v404
        %v709 = vpop.f32.mrf.mxu0
        %v710 = vadd.f32 %v690, %v709
        %711 = vdwg.mxu0
        %712 = vmatpush.msra.mxu0 0.0
        %713 = vmatpush.msra.mxu0 0.0
        %714 = vmatpush.msra.mxu0 0.0
        %715 = vmatpush.msra.mxu0 0.0
        %716 = vmatpush.msra.mxu0 0.0
        %717 = vmatpush.msra.mxu0 0.0
        %718 = vmatpush.msra.mxu0 0.0
        %719 = vmatpush.msra.mxu0 0.0
        %720 = vmatpush.msra.mxu0 0.0
        %721 = vmatpush.msra.mxu0 0.0
        %722 = vmatpush.msra.mxu0 0.0
        %723 = vmatpush.msra.mxu0 0.0
        %724 = vmatpush.msra.mxu0 %v453
        %725 = vmatpush.msra.mxu0 %v452
        %726 = vmatpush.msra.mxu0 %v451
        %727 = vmatpush.msra.mxu0 %v450
        %728 = vmatmul.f32.gmra.mxu0 %v502
        %v729 = vpop.f32.mrf.mxu0
        %v730 = vadd.f32 0.0, %v729
        %731 = vdwg.mxu0
        %732 = vmatpush.msra.mxu0 0.0
        %733 = vmatpush.msra.mxu0 0.0
        %734 = vmatpush.msra.mxu0 0.0
        %735 = vmatpush.msra.mxu0 0.0
        %736 = vmatpush.msra.mxu0 0.0
        %737 = vmatpush.msra.mxu0 0.0
        %738 = vmatpush.msra.mxu0 0.0
        %739 = vmatpush.msra.mxu0 0.0
        %740 = vmatpush.msra.mxu0 0.0
        %741 = vmatpush.msra.mxu0 0.0
        %742 = vmatpush.msra.mxu0 0.0
        %743 = vmatpush.msra.mxu0 0.0
        %744 = vmatpush.msra.mxu0 %v394
        %745 = vmatpush.msra.mxu0 %v393
        %746 = vmatpush.msra.mxu0 %v392
        %747 = vmatpush.msra.mxu0 %v391
        %748 = vmatmul.f32.gmra.mxu0 %v404
        %v749 = vpop.f32.mrf.mxu0
        %v750 = vadd.f32 %v730, %v749
        %751 = vdwg.mxu0
        %752 = vmatpush.msra.mxu0 0.0
        %753 = vmatpush.msra.mxu0 0.0
        %754 = vmatpush.msra.mxu0 0.0
        %755 = vmatpush.msra.mxu0 0.0
        %756 = vmatpush.msra.mxu0 0.0
        %757 = vmatpush.msra.mxu0 0.0
        %758 = vmatpush.msra.mxu0 0.0
        %759 = vmatpush.msra.mxu0 0.0
        %760 = vmatpush.msra.mxu0 0.0
        %761 = vmatpush.msra.mxu0 0.0
        %762 = vmatpush.msra.mxu0 0.0
        %763 = vmatpush.msra.mxu0 0.0
        %764 = vmatpush.msra.mxu0 %v500
        %765 = vmatpush.msra.mxu0 %v499
        %766 = vmatpush.msra.mxu0 %v498
        %767 = vmatpush.msra.mxu0 %v497
        %768 = vmatmul.f32.gmra.mxu0 %v559
        %v769 = vpop.f32.mrf.mxu0
        %v770 = vadd.f32 0.0, %v769
        %771 = vdwg.mxu0
        %v772 = vadd.f32 %v710, %v770
        %773 = vmatpush.msra.mxu0 0.0
        %774 = vmatpush.msra.mxu0 0.0
        %775 = vmatpush.msra.mxu0 0.0
        %776 = vmatpush.msra.mxu0 0.0
        %777 = vmatpush.msra.mxu0 0.0
        %778 = vmatpush.msra.mxu0 0.0
        %779 = vmatpush.msra.mxu0 0.0
        %780 = vmatpush.msra.mxu0 0.0
        %781 = vmatpush.msra.mxu0 0.0
        %782 = vmatpush.msra.mxu0 0.0
        %783 = vmatpush.msra.mxu0 0.0
        %784 = vmatpush.msra.mxu0 0.0
        %785 = vmatpush.msra.mxu0 %v529
        %786 = vmatpush.msra.mxu0 %v528
        %787 = vmatpush.msra.mxu0 %v527
        %788 = vmatpush.msra.mxu0 %v526
        %789 = vmatmul.f32.gmra.mxu0 %v559
        %v790 = vpop.f32.mrf.mxu0
        %v791 = vadd.f32 0.0, %v790
        %792 = vdwg.mxu0
        %v793 = vadd.f32 %v750, %v791
        %794 = vmatpush.msra.mxu0 0.0
        %795 = vmatpush.msra.mxu0 0.0
        %796 = vmatpush.msra.mxu0 0.0
        %797 = vmatpush.msra.mxu0 0.0
        %798 = vmatpush.msra.mxu0 0.0
        %799 = vmatpush.msra.mxu0 0.0
        %800 = vmatpush.msra.mxu0 0.0
        %801 = vmatpush.msra.mxu0 0.0
        %802 = vmatpush.msra.mxu0 0.0
        %803 = vmatpush.msra.mxu0 0.0
        %804 = vmatpush.msra.mxu0 0.0
        %805 = vmatpush.msra.mxu0 0.0
        %806 = vmatpush.msra.mxu0 %v557
        %807 = vmatpush.msra.mxu0 %v556
        %808 = vmatpush.msra.mxu0 %v555
        %809 = vmatpush.msra.mxu0 %v554
        %810 = vmatmul.f32.gmra.mxu0 %v615
        %v811 = vpop.f32.mrf.mxu0
        %v812 = vadd.f32 0.0, %v811
        %813 = vdwg.mxu0
        %v814 = vadd.f32 %v772, %v812
        %815 = vmatpush.msra.mxu0 0.0
        %816 = vmatpush.msra.mxu0 0.0
        %817 = vmatpush.msra.mxu0 0.0
        %818 = vmatpush.msra.mxu0 0.0
        %819 = vmatpush.msra.mxu0 0.0
        %820 = vmatpush.msra.mxu0 0.0
        %821 = vmatpush.msra.mxu0 0.0
        %822 = vmatpush.msra.mxu0 0.0
        %823 = vmatpush.msra.mxu0 0.0
        %824 = vmatpush.msra.mxu0 0.0
        %825 = vmatpush.msra.mxu0 0.0
        %826 = vmatpush.msra.mxu0 0.0
        %827 = vmatpush.msra.mxu0 %v586
        %828 = vmatpush.msra.mxu0 %v585
        %829 = vmatpush.msra.mxu0 %v584
        %830 = vmatpush.msra.mxu0 %v583
        %831 = vmatmul.f32.gmra.mxu0 %v615
        %v832 = vpop.f32.mrf.mxu0
        %v833 = vadd.f32 0.0, %v832
        %834 = vdwg.mxu0
        %v835 = vadd.f32 %v793, %v833
        %v836 = vld [vmem:[%s395 + $0x1] sm:$0x7f]
        %v838 = vsel %vm402, %v836, 0
        %840 = vmatpush.msra.mxu0 0.0
        %841 = vmatpush.msra.mxu0 0.0
        %842 = vmatpush.msra.mxu0 0.0
        %843 = vmatpush.msra.mxu0 0.0
        %844 = vmatpush.msra.mxu0 0.0
        %845 = vmatpush.msra.mxu0 0.0
        %846 = vmatpush.msra.mxu0 0.0
        %847 = vmatpush.msra.mxu0 0.0
        %848 = vmatpush.msra.mxu0 0.0
        %849 = vmatpush.msra.mxu0 0.0
        %850 = vmatpush.msra.mxu0 0.0
        %851 = vmatpush.msra.mxu0 0.0
        %852 = vmatpush.msra.mxu0 %v613
        %853 = vmatpush.msra.mxu0 %v612
        %854 = vmatpush.msra.mxu0 %v611
        %855 = vmatpush.msra.mxu0 %v610
        %856 = vmatmul.f32.gmra.mxu0 %v838
        %v857 = vpop.f32.mrf.mxu0
        %v858 = vadd.f32 0.0, %v857
        %859 = vdwg.mxu0
        %v860 = vadd.f32 %v814, %v858
        %861 = vmatpush.msra.mxu0 0.0
        %862 = vmatpush.msra.mxu0 0.0
        %863 = vmatpush.msra.mxu0 0.0
        %864 = vmatpush.msra.mxu0 0.0
        %865 = vmatpush.msra.mxu0 0.0
        %866 = vmatpush.msra.mxu0 0.0
        %867 = vmatpush.msra.mxu0 0.0
        %868 = vmatpush.msra.mxu0 0.0
        %869 = vmatpush.msra.mxu0 0.0
        %870 = vmatpush.msra.mxu0 0.0
        %871 = vmatpush.msra.mxu0 0.0
        %872 = vmatpush.msra.mxu0 0.0
        %873 = vmatpush.msra.mxu0 %v642
        %874 = vmatpush.msra.mxu0 %v641
        %875 = vmatpush.msra.mxu0 %v640
        %876 = vmatpush.msra.mxu0 %v639
        %877 = vmatmul.f32.gmra.mxu0 %v838
        %v878 = vpop.f32.mrf.mxu0
        %v879 = vadd.f32 0.0, %v878
        %880 = vdwg.mxu0
        %v881 = vadd.f32 %v835, %v879
        %v882 = vadd.f32 %v860, %v665
        %v883 = vmax.f32 %v882, 0.0
        %v884 = vmax.f32 %v671, %v883
        %v885 = vadd.f32 %v881, %v665
        %v886 = vmax.f32 %v885, 0.0
        %v887 = vmax.f32 %v884, %v886
        %vm888 = vcmask 686080
        %889 = vst.msk [vmem:[#allocation2] sm:$0x7f] %vm888, %v887
        %v890 = vld [vmem:[%s494] sm:$0x7f]
        %v891 = vld [vmem:[%s1] sm:$0xff]
        %v892 = vld [vmem:[%s1 + $0x8] sm:$0xff]
        %v893 = vld [vmem:[%s1 + $0x10] sm:$0xff]
        %v894 = vld [vmem:[%s1 + $0x18] sm:$0xff]
        %v895 = vld [vmem:[%s390] sm:$0xff]
        %v896 = vld [vmem:[%s390 + $0x8] sm:$0xff]
        %v897 = vld [vmem:[%s390 + $0x10] sm:$0xff]
        %v898 = vld [vmem:[%s390 + $0x18] sm:$0xff]
        %v899 = vld [vmem:[%s551] sm:$0x7f]
        %v900 = vld [vmem:[%s397] sm:$0xff]
        %v901 = vld [vmem:[%s397 + $0x8] sm:$0xff]
        %v902 = vld [vmem:[%s397 + $0x10] sm:$0xff]
        %v903 = vld [vmem:[%s397 + $0x18] sm:$0xff]
        %v905 = vsel %vm402, %v899, 0
        %907 = vmatpush.msra.mxu0 0.0
        %908 = vmatpush.msra.mxu0 0.0
        %909 = vmatpush.msra.mxu0 0.0
        %910 = vmatpush.msra.mxu0 0.0
        %911 = vmatpush.msra.mxu0 0.0
        %912 = vmatpush.msra.mxu0 0.0
        %913 = vmatpush.msra.mxu0 0.0
        %914 = vmatpush.msra.mxu0 0.0
        %915 = vmatpush.msra.mxu0 0.0
        %916 = vmatpush.msra.mxu0 0.0
        %917 = vmatpush.msra.mxu0 0.0
        %918 = vmatpush.msra.mxu0 0.0
        %919 = vmatpush.msra.mxu0 %v903
        %920 = vmatpush.msra.mxu0 %v902
        %921 = vmatpush.msra.mxu0 %v901
        %922 = vmatpush.msra.mxu0 %v900
        %923 = vmatmul.f32.gmra.mxu0 %v905
        %v924 = vpop.f32.mrf.mxu0
        %v925 = vadd.f32 0.0, %v924
        %926 = vdwg.mxu0
        %v928 = vsel %vm402, %v890, 0
        %930 = vmatpush.msra.mxu0 0.0
        %931 = vmatpush.msra.mxu0 0.0
        %932 = vmatpush.msra.mxu0 0.0
        %933 = vmatpush.msra.mxu0 0.0
        %934 = vmatpush.msra.mxu0 0.0
        %935 = vmatpush.msra.mxu0 0.0
        %936 = vmatpush.msra.mxu0 0.0
        %937 = vmatpush.msra.mxu0 0.0
        %938 = vmatpush.msra.mxu0 0.0
        %939 = vmatpush.msra.mxu0 0.0
        %940 = vmatpush.msra.mxu0 0.0
        %941 = vmatpush.msra.mxu0 0.0
        %942 = vmatpush.msra.mxu0 %v894
        %943 = vmatpush.msra.mxu0 %v893
        %944 = vmatpush.msra.mxu0 %v892
        %945 = vmatpush.msra.mxu0 %v891
        %946 = vmatmul.f32.gmra.mxu0 %v928
        %v947 = vpop.f32.mrf.mxu0
        %v948 = vadd.f32 %v925, %v947
        %949 = vdwg.mxu0
        %v950 = vld [vmem:[%s449] sm:$0xff]
        %v951 = vld [vmem:[%s449 + $0x8] sm:$0xff]
        %v952 = vld [vmem:[%s449 + $0x10] sm:$0xff]
        %v953 = vld [vmem:[%s449 + $0x18] sm:$0xff]
        %954 = vmatpush.msra.mxu0 0.0
        %955 = vmatpush.msra.mxu0 0.0
        %956 = vmatpush.msra.mxu0 0.0
        %957 = vmatpush.msra.mxu0 0.0
        %958 = vmatpush.msra.mxu0 0.0
        %959 = vmatpush.msra.mxu0 0.0
        %960 = vmatpush.msra.mxu0 0.0
        %961 = vmatpush.msra.mxu0 0.0
        %962 = vmatpush.msra.mxu0 0.0
        %963 = vmatpush.msra.mxu0 0.0
        %964 = vmatpush.msra.mxu0 0.0
        %965 = vmatpush.msra.mxu0 0.0
        %966 = vmatpush.msra.mxu0 %v953
        %967 = vmatpush.msra.mxu0 %v952
        %968 = vmatpush.msra.mxu0 %v951
        %969 = vmatpush.msra.mxu0 %v950
        %970 = vmatmul.f32.gmra.mxu0 %v905
        %v971 = vpop.f32.mrf.mxu0
        %v972 = vadd.f32 0.0, %v971
        %973 = vdwg.mxu0
        %974 = vmatpush.msra.mxu0 0.0
        %975 = vmatpush.msra.mxu0 0.0
        %976 = vmatpush.msra.mxu0 0.0
        %977 = vmatpush.msra.mxu0 0.0
        %978 = vmatpush.msra.mxu0 0.0
        %979 = vmatpush.msra.mxu0 0.0
        %980 = vmatpush.msra.mxu0 0.0
        %981 = vmatpush.msra.mxu0 0.0
        %982 = vmatpush.msra.mxu0 0.0
        %983 = vmatpush.msra.mxu0 0.0
        %984 = vmatpush.msra.mxu0 0.0
        %985 = vmatpush.msra.mxu0 0.0
        %986 = vmatpush.msra.mxu0 %v898
        %987 = vmatpush.msra.mxu0 %v897
        %988 = vmatpush.msra.mxu0 %v896
        %989 = vmatpush.msra.mxu0 %v895
        %990 = vmatmul.f32.gmra.mxu0 %v928
        %v991 = vpop.f32.mrf.mxu0
        %v992 = vadd.f32 %v972, %v991
        %993 = vdwg.mxu0
        %v994 = vld [vmem:[%s383 + $0x1] sm:$0x7f]
        %v995 = vld [vmem:[%s496] sm:$0xff]
        %v996 = vld [vmem:[%s496 + $0x8] sm:$0xff]
        %v997 = vld [vmem:[%s496 + $0x10] sm:$0xff]
        %v998 = vld [vmem:[%s496 + $0x18] sm:$0xff]
        %v1000 = vsel %vm402, %v994, 0
        %1002 = vmatpush.msra.mxu0 0.0
        %1003 = vmatpush.msra.mxu0 0.0
        %1004 = vmatpush.msra.mxu0 0.0
        %1005 = vmatpush.msra.mxu0 0.0
        %1006 = vmatpush.msra.mxu0 0.0
        %1007 = vmatpush.msra.mxu0 0.0
        %1008 = vmatpush.msra.mxu0 0.0
        %1009 = vmatpush.msra.mxu0 0.0
        %1010 = vmatpush.msra.mxu0 0.0
        %1011 = vmatpush.msra.mxu0 0.0
        %1012 = vmatpush.msra.mxu0 0.0
        %1013 = vmatpush.msra.mxu0 0.0
        %1014 = vmatpush.msra.mxu0 %v998
        %1015 = vmatpush.msra.mxu0 %v997
        %1016 = vmatpush.msra.mxu0 %v996
        %1017 = vmatpush.msra.mxu0 %v995
        %1018 = vmatmul.f32.gmra.mxu0 %v1000
        %v1019 = vpop.f32.mrf.mxu0
        %v1020 = vadd.f32 0.0, %v1019
        %1021 = vdwg.mxu0
        %v1022 = vadd.f32 %v948, %v1020
        %v1023 = vld [vmem:[%s525] sm:$0xff]
        %v1024 = vld [vmem:[%s525 + $0x8] sm:$0xff]
        %v1025 = vld [vmem:[%s525 + $0x10] sm:$0xff]
        %v1026 = vld [vmem:[%s525 + $0x18] sm:$0xff]
        %1027 = vmatpush.msra.mxu0 0.0
        %1028 = vmatpush.msra.mxu0 0.0
        %1029 = vmatpush.msra.mxu0 0.0
        %1030 = vmatpush.msra.mxu0 0.0
        %1031 = vmatpush.msra.mxu0 0.0
        %1032 = vmatpush.msra.mxu0 0.0
        %1033 = vmatpush.msra.mxu0 0.0
        %1034 = vmatpush.msra.mxu0 0.0
        %1035 = vmatpush.msra.mxu0 0.0
        %1036 = vmatpush.msra.mxu0 0.0
        %1037 = vmatpush.msra.mxu0 0.0
        %1038 = vmatpush.msra.mxu0 0.0
        %1039 = vmatpush.msra.mxu0 %v1026
        %1040 = vmatpush.msra.mxu0 %v1025
        %1041 = vmatpush.msra.mxu0 %v1024
        %1042 = vmatpush.msra.mxu0 %v1023
        %1043 = vmatmul.f32.gmra.mxu0 %v1000
        %v1044 = vpop.f32.mrf.mxu0
        %v1045 = vadd.f32 0.0, %v1044
        %1046 = vdwg.mxu0
        %v1047 = vadd.f32 %v992, %v1045
        %v1048 = vld [vmem:[%s395 + $0x1] sm:$0x7f]
        %v1049 = vld [vmem:[%s553] sm:$0xff]
        %v1050 = vld [vmem:[%s553 + $0x8] sm:$0xff]
        %v1051 = vld [vmem:[%s553 + $0x10] sm:$0xff]
        %v1052 = vld [vmem:[%s553 + $0x18] sm:$0xff]
        %v1054 = vsel %vm402, %v1048, 0
        %1056 = vmatpush.msra.mxu0 0.0
        %1057 = vmatpush.msra.mxu0 0.0
        %1058 = vmatpush.msra.mxu0 0.0
        %1059 = vmatpush.msra.mxu0 0.0
        %1060 = vmatpush.msra.mxu0 0.0
        %1061 = vmatpush.msra.mxu0 0.0
        %1062 = vmatpush.msra.mxu0 0.0
        %1063 = vmatpush.msra.mxu0 0.0
        %1064 = vmatpush.msra.mxu0 0.0
        %1065 = vmatpush.msra.mxu0 0.0
        %1066 = vmatpush.msra.mxu0 0.0
        %1067 = vmatpush.msra.mxu0 0.0
        %1068 = vmatpush.msra.mxu0 %v1052
        %1069 = vmatpush.msra.mxu0 %v1051
        %1070 = vmatpush.msra.mxu0 %v1050
        %1071 = vmatpush.msra.mxu0 %v1049
        %1072 = vmatmul.f32.gmra.mxu0 %v1054
        %v1073 = vpop.f32.mrf.mxu0
        %v1074 = vadd.f32 0.0, %v1073
        %1075 = vdwg.mxu0
        %v1076 = vadd.f32 %v1022, %v1074
        %v1077 = vld [vmem:[%s582] sm:$0xff]
        %v1078 = vld [vmem:[%s582 + $0x8] sm:$0xff]
        %v1079 = vld [vmem:[%s582 + $0x10] sm:$0xff]
        %v1080 = vld [vmem:[%s582 + $0x18] sm:$0xff]
        %1081 = vmatpush.msra.mxu0 0.0
        %1082 = vmatpush.msra.mxu0 0.0
        %1083 = vmatpush.msra.mxu0 0.0
        %1084 = vmatpush.msra.mxu0 0.0
        %1085 = vmatpush.msra.mxu0 0.0
        %1086 = vmatpush.msra.mxu0 0.0
        %1087 = vmatpush.msra.mxu0 0.0
        %1088 = vmatpush.msra.mxu0 0.0
        %1089 = vmatpush.msra.mxu0 0.0
        %1090 = vmatpush.msra.mxu0 0.0
        %1091 = vmatpush.msra.mxu0 0.0
        %1092 = vmatpush.msra.mxu0 0.0
        %1093 = vmatpush.msra.mxu0 %v1080
        %1094 = vmatpush.msra.mxu0 %v1079
        %1095 = vmatpush.msra.mxu0 %v1078
        %1096 = vmatpush.msra.mxu0 %v1077
        %1097 = vmatmul.f32.gmra.mxu0 %v1054
        %v1098 = vpop.f32.mrf.mxu0
        %v1099 = vadd.f32 0.0, %v1098
        %1100 = vdwg.mxu0
        %v1101 = vadd.f32 %v1047, %v1099
        %v1102 = vld [vmem:[%s494 + $0x1] sm:$0x7f]
        %v1103 = vld [vmem:[%s609] sm:$0xff]
        %v1104 = vld [vmem:[%s609 + $0x8] sm:$0xff]
        %v1105 = vld [vmem:[%s609 + $0x10] sm:$0xff]
        %v1106 = vld [vmem:[%s609 + $0x18] sm:$0xff]
        %v1108 = vsel %vm402, %v1102, 0
        %1110 = vmatpush.msra.mxu0 0.0
        %1111 = vmatpush.msra.mxu0 0.0
        %1112 = vmatpush.msra.mxu0 0.0
        %1113 = vmatpush.msra.mxu0 0.0
        %1114 = vmatpush.msra.mxu0 0.0
        %1115 = vmatpush.msra.mxu0 0.0
        %1116 = vmatpush.msra.mxu0 0.0
        %1117 = vmatpush.msra.mxu0 0.0
        %1118 = vmatpush.msra.mxu0 0.0
        %1119 = vmatpush.msra.mxu0 0.0
        %1120 = vmatpush.msra.mxu0 0.0
        %1121 = vmatpush.msra.mxu0 0.0
        %1122 = vmatpush.msra.mxu0 %v1106
        %1123 = vmatpush.msra.mxu0 %v1105
        %1124 = vmatpush.msra.mxu0 %v1104
        %1125 = vmatpush.msra.mxu0 %v1103
        %1126 = vmatmul.f32.gmra.mxu0 %v1108
        %v1127 = vpop.f32.mrf.mxu0
        %v1128 = vadd.f32 0.0, %v1127
        %1129 = vdwg.mxu0
        %v1130 = vadd.f32 %v1076, %v1128
        %v1131 = vld [vmem:[%s638] sm:$0xff]
        %v1132 = vld [vmem:[%s638 + $0x8] sm:$0xff]
        %v1133 = vld [vmem:[%s638 + $0x10] sm:$0xff]
        %v1134 = vld [vmem:[%s638 + $0x18] sm:$0xff]
        %1135 = vmatpush.msra.mxu0 0.0
        %1136 = vmatpush.msra.mxu0 0.0
        %1137 = vmatpush.msra.mxu0 0.0
        %1138 = vmatpush.msra.mxu0 0.0
        %1139 = vmatpush.msra.mxu0 0.0
        %1140 = vmatpush.msra.mxu0 0.0
        %1141 = vmatpush.msra.mxu0 0.0
        %1142 = vmatpush.msra.mxu0 0.0
        %1143 = vmatpush.msra.mxu0 0.0
        %1144 = vmatpush.msra.mxu0 0.0
        %1145 = vmatpush.msra.mxu0 0.0
        %1146 = vmatpush.msra.mxu0 0.0
        %1147 = vmatpush.msra.mxu0 %v1134
        %1148 = vmatpush.msra.mxu0 %v1133
        %1149 = vmatpush.msra.mxu0 %v1132
        %1150 = vmatpush.msra.mxu0 %v1131
        %1151 = vmatmul.f32.gmra.mxu0 %v1108
        %v1152 = vpop.f32.mrf.mxu0
        %v1153 = vadd.f32 0.0, %v1152
        %1154 = vdwg.mxu0
        %v1155 = vadd.f32 %v1101, %v1153
        %v1156 = vadd.f32 %v1130, %v665
        %v1157 = vmax.f32 %v1156, 0.0
        %v1158 = vadd.f32 %v1155, %v665
        %v1159 = vmax.f32 %v1158, 0.0
        %v1160 = vmax.f32 %v1157, %v1159
        %1161 = vmatpush.msra.mxu0 0.0
        %1162 = vmatpush.msra.mxu0 0.0
        %1163 = vmatpush.msra.mxu0 0.0
        %1164 = vmatpush.msra.mxu0 0.0
        %1165 = vmatpush.msra.mxu0 0.0
        %1166 = vmatpush.msra.mxu0 0.0
        %1167 = vmatpush.msra.mxu0 0.0
        %1168 = vmatpush.msra.mxu0 0.0
        %1169 = vmatpush.msra.mxu0 0.0
        %1170 = vmatpush.msra.mxu0 0.0
        %1171 = vmatpush.msra.mxu0 0.0
        %1172 = vmatpush.msra.mxu0 0.0
        %1173 = vmatpush.msra.mxu0 %v903
        %1174 = vmatpush.msra.mxu0 %v902
        %1175 = vmatpush.msra.mxu0 %v901
        %1176 = vmatpush.msra.mxu0 %v900
        %1177 = vmatmul.f32.gmra.mxu0 %v1000
        %v1178 = vpop.f32.mrf.mxu0
        %v1179 = vadd.f32 0.0, %v1178
        %1180 = vdwg.mxu0
        %1181 = vmatpush.msra.mxu0 0.0
        %1182 = vmatpush.msra.mxu0 0.0
        %1183 = vmatpush.msra.mxu0 0.0
        %1184 = vmatpush.msra.mxu0 0.0
        %1185 = vmatpush.msra.mxu0 0.0
        %1186 = vmatpush.msra.mxu0 0.0
        %1187 = vmatpush.msra.mxu0 0.0
        %1188 = vmatpush.msra.mxu0 0.0
        %1189 = vmatpush.msra.mxu0 0.0
        %1190 = vmatpush.msra.mxu0 0.0
        %1191 = vmatpush.msra.mxu0 0.0
        %1192 = vmatpush.msra.mxu0 0.0
        %1193 = vmatpush.msra.mxu0 %v894
        %1194 = vmatpush.msra.mxu0 %v893
        %1195 = vmatpush.msra.mxu0 %v892
        %1196 = vmatpush.msra.mxu0 %v891
        %1197 = vmatmul.f32.gmra.mxu0 %v905
        %v1198 = vpop.f32.mrf.mxu0
        %v1199 = vadd.f32 %v1179, %v1198
        %1200 = vdwg.mxu0
        %1201 = vmatpush.msra.mxu0 0.0
        %1202 = vmatpush.msra.mxu0 0.0
        %1203 = vmatpush.msra.mxu0 0.0
        %1204 = vmatpush.msra.mxu0 0.0
        %1205 = vmatpush.msra.mxu0 0.0
        %1206 = vmatpush.msra.mxu0 0.0
        %1207 = vmatpush.msra.mxu0 0.0
        %1208 = vmatpush.msra.mxu0 0.0
        %1209 = vmatpush.msra.mxu0 0.0
        %1210 = vmatpush.msra.mxu0 0.0
        %1211 = vmatpush.msra.mxu0 0.0
        %1212 = vmatpush.msra.mxu0 0.0
        %1213 = vmatpush.msra.mxu0 %v953
        %1214 = vmatpush.msra.mxu0 %v952
        %1215 = vmatpush.msra.mxu0 %v951
        %1216 = vmatpush.msra.mxu0 %v950
        %1217 = vmatmul.f32.gmra.mxu0 %v1000
        %v1218 = vpop.f32.mrf.mxu0
        %v1219 = vadd.f32 0.0, %v1218
        %1220 = vdwg.mxu0
        %1221 = vmatpush.msra.mxu0 0.0
        %1222 = vmatpush.msra.mxu0 0.0
        %1223 = vmatpush.msra.mxu0 0.0
        %1224 = vmatpush.msra.mxu0 0.0
        %1225 = vmatpush.msra.mxu0 0.0
        %1226 = vmatpush.msra.mxu0 0.0
        %1227 = vmatpush.msra.mxu0 0.0
        %1228 = vmatpush.msra.mxu0 0.0
        %1229 = vmatpush.msra.mxu0 0.0
        %1230 = vmatpush.msra.mxu0 0.0
        %1231 = vmatpush.msra.mxu0 0.0
        %1232 = vmatpush.msra.mxu0 0.0
        %1233 = vmatpush.msra.mxu0 %v898
        %1234 = vmatpush.msra.mxu0 %v897
        %1235 = vmatpush.msra.mxu0 %v896
        %1236 = vmatpush.msra.mxu0 %v895
        %1237 = vmatmul.f32.gmra.mxu0 %v905
        %v1238 = vpop.f32.mrf.mxu0
        %v1239 = vadd.f32 %v1219, %v1238
        %1240 = vdwg.mxu0
        %1241 = vmatpush.msra.mxu0 0.0
        %1242 = vmatpush.msra.mxu0 0.0
        %1243 = vmatpush.msra.mxu0 0.0
        %1244 = vmatpush.msra.mxu0 0.0
        %1245 = vmatpush.msra.mxu0 0.0
        %1246 = vmatpush.msra.mxu0 0.0
        %1247 = vmatpush.msra.mxu0 0.0
        %1248 = vmatpush.msra.mxu0 0.0
        %1249 = vmatpush.msra.mxu0 0.0
        %1250 = vmatpush.msra.mxu0 0.0
        %1251 = vmatpush.msra.mxu0 0.0
        %1252 = vmatpush.msra.mxu0 0.0
        %1253 = vmatpush.msra.mxu0 %v998
        %1254 = vmatpush.msra.mxu0 %v997
        %1255 = vmatpush.msra.mxu0 %v996
        %1256 = vmatpush.msra.mxu0 %v995
        %1257 = vmatmul.f32.gmra.mxu0 %v1054
        %v1258 = vpop.f32.mrf.mxu0
        %v1259 = vadd.f32 0.0, %v1258
        %1260 = vdwg.mxu0
        %v1261 = vadd.f32 %v1199, %v1259
        %1262 = vmatpush.msra.mxu0 0.0
        %1263 = vmatpush.msra.mxu0 0.0
        %1264 = vmatpush.msra.mxu0 0.0
        %1265 = vmatpush.msra.mxu0 0.0
        %1266 = vmatpush.msra.mxu0 0.0
        %1267 = vmatpush.msra.mxu0 0.0
        %1268 = vmatpush.msra.mxu0 0.0
        %1269 = vmatpush.msra.mxu0 0.0
        %1270 = vmatpush.msra.mxu0 0.0
        %1271 = vmatpush.msra.mxu0 0.0
        %1272 = vmatpush.msra.mxu0 0.0
        %1273 = vmatpush.msra.mxu0 0.0
        %1274 = vmatpush.msra.mxu0 %v1026
        %1275 = vmatpush.msra.mxu0 %v1025
        %1276 = vmatpush.msra.mxu0 %v1024
        %1277 = vmatpush.msra.mxu0 %v1023
        %1278 = vmatmul.f32.gmra.mxu0 %v1054
        %v1279 = vpop.f32.mrf.mxu0
        %v1280 = vadd.f32 0.0, %v1279
        %1281 = vdwg.mxu0
        %v1282 = vadd.f32 %v1239, %v1280
        %1283 = vmatpush.msra.mxu0 0.0
        %1284 = vmatpush.msra.mxu0 0.0
        %1285 = vmatpush.msra.mxu0 0.0
        %1286 = vmatpush.msra.mxu0 0.0
        %1287 = vmatpush.msra.mxu0 0.0
        %1288 = vmatpush.msra.mxu0 0.0
        %1289 = vmatpush.msra.mxu0 0.0
        %1290 = vmatpush.msra.mxu0 0.0
        %1291 = vmatpush.msra.mxu0 0.0
        %1292 = vmatpush.msra.mxu0 0.0
        %1293 = vmatpush.msra.mxu0 0.0
        %1294 = vmatpush.msra.mxu0 0.0
        %1295 = vmatpush.msra.mxu0 %v1052
        %1296 = vmatpush.msra.mxu0 %v1051
        %1297 = vmatpush.msra.mxu0 %v1050
        %1298 = vmatpush.msra.mxu0 %v1049
        %1299 = vmatmul.f32.gmra.mxu0 %v1108
        %v1300 = vpop.f32.mrf.mxu0
        %v1301 = vadd.f32 0.0, %v1300
        %1302 = vdwg.mxu0
        %v1303 = vadd.f32 %v1261, %v1301
        %1304 = vmatpush.msra.mxu0 0.0
        %1305 = vmatpush.msra.mxu0 0.0
        %1306 = vmatpush.msra.mxu0 0.0
        %1307 = vmatpush.msra.mxu0 0.0
        %1308 = vmatpush.msra.mxu0 0.0
        %1309 = vmatpush.msra.mxu0 0.0
        %1310 = vmatpush.msra.mxu0 0.0
        %1311 = vmatpush.msra.mxu0 0.0
        %1312 = vmatpush.msra.mxu0 0.0
        %1313 = vmatpush.msra.mxu0 0.0
        %1314 = vmatpush.msra.mxu0 0.0
        %1315 = vmatpush.msra.mxu0 0.0
        %1316 = vmatpush.msra.mxu0 %v1080
        %1317 = vmatpush.msra.mxu0 %v1079
        %1318 = vmatpush.msra.mxu0 %v1078
        %1319 = vmatpush.msra.mxu0 %v1077
        %1320 = vmatmul.f32.gmra.mxu0 %v1108
        %v1321 = vpop.f32.mrf.mxu0
        %v1322 = vadd.f32 0.0, %v1321
        %1323 = vdwg.mxu0
        %v1324 = vadd.f32 %v1282, %v1322
        %v1325 = vld [vmem:[%s551 + $0x1] sm:$0x7f]
        %v1327 = vsel %vm402, %v1325, 0
        %1329 = vmatpush.msra.mxu0 0.0
        %1330 = vmatpush.msra.mxu0 0.0
        %1331 = vmatpush.msra.mxu0 0.0
        %1332 = vmatpush.msra.mxu0 0.0
        %1333 = vmatpush.msra.mxu0 0.0
        %1334 = vmatpush.msra.mxu0 0.0
        %1335 = vmatpush.msra.mxu0 0.0
        %1336 = vmatpush.msra.mxu0 0.0
        %1337 = vmatpush.msra.mxu0 0.0
        %1338 = vmatpush.msra.mxu0 0.0
        %1339 = vmatpush.msra.mxu0 0.0
        %1340 = vmatpush.msra.mxu0 0.0
        %1341 = vmatpush.msra.mxu0 %v1106
        %1342 = vmatpush.msra.mxu0 %v1105
        %1343 = vmatpush.msra.mxu0 %v1104
        %1344 = vmatpush.msra.mxu0 %v1103
        %1345 = vmatmul.f32.gmra.mxu0 %v1327
        %v1346 = vpop.f32.mrf.mxu0
        %v1347 = vadd.f32 0.0, %v1346
        %1348 = vdwg.mxu0
        %v1349 = vadd.f32 %v1303, %v1347
        %1350 = vmatpush.msra.mxu0 0.0
        %1351 = vmatpush.msra.mxu0 0.0
        %1352 = vmatpush.msra.mxu0 0.0
        %1353 = vmatpush.msra.mxu0 0.0
        %1354 = vmatpush.msra.mxu0 0.0
        %1355 = vmatpush.msra.mxu0 0.0
        %1356 = vmatpush.msra.mxu0 0.0
        %1357 = vmatpush.msra.mxu0 0.0
        %1358 = vmatpush.msra.mxu0 0.0
        %1359 = vmatpush.msra.mxu0 0.0
        %1360 = vmatpush.msra.mxu0 0.0
        %1361 = vmatpush.msra.mxu0 0.0
        %1362 = vmatpush.msra.mxu0 %v1134
        %1363 = vmatpush.msra.mxu0 %v1133
        %1364 = vmatpush.msra.mxu0 %v1132
        %1365 = vmatpush.msra.mxu0 %v1131
        %1366 = vmatmul.f32.gmra.mxu0 %v1327
        %v1367 = vpop.f32.mrf.mxu0
        %v1368 = vadd.f32 0.0, %v1367
        %1369 = vdwg.mxu0
        %v1370 = vadd.f32 %v1324, %v1368
        %v1371 = vadd.f32 %v1349, %v665
        %v1372 = vmax.f32 %v1371, 0.0
        %v1373 = vmax.f32 %v1160, %v1372
        %v1374 = vadd.f32 %v1370, %v665
        %v1375 = vmax.f32 %v1374, 0.0
        %v1376 = vmax.f32 %v1373, %v1375
        %s1377 = scalar_lea.vmem [#allocation2], 8
        %1378 = vst.msk [vmem:[%s1377] sm:$0x7f] %vm888, %v1376
        %v1379 = vld [vmem:[%s4] sm:$0x1]
        %v1380 = vld [vmem:[#allocation2] sm:$0x1f]
        %v1381 = vld [vmem:[%s3] sm:$0xff]
        %v1382 = vld [vmem:[%s3 + $0x8] sm:$0xff]
        %v1383 = vld [vmem:[%s3 + $0x10] sm:$0xff]
        %v1384 = vld [vmem:[%s3 + $0x18] sm:$0xff]
        %v1385 = vld [vmem:[%s3 + $0x20] sm:$0xff]
        %v1386 = vld [vmem:[%s3 + $0x28] sm:$0xff]
        %v1387 = vld [vmem:[%s3 + $0x30] sm:$0xff]
        %v1388 = vld [vmem:[%s3 + $0x38] sm:$0xff]
        %v1389 = vld [vmem:[%s3 + $0x40] sm:$0xff]
        %v1390 = vld [vmem:[%s3 + $0x48] sm:$0xff]
        %v1391 = vld [vmem:[%s3 + $0x50] sm:$0xf]
        %s1392 = scalar_lea.vmem %s3, 440
        %v1393 = vld [vmem:[%s1392] sm:$0xff]
        %v1394 = vld [vmem:[%s1392 + $0x8] sm:$0xff]
        %v1395 = vld [vmem:[%s1392 + $0x10] sm:$0xff]
        %v1396 = vld [vmem:[%s1392 + $0x18] sm:$0xff]
        %v1397 = vld [vmem:[%s1392 + $0x20] sm:$0xff]
        %v1398 = vld [vmem:[%s1392 + $0x28] sm:$0xff]
        %v1399 = vld [vmem:[%s1392 + $0x30] sm:$0xff]
        %v1400 = vld [vmem:[%s1392 + $0x38] sm:$0xff]
        %v1401 = vld [vmem:[%s1392 + $0x40] sm:$0xff]
        %v1402 = vld [vmem:[%s1392 + $0x48] sm:$0xff]
        %v1403 = vld [vmem:[%s1392 + $0x50] sm:$0xf]
        %v1404 = vld [vmem:[%s1377] sm:$0x1f]
        %s1405 = scalar_lea.vmem %s3, 88
        %v1406 = vld [vmem:[%s1405] sm:$0xff]
        %v1407 = vld [vmem:[%s1405 + $0x8] sm:$0xff]
        %v1408 = vld [vmem:[%s1405 + $0x10] sm:$0xff]
        %v1409 = vld [vmem:[%s1405 + $0x18] sm:$0xff]
        %v1410 = vld [vmem:[%s1405 + $0x20] sm:$0xff]
        %v1411 = vld [vmem:[%s1405 + $0x28] sm:$0xff]
        %v1412 = vld [vmem:[%s1405 + $0x30] sm:$0xff]
        %v1413 = vld [vmem:[%s1405 + $0x38] sm:$0xff]
        %v1414 = vld [vmem:[%s1405 + $0x40] sm:$0xff]
        %v1415 = vld [vmem:[%s1405 + $0x48] sm:$0xff]
        %v1416 = vld [vmem:[%s1405 + $0x50] sm:$0xf]
        %vm1417 = vcmask 687104
        %v1419 = vsel %vm1417, %v1404, 0
        %vm1421 = vcmask 1043456
        %v1423 = vsel %vm1421, %v1416, 0
        %1425 = vmatpush.msra.mxu0 0.0
        %1426 = vmatpush.msra.mxu0 0.0
        %1427 = vmatpush.msra.mxu0 0.0
        %1428 = vmatpush.msra.mxu0 0.0
        %1429 = vmatpush.msra.mxu0 0.0
        %1430 = vmatpush.msra.mxu0 %v1423
        %1431 = vmatpush.msra.mxu0 %v1415
        %1432 = vmatpush.msra.mxu0 %v1414
        %1433 = vmatpush.msra.mxu0 %v1413
        %1434 = vmatpush.msra.mxu0 %v1412
        %1435 = vmatpush.msra.mxu0 %v1411
        %1436 = vmatpush.msra.mxu0 %v1410
        %1437 = vmatpush.msra.mxu0 %v1409
        %1438 = vmatpush.msra.mxu0 %v1408
        %1439 = vmatpush.msra.mxu0 %v1407
        %1440 = vmatpush.msra.mxu0 %v1406
        %1441 = vmatmul.f32.gmra.mxu0 %v1419
        %v1442 = vpop.f32.mrf.mxu0
        %v1443 = vadd.f32 0.0, %v1442
        %1444 = vdwg.mxu0
        %v1446 = vsel %vm1417, %v1380, 0
        %v1449 = vsel %vm1421, %v1391, 0
        %1451 = vmatpush.msra.mxu0 0.0
        %1452 = vmatpush.msra.mxu0 0.0
        %1453 = vmatpush.msra.mxu0 0.0
        %1454 = vmatpush.msra.mxu0 0.0
        %1455 = vmatpush.msra.mxu0 0.0
        %1456 = vmatpush.msra.mxu0 %v1449
        %1457 = vmatpush.msra.mxu0 %v1390
        %1458 = vmatpush.msra.mxu0 %v1389
        %1459 = vmatpush.msra.mxu0 %v1388
        %1460 = vmatpush.msra.mxu0 %v1387
        %1461 = vmatpush.msra.mxu0 %v1386
        %1462 = vmatpush.msra.mxu0 %v1385
        %1463 = vmatpush.msra.mxu0 %v1384
        %1464 = vmatpush.msra.mxu0 %v1383
        %1465 = vmatpush.msra.mxu0 %v1382
        %1466 = vmatpush.msra.mxu0 %v1381
        %1467 = vmatmul.f32.gmra.mxu0 %v1446
        %v1468 = vpop.f32.mrf.mxu0
        %v1469 = vadd.f32 %v1443, %v1468
        %1470 = vdwg.mxu0
        %s1471 = scalar_lea.vmem %s3, 528
        %v1472 = vld [vmem:[%s1471] sm:$0xff]
        %v1473 = vld [vmem:[%s1471 + $0x8] sm:$0xff]
        %v1474 = vld [vmem:[%s1471 + $0x10] sm:$0xff]
        %v1475 = vld [vmem:[%s1471 + $0x18] sm:$0xff]
        %v1476 = vld [vmem:[%s1471 + $0x20] sm:$0xff]
        %v1477 = vld [vmem:[%s1471 + $0x28] sm:$0xff]
        %v1478 = vld [vmem:[%s1471 + $0x30] sm:$0xff]
        %v1479 = vld [vmem:[%s1471 + $0x38] sm:$0xff]
        %v1480 = vld [vmem:[%s1471 + $0x40] sm:$0xff]
        %v1481 = vld [vmem:[%s1471 + $0x48] sm:$0xff]
        %v1482 = vld [vmem:[%s1471 + $0x50] sm:$0xf]
        %v1484 = vsel %vm1421, %v1482, 0
        %1486 = vmatpush.msra.mxu0 0.0
        %1487 = vmatpush.msra.mxu0 0.0
        %1488 = vmatpush.msra.mxu0 0.0
        %1489 = vmatpush.msra.mxu0 0.0
        %1490 = vmatpush.msra.mxu0 0.0
        %1491 = vmatpush.msra.mxu0 %v1484
        %1492 = vmatpush.msra.mxu0 %v1481
        %1493 = vmatpush.msra.mxu0 %v1480
        %1494 = vmatpush.msra.mxu0 %v1479
        %1495 = vmatpush.msra.mxu0 %v1478
        %1496 = vmatpush.msra.mxu0 %v1477
        %1497 = vmatpush.msra.mxu0 %v1476
        %1498 = vmatpush.msra.mxu0 %v1475
        %1499 = vmatpush.msra.mxu0 %v1474
        %1500 = vmatpush.msra.mxu0 %v1473
        %1501 = vmatpush.msra.mxu0 %v1472
        %1502 = vmatmul.f32.gmra.mxu0 %v1419
        %v1503 = vpop.f32.mrf.mxu0
        %v1504 = vadd.f32 0.0, %v1503
        %1505 = vdwg.mxu0
        %v1507 = vsel %vm1421, %v1403, 0
        %1509 = vmatpush.msra.mxu0 0.0
        %1510 = vmatpush.msra.mxu0 0.0
        %1511 = vmatpush.msra.mxu0 0.0
        %1512 = vmatpush.msra.mxu0 0.0
        %1513 = vmatpush.msra.mxu0 0.0
        %1514 = vmatpush.msra.mxu0 %v1507
        %1515 = vmatpush.msra.mxu0 %v1402
        %1516 = vmatpush.msra.mxu0 %v1401
        %1517 = vmatpush.msra.mxu0 %v1400
        %1518 = vmatpush.msra.mxu0 %v1399
        %1519 = vmatpush.msra.mxu0 %v1398
        %1520 = vmatpush.msra.mxu0 %v1397
        %1521 = vmatpush.msra.mxu0 %v1396
        %1522 = vmatpush.msra.mxu0 %v1395
        %1523 = vmatpush.msra.mxu0 %v1394
        %1524 = vmatpush.msra.mxu0 %v1393
        %1525 = vmatmul.f32.gmra.mxu0 %v1446
        %v1526 = vpop.f32.mrf.mxu0
        %v1527 = vadd.f32 %v1504, %v1526
        %1528 = vdwg.mxu0
        %v1529 = vld [vmem:[#allocation2 + $0x1] sm:$0x1f]
        %s1530 = scalar_lea.vmem %s3, 176
        %v1531 = vld [vmem:[%s1530] sm:$0xff]
        %v1532 = vld [vmem:[%s1530 + $0x8] sm:$0xff]
        %v1533 = vld [vmem:[%s1530 + $0x10] sm:$0xff]
        %v1534 = vld [vmem:[%s1530 + $0x18] sm:$0xff]
        %v1535 = vld [vmem:[%s1530 + $0x20] sm:$0xff]
        %v1536 = vld [vmem:[%s1530 + $0x28] sm:$0xff]
        %v1537 = vld [vmem:[%s1530 + $0x30] sm:$0xff]
        %v1538 = vld [vmem:[%s1530 + $0x38] sm:$0xff]
        %v1539 = vld [vmem:[%s1530 + $0x40] sm:$0xff]
        %v1540 = vld [vmem:[%s1530 + $0x48] sm:$0xff]
        %v1541 = vld [vmem:[%s1530 + $0x50] sm:$0xf]
        %v1543 = vsel %vm1417, %v1529, 0
        %v1546 = vsel %vm1421, %v1541, 0
        %1548 = vmatpush.msra.mxu0 0.0
        %1549 = vmatpush.msra.mxu0 0.0
        %1550 = vmatpush.msra.mxu0 0.0
        %1551 = vmatpush.msra.mxu0 0.0
        %1552 = vmatpush.msra.mxu0 0.0
        %1553 = vmatpush.msra.mxu0 %v1546
        %1554 = vmatpush.msra.mxu0 %v1540
        %1555 = vmatpush.msra.mxu0 %v1539
        %1556 = vmatpush.msra.mxu0 %v1538
        %1557 = vmatpush.msra.mxu0 %v1537
        %1558 = vmatpush.msra.mxu0 %v1536
        %1559 = vmatpush.msra.mxu0 %v1535
        %1560 = vmatpush.msra.mxu0 %v1534
        %1561 = vmatpush.msra.mxu0 %v1533
        %1562 = vmatpush.msra.mxu0 %v1532
        %1563 = vmatpush.msra.mxu0 %v1531
        %1564 = vmatmul.f32.gmra.mxu0 %v1543
        %v1565 = vpop.f32.mrf.mxu0
        %v1566 = vadd.f32 0.0, %v1565
        %1567 = vdwg.mxu0
        %v1568 = vadd.f32 %v1469, %v1566
        %s1569 = scalar_lea.vmem %s3, 616
        %v1570 = vld [vmem:[%s1569] sm:$0xff]
        %v1571 = vld [vmem:[%s1569 + $0x8] sm:$0xff]
        %v1572 = vld [vmem:[%s1569 + $0x10] sm:$0xff]
        %v1573 = vld [vmem:[%s1569 + $0x18] sm:$0xff]
        %v1574 = vld [vmem:[%s1569 + $0x20] sm:$0xff]
        %v1575 = vld [vmem:[%s1569 + $0x28] sm:$0xff]
        %v1576 = vld [vmem:[%s1569 + $0x30] sm:$0xff]
        %v1577 = vld [vmem:[%s1569 + $0x38] sm:$0xff]
        %v1578 = vld [vmem:[%s1569 + $0x40] sm:$0xff]
        %v1579 = vld [vmem:[%s1569 + $0x48] sm:$0xff]
        %v1580 = vld [vmem:[%s1569 + $0x50] sm:$0xf]
        %v1582 = vsel %vm1421, %v1580, 0
        %1584 = vmatpush.msra.mxu0 0.0
        %1585 = vmatpush.msra.mxu0 0.0
        %1586 = vmatpush.msra.mxu0 0.0
        %1587 = vmatpush.msra.mxu0 0.0
        %1588 = vmatpush.msra.mxu0 0.0
        %1589 = vmatpush.msra.mxu0 %v1582
        %1590 = vmatpush.msra.mxu0 %v1579
        %1591 = vmatpush.msra.mxu0 %v1578
        %1592 = vmatpush.msra.mxu0 %v1577
        %1593 = vmatpush.msra.mxu0 %v1576
        %1594 = vmatpush.msra.mxu0 %v1575
        %1595 = vmatpush.msra.mxu0 %v1574
        %1596 = vmatpush.msra.mxu0 %v1573
        %1597 = vmatpush.msra.mxu0 %v1572
        %1598 = vmatpush.msra.mxu0 %v1571
        %1599 = vmatpush.msra.mxu0 %v1570
        %1600 = vmatmul.f32.gmra.mxu0 %v1543
        %v1601 = vpop.f32.mrf.mxu0
        %v1602 = vadd.f32 0.0, %v1601
        %1603 = vdwg.mxu0
        %v1604 = vadd.f32 %v1527, %v1602
        %v1605 = vld [vmem:[%s1377 + $0x1] sm:$0x1f]
        %s1606 = scalar_lea.vmem %s3, 264
        %v1607 = vld [vmem:[%s1606] sm:$0xff]
        %v1608 = vld [vmem:[%s1606 + $0x8] sm:$0xff]
        %v1609 = vld [vmem:[%s1606 + $0x10] sm:$0xff]
        %v1610 = vld [vmem:[%s1606 + $0x18] sm:$0xff]
        %v1611 = vld [vmem:[%s1606 + $0x20] sm:$0xff]
        %v1612 = vld [vmem:[%s1606 + $0x28] sm:$0xff]
        %v1613 = vld [vmem:[%s1606 + $0x30] sm:$0xff]
        %v1614 = vld [vmem:[%s1606 + $0x38] sm:$0xff]
        %v1615 = vld [vmem:[%s1606 + $0x40] sm:$0xff]
        %v1616 = vld [vmem:[%s1606 + $0x48] sm:$0xff]
        %v1617 = vld [vmem:[%s1606 + $0x50] sm:$0xf]
        %v1619 = vsel %vm1417, %v1605, 0
        %v1622 = vsel %vm1421, %v1617, 0
        %1624 = vmatpush.msra.mxu0 0.0
        %1625 = vmatpush.msra.mxu0 0.0
        %1626 = vmatpush.msra.mxu0 0.0
        %1627 = vmatpush.msra.mxu0 0.0
        %1628 = vmatpush.msra.mxu0 0.0
        %1629 = vmatpush.msra.mxu0 %v1622
        %1630 = vmatpush.msra.mxu0 %v1616
        %1631 = vmatpush.msra.mxu0 %v1615
        %1632 = vmatpush.msra.mxu0 %v1614
        %1633 = vmatpush.msra.mxu0 %v1613
        %1634 = vmatpush.msra.mxu0 %v1612
        %1635 = vmatpush.msra.mxu0 %v1611
        %1636 = vmatpush.msra.mxu0 %v1610
        %1637 = vmatpush.msra.mxu0 %v1609
        %1638 = vmatpush.msra.mxu0 %v1608
        %1639 = vmatpush.msra.mxu0 %v1607
        %1640 = vmatmul.f32.gmra.mxu0 %v1619
        %v1641 = vpop.f32.mrf.mxu0
        %v1642 = vadd.f32 0.0, %v1641
        %1643 = vdwg.mxu0
        %v1644 = vadd.f32 %v1568, %v1642
        %s1645 = scalar_lea.vmem %s3, 704
        %v1646 = vld [vmem:[%s1645] sm:$0xff]
        %v1647 = vld [vmem:[%s1645 + $0x8] sm:$0xff]
        %v1648 = vld [vmem:[%s1645 + $0x10] sm:$0xff]
        %v1649 = vld [vmem:[%s1645 + $0x18] sm:$0xff]
        %v1650 = vld [vmem:[%s1645 + $0x20] sm:$0xff]
        %v1651 = vld [vmem:[%s1645 + $0x28] sm:$0xff]
        %v1652 = vld [vmem:[%s1645 + $0x30] sm:$0xff]
        %v1653 = vld [vmem:[%s1645 + $0x38] sm:$0xff]
        %v1654 = vld [vmem:[%s1645 + $0x40] sm:$0xff]
        %v1655 = vld [vmem:[%s1645 + $0x48] sm:$0xff]
        %v1656 = vld [vmem:[%s1645 + $0x50] sm:$0xf]
        %v1658 = vsel %vm1421, %v1656, 0
        %1660 = vmatpush.msra.mxu0 0.0
        %1661 = vmatpush.msra.mxu0 0.0
        %1662 = vmatpush.msra.mxu0 0.0
        %1663 = vmatpush.msra.mxu0 0.0
        %1664 = vmatpush.msra.mxu0 0.0
        %1665 = vmatpush.msra.mxu0 %v1658
        %1666 = vmatpush.msra.mxu0 %v1655
        %1667 = vmatpush.msra.mxu0 %v1654
        %1668 = vmatpush.msra.mxu0 %v1653
        %1669 = vmatpush.msra.mxu0 %v1652
        %1670 = vmatpush.msra.mxu0 %v1651
        %1671 = vmatpush.msra.mxu0 %v1650
        %1672 = vmatpush.msra.mxu0 %v1649
        %1673 = vmatpush.msra.mxu0 %v1648
        %1674 = vmatpush.msra.mxu0 %v1647
        %1675 = vmatpush.msra.mxu0 %v1646
        %1676 = vmatmul.f32.gmra.mxu0 %v1619
        %v1677 = vpop.f32.mrf.mxu0
        %v1678 = vadd.f32 0.0, %v1677
        %1679 = vdwg.mxu0
        %v1680 = vadd.f32 %v1604, %v1678
        %v1681 = vld [vmem:[#allocation2 + $0x2] sm:$0x1f]
        %s1682 = scalar_lea.vmem %s3, 352
        %v1683 = vld [vmem:[%s1682] sm:$0xff]
        %v1684 = vld [vmem:[%s1682 + $0x8] sm:$0xff]
        %v1685 = vld [vmem:[%s1682 + $0x10] sm:$0xff]
        %v1686 = vld [vmem:[%s1682 + $0x18] sm:$0xff]
        %v1687 = vld [vmem:[%s1682 + $0x20] sm:$0xff]
        %v1688 = vld [vmem:[%s1682 + $0x28] sm:$0xff]
        %v1689 = vld [vmem:[%s1682 + $0x30] sm:$0xff]
        %v1690 = vld [vmem:[%s1682 + $0x38] sm:$0xff]
        %v1691 = vld [vmem:[%s1682 + $0x40] sm:$0xff]
        %v1692 = vld [vmem:[%s1682 + $0x48] sm:$0xff]
        %v1693 = vld [vmem:[%s1682 + $0x50] sm:$0xf]
        %v1695 = vsel %vm1417, %v1681, 0
        %v1698 = vsel %vm1421, %v1693, 0
        %1700 = vmatpush.msra.mxu0 0.0
        %1701 = vmatpush.msra.mxu0 0.0
        %1702 = vmatpush.msra.mxu0 0.0
        %1703 = vmatpush.msra.mxu0 0.0
        %1704 = vmatpush.msra.mxu0 0.0
        %1705 = vmatpush.msra.mxu0 %v1698
        %1706 = vmatpush.msra.mxu0 %v1692
        %1707 = vmatpush.msra.mxu0 %v1691
        %1708 = vmatpush.msra.mxu0 %v1690
        %1709 = vmatpush.msra.mxu0 %v1689
        %1710 = vmatpush.msra.mxu0 %v1688
        %1711 = vmatpush.msra.mxu0 %v1687
        %1712 = vmatpush.msra.mxu0 %v1686
        %1713 = vmatpush.msra.mxu0 %v1685
        %1714 = vmatpush.msra.mxu0 %v1684
        %1715 = vmatpush.msra.mxu0 %v1683
        %1716 = vmatmul.f32.gmra.mxu0 %v1695
        %v1717 = vpop.f32.mrf.mxu0
        %v1718 = vadd.f32 0.0, %v1717
        %1719 = vdwg.mxu0
        %v1720 = vadd.f32 %v1644, %v1718
        %s1721 = scalar_lea.vmem %s3, 792
        %v1722 = vld [vmem:[%s1721] sm:$0xff]
        %v1723 = vld [vmem:[%s1721 + $0x8] sm:$0xff]
        %v1724 = vld [vmem:[%s1721 + $0x10] sm:$0xff]
        %v1725 = vld [vmem:[%s1721 + $0x18] sm:$0xff]
        %v1726 = vld [vmem:[%s1721 + $0x20] sm:$0xff]
        %v1727 = vld [vmem:[%s1721 + $0x28] sm:$0xff]
        %v1728 = vld [vmem:[%s1721 + $0x30] sm:$0xff]
        %v1729 = vld [vmem:[%s1721 + $0x38] sm:$0xff]
        %v1730 = vld [vmem:[%s1721 + $0x40] sm:$0xff]
        %v1731 = vld [vmem:[%s1721 + $0x48] sm:$0xff]
        %v1732 = vld [vmem:[%s1721 + $0x50] sm:$0xf]
        %v1734 = vsel %vm1421, %v1732, 0
        %1736 = vmatpush.msra.mxu0 0.0
        %1737 = vmatpush.msra.mxu0 0.0
        %1738 = vmatpush.msra.mxu0 0.0
        %1739 = vmatpush.msra.mxu0 0.0
        %1740 = vmatpush.msra.mxu0 0.0
        %1741 = vmatpush.msra.mxu0 %v1734
        %1742 = vmatpush.msra.mxu0 %v1731
        %1743 = vmatpush.msra.mxu0 %v1730
        %1744 = vmatpush.msra.mxu0 %v1729
        %1745 = vmatpush.msra.mxu0 %v1728
        %1746 = vmatpush.msra.mxu0 %v1727
        %1747 = vmatpush.msra.mxu0 %v1726
        %1748 = vmatpush.msra.mxu0 %v1725
        %1749 = vmatpush.msra.mxu0 %v1724
        %1750 = vmatpush.msra.mxu0 %v1723
        %1751 = vmatpush.msra.mxu0 %v1722
        %1752 = vmatmul.f32.gmra.mxu0 %v1695
        %v1753 = vpop.f32.mrf.mxu0
        %v1754 = vadd.f32 0.0, %v1753
        %1755 = vdwg.mxu0
        %v1756 = vadd.f32 %v1680, %v1754
        %v1758 = vperm.slane %v1379, 0
        %v1760 = vadd.f32 %v1720, %v1758
        %v1761 = vmax.f32 %v1760, 0.0
        %v1762 = vadd.f32 %v1756, %v1758
        %v1763 = vmax.f32 %v1762, 0.0
        %v1764 = vmax.f32 %v1761, %v1763
        %1765 = vmatpush.msra.mxu0 0.0
        %1766 = vmatpush.msra.mxu0 0.0
        %1767 = vmatpush.msra.mxu0 0.0
        %1768 = vmatpush.msra.mxu0 0.0
        %1769 = vmatpush.msra.mxu0 0.0
        %1770 = vmatpush.msra.mxu0 %v1423
        %1771 = vmatpush.msra.mxu0 %v1415
        %1772 = vmatpush.msra.mxu0 %v1414
        %1773 = vmatpush.msra.mxu0 %v1413
        %1774 = vmatpush.msra.mxu0 %v1412
        %1775 = vmatpush.msra.mxu0 %v1411
        %1776 = vmatpush.msra.mxu0 %v1410
        %1777 = vmatpush.msra.mxu0 %v1409
        %1778 = vmatpush.msra.mxu0 %v1408
        %1779 = vmatpush.msra.mxu0 %v1407
        %1780 = vmatpush.msra.mxu0 %v1406
        %1781 = vmatmul.f32.gmra.mxu0 %v1543
        %v1782 = vpop.f32.mrf.mxu0
        %v1783 = vadd.f32 0.0, %v1782
        %1784 = vdwg.mxu0
        %1785 = vmatpush.msra.mxu0 0.0
        %1786 = vmatpush.msra.mxu0 0.0
        %1787 = vmatpush.msra.mxu0 0.0
        %1788 = vmatpush.msra.mxu0 0.0
        %1789 = vmatpush.msra.mxu0 0.0
        %1790 = vmatpush.msra.mxu0 %v1449
        %1791 = vmatpush.msra.mxu0 %v1390
        %1792 = vmatpush.msra.mxu0 %v1389
        %1793 = vmatpush.msra.mxu0 %v1388
        %1794 = vmatpush.msra.mxu0 %v1387
        %1795 = vmatpush.msra.mxu0 %v1386
        %1796 = vmatpush.msra.mxu0 %v1385
        %1797 = vmatpush.msra.mxu0 %v1384
        %1798 = vmatpush.msra.mxu0 %v1383
        %1799 = vmatpush.msra.mxu0 %v1382
        %1800 = vmatpush.msra.mxu0 %v1381
        %1801 = vmatmul.f32.gmra.mxu0 %v1419
        %v1802 = vpop.f32.mrf.mxu0
        %v1803 = vadd.f32 %v1783, %v1802
        %1804 = vdwg.mxu0
        %1805 = vmatpush.msra.mxu0 0.0
        %1806 = vmatpush.msra.mxu0 0.0
        %1807 = vmatpush.msra.mxu0 0.0
        %1808 = vmatpush.msra.mxu0 0.0
        %1809 = vmatpush.msra.mxu0 0.0
        %1810 = vmatpush.msra.mxu0 %v1484
        %1811 = vmatpush.msra.mxu0 %v1481
        %1812 = vmatpush.msra.mxu0 %v1480
        %1813 = vmatpush.msra.mxu0 %v1479
        %1814 = vmatpush.msra.mxu0 %v1478
        %1815 = vmatpush.msra.mxu0 %v1477
        %1816 = vmatpush.msra.mxu0 %v1476
        %1817 = vmatpush.msra.mxu0 %v1475
        %1818 = vmatpush.msra.mxu0 %v1474
        %1819 = vmatpush.msra.mxu0 %v1473
        %1820 = vmatpush.msra.mxu0 %v1472
        %1821 = vmatmul.f32.gmra.mxu0 %v1543
        %v1822 = vpop.f32.mrf.mxu0
        %v1823 = vadd.f32 0.0, %v1822
        %1824 = vdwg.mxu0
        %1825 = vmatpush.msra.mxu0 0.0
        %1826 = vmatpush.msra.mxu0 0.0
        %1827 = vmatpush.msra.mxu0 0.0
        %1828 = vmatpush.msra.mxu0 0.0
        %1829 = vmatpush.msra.mxu0 0.0
        %1830 = vmatpush.msra.mxu0 %v1507
        %1831 = vmatpush.msra.mxu0 %v1402
        %1832 = vmatpush.msra.mxu0 %v1401
        %1833 = vmatpush.msra.mxu0 %v1400
        %1834 = vmatpush.msra.mxu0 %v1399
        %1835 = vmatpush.msra.mxu0 %v1398
        %1836 = vmatpush.msra.mxu0 %v1397
        %1837 = vmatpush.msra.mxu0 %v1396
        %1838 = vmatpush.msra.mxu0 %v1395
        %1839 = vmatpush.msra.mxu0 %v1394
        %1840 = vmatpush.msra.mxu0 %v1393
        %1841 = vmatmul.f32.gmra.mxu0 %v1419
        %v1842 = vpop.f32.mrf.mxu0
        %v1843 = vadd.f32 %v1823, %v1842
        %1844 = vdwg.mxu0
        %1845 = vmatpush.msra.mxu0 0.0
        %1846 = vmatpush.msra.mxu0 0.0
        %1847 = vmatpush.msra.mxu0 0.0
        %1848 = vmatpush.msra.mxu0 0.0
        %1849 = vmatpush.msra.mxu0 0.0
        %1850 = vmatpush.msra.mxu0 %v1546
        %1851 = vmatpush.msra.mxu0 %v1540
        %1852 = vmatpush.msra.mxu0 %v1539
        %1853 = vmatpush.msra.mxu0 %v1538
        %1854 = vmatpush.msra.mxu0 %v1537
        %1855 = vmatpush.msra.mxu0 %v1536
        %1856 = vmatpush.msra.mxu0 %v1535
        %1857 = vmatpush.msra.mxu0 %v1534
        %1858 = vmatpush.msra.mxu0 %v1533
        %1859 = vmatpush.msra.mxu0 %v1532
        %1860 = vmatpush.msra.mxu0 %v1531
        %1861 = vmatmul.f32.gmra.mxu0 %v1619
        %v1862 = vpop.f32.mrf.mxu0
        %v1863 = vadd.f32 0.0, %v1862
        %1864 = vdwg.mxu0
        %v1865 = vadd.f32 %v1803, %v1863
        %1866 = vmatpush.msra.mxu0 0.0
        %1867 = vmatpush.msra.mxu0 0.0
        %1868 = vmatpush.msra.mxu0 0.0
        %1869 = vmatpush.msra.mxu0 0.0
        %1870 = vmatpush.msra.mxu0 0.0
        %1871 = vmatpush.msra.mxu0 %v1582
        %1872 = vmatpush.msra.mxu0 %v1579
        %1873 = vmatpush.msra.mxu0 %v1578
        %1874 = vmatpush.msra.mxu0 %v1577
        %1875 = vmatpush.msra.mxu0 %v1576
        %1876 = vmatpush.msra.mxu0 %v1575
        %1877 = vmatpush.msra.mxu0 %v1574
        %1878 = vmatpush.msra.mxu0 %v1573
        %1879 = vmatpush.msra.mxu0 %v1572
        %1880 = vmatpush.msra.mxu0 %v1571
        %1881 = vmatpush.msra.mxu0 %v1570
        %1882 = vmatmul.f32.gmra.mxu0 %v1619
        %v1883 = vpop.f32.mrf.mxu0
        %v1884 = vadd.f32 0.0, %v1883
        %1885 = vdwg.mxu0
        %v1886 = vadd.f32 %v1843, %v1884
        %1887 = vmatpush.msra.mxu0 0.0
        %1888 = vmatpush.msra.mxu0 0.0
        %1889 = vmatpush.msra.mxu0 0.0
        %1890 = vmatpush.msra.mxu0 0.0
        %1891 = vmatpush.msra.mxu0 0.0
        %1892 = vmatpush.msra.mxu0 %v1622
        %1893 = vmatpush.msra.mxu0 %v1616
        %1894 = vmatpush.msra.mxu0 %v1615
        %1895 = vmatpush.msra.mxu0 %v1614
        %1896 = vmatpush.msra.mxu0 %v1613
        %1897 = vmatpush.msra.mxu0 %v1612
        %1898 = vmatpush.msra.mxu0 %v1611
        %1899 = vmatpush.msra.mxu0 %v1610
        %1900 = vmatpush.msra.mxu0 %v1609
        %1901 = vmatpush.msra.mxu0 %v1608
        %1902 = vmatpush.msra.mxu0 %v1607
        %1903 = vmatmul.f32.gmra.mxu0 %v1695
        %v1904 = vpop.f32.mrf.mxu0
        %v1905 = vadd.f32 0.0, %v1904
        %1906 = vdwg.mxu0
        %v1907 = vadd.f32 %v1865, %v1905
        %1908 = vmatpush.msra.mxu0 0.0
        %1909 = vmatpush.msra.mxu0 0.0
        %1910 = vmatpush.msra.mxu0 0.0
        %1911 = vmatpush.msra.mxu0 0.0
        %1912 = vmatpush.msra.mxu0 0.0
        %1913 = vmatpush.msra.mxu0 %v1658
        %1914 = vmatpush.msra.mxu0 %v1655
        %1915 = vmatpush.msra.mxu0 %v1654
        %1916 = vmatpush.msra.mxu0 %v1653
        %1917 = vmatpush.msra.mxu0 %v1652
        %1918 = vmatpush.msra.mxu0 %v1651
        %1919 = vmatpush.msra.mxu0 %v1650
        %1920 = vmatpush.msra.mxu0 %v1649
        %1921 = vmatpush.msra.mxu0 %v1648
        %1922 = vmatpush.msra.mxu0 %v1647
        %1923 = vmatpush.msra.mxu0 %v1646
        %1924 = vmatmul.f32.gmra.mxu0 %v1695
        %v1925 = vpop.f32.mrf.mxu0
        %v1926 = vadd.f32 0.0, %v1925
        %1927 = vdwg.mxu0
        %v1928 = vadd.f32 %v1886, %v1926
        %v1929 = vld [vmem:[%s1377 + $0x2] sm:$0x1f]
        %v1931 = vsel %vm1417, %v1929, 0
        %1933 = vmatpush.msra.mxu0 0.0
        %1934 = vmatpush.msra.mxu0 0.0
        %1935 = vmatpush.msra.mxu0 0.0
        %1936 = vmatpush.msra.mxu0 0.0
        %1937 = vmatpush.msra.mxu0 0.0
        %1938 = vmatpush.msra.mxu0 %v1698
        %1939 = vmatpush.msra.mxu0 %v1692
        %1940 = vmatpush.msra.mxu0 %v1691
        %1941 = vmatpush.msra.mxu0 %v1690
        %1942 = vmatpush.msra.mxu0 %v1689
        %1943 = vmatpush.msra.mxu0 %v1688
        %1944 = vmatpush.msra.mxu0 %v1687
        %1945 = vmatpush.msra.mxu0 %v1686
        %1946 = vmatpush.msra.mxu0 %v1685
        %1947 = vmatpush.msra.mxu0 %v1684
        %1948 = vmatpush.msra.mxu0 %v1683
        %1949 = vmatmul.f32.gmra.mxu0 %v1931
        %v1950 = vpop.f32.mrf.mxu0
        %v1951 = vadd.f32 0.0, %v1950
        %1952 = vdwg.mxu0
        %v1953 = vadd.f32 %v1907, %v1951
        %1954 = vmatpush.msra.mxu0 0.0
        %1955 = vmatpush.msra.mxu0 0.0
        %1956 = vmatpush.msra.mxu0 0.0
        %1957 = vmatpush.msra.mxu0 0.0
        %1958 = vmatpush.msra.mxu0 0.0
        %1959 = vmatpush.msra.mxu0 %v1734
        %1960 = vmatpush.msra.mxu0 %v1731
        %1961 = vmatpush.msra.mxu0 %v1730
        %1962 = vmatpush.msra.mxu0 %v1729
        %1963 = vmatpush.msra.mxu0 %v1728
        %1964 = vmatpush.msra.mxu0 %v1727
        %1965 = vmatpush.msra.mxu0 %v1726
        %1966 = vmatpush.msra.mxu0 %v1725
        %1967 = vmatpush.msra.mxu0 %v1724
        %1968 = vmatpush.msra.mxu0 %v1723
        %1969 = vmatpush.msra.mxu0 %v1722
        %1970 = vmatmul.f32.gmra.mxu0 %v1931
        %v1971 = vpop.f32.mrf.mxu0
        %v1972 = vadd.f32 0.0, %v1971
        %1973 = vdwg.mxu0
        %v1974 = vadd.f32 %v1928, %v1972
        %v1975 = vadd.f32 %v1953, %v1758
        %v1976 = vmax.f32 %v1975, 0.0
        %v1977 = vmax.f32 %v1764, %v1976
        %v1978 = vadd.f32 %v1974, %v1758
        %v1979 = vmax.f32 %v1978, 0.0
        %v1980 = vmax.f32 %v1977, %v1979
        %vm1981 = vcmask 651264
        %1982 = vst.msk [vmem:[#allocation3] sm:$0x1f] %vm1981, %v1980
        %v1983 = vld [vmem:[#allocation3] sm:$0x1]
        %v1984 = vld [vmem:[%s5] sm:$0xff]
        %v1985 = vld [vmem:[%s5 + $0x8] sm:$0xff]
        %v1986 = vld [vmem:[%s5 + $0x10] sm:$0xff]
        %v1987 = vld [vmem:[%s5 + $0x18] sm:$0xff]
        %v1988 = vld [vmem:[%s5 + $0x20] sm:$0xff]
        %v1989 = vld [vmem:[%s5 + $0x28] sm:$0xff]
        %v1990 = vld [vmem:[%s5 + $0x30] sm:$0xff]
        %v1991 = vld [vmem:[%s5 + $0x38] sm:$0xff]
        %v1992 = vld [vmem:[%s5 + $0x40] sm:$0xff]
        %v1993 = vld [vmem:[%s5 + $0x48] sm:$0xff]
        %v1994 = vld [vmem:[#allocation3 + $0x1] sm:$0x1]
        %s1995 = scalar_lea.vmem %s5, 80
        %v1996 = vld [vmem:[%s1995] sm:$0xff]
        %v1997 = vld [vmem:[%s1995 + $0x8] sm:$0xff]
        %v1998 = vld [vmem:[%s1995 + $0x10] sm:$0xff]
        %v1999 = vld [vmem:[%s1995 + $0x18] sm:$0xff]
        %v2000 = vld [vmem:[%s1995 + $0x20] sm:$0xff]
        %v2001 = vld [vmem:[%s1995 + $0x28] sm:$0xff]
        %v2002 = vld [vmem:[%s1995 + $0x30] sm:$0xff]
        %v2003 = vld [vmem:[%s1995 + $0x38] sm:$0xff]
        %v2004 = vld [vmem:[%s1995 + $0x40] sm:$0xff]
        %v2005 = vld [vmem:[%s1995 + $0x48] sm:$0xff]
        %vm2006 = vcmask 654336
        %v2008 = vsel %vm2006, %v1994, 0
        %2010 = vmatpush.msra.mxu0 0.0
        %2011 = vmatpush.msra.mxu0 0.0
        %2012 = vmatpush.msra.mxu0 0.0
        %2013 = vmatpush.msra.mxu0 0.0
        %2014 = vmatpush.msra.mxu0 0.0
        %2015 = vmatpush.msra.mxu0 0.0
        %2016 = vmatpush.msra.mxu0 %v2005
        %2017 = vmatpush.msra.mxu0 %v2004
        %2018 = vmatpush.msra.mxu0 %v2003
        %2019 = vmatpush.msra.mxu0 %v2002
        %2020 = vmatpush.msra.mxu0 %v2001
        %2021 = vmatpush.msra.mxu0 %v2000
        %2022 = vmatpush.msra.mxu0 %v1999
        %2023 = vmatpush.msra.mxu0 %v1998
        %2024 = vmatpush.msra.mxu0 %v1997
        %2025 = vmatpush.msra.mxu0 %v1996
        %2026 = vmatmul.f32.gmra.mxu0 %v2008
        %v2027 = vpop.f32.mrf.mxu0
        %v2028 = vadd.f32 0.0, %v2027
        %2029 = vdwg.mxu0
        %v2031 = vsel %vm2006, %v1983, 0
        %2033 = vmatpush.msra.mxu0 0.0
        %2034 = vmatpush.msra.mxu0 0.0
        %2035 = vmatpush.msra.mxu0 0.0
        %2036 = vmatpush.msra.mxu0 0.0
        %2037 = vmatpush.msra.mxu0 0.0
        %2038 = vmatpush.msra.mxu0 0.0
        %2039 = vmatpush.msra.mxu0 %v1993
        %2040 = vmatpush.msra.mxu0 %v1992
        %2041 = vmatpush.msra.mxu0 %v1991
        %2042 = vmatpush.msra.mxu0 %v1990
        %2043 = vmatpush.msra.mxu0 %v1989
        %2044 = vmatpush.msra.mxu0 %v1988
        %2045 = vmatpush.msra.mxu0 %v1987
        %2046 = vmatpush.msra.mxu0 %v1986
        %2047 = vmatpush.msra.mxu0 %v1985
        %2048 = vmatpush.msra.mxu0 %v1984
        %2049 = vmatmul.f32.gmra.mxu0 %v2031
        %v2050 = vpop.f32.mrf.mxu0
        %v2051 = vadd.f32 %v2028, %v2050
        %2052 = vdwg.mxu0
        %v2053 = vld [vmem:[#allocation3 + $0x2] sm:$0x1]
        %s2054 = scalar_lea.vmem %s5, 160
        %v2055 = vld [vmem:[%s2054] sm:$0xff]
        %v2056 = vld [vmem:[%s2054 + $0x8] sm:$0xff]
        %v2057 = vld [vmem:[%s2054 + $0x10] sm:$0xff]
        %v2058 = vld [vmem:[%s2054 + $0x18] sm:$0xff]
        %v2059 = vld [vmem:[%s2054 + $0x20] sm:$0xff]
        %v2060 = vld [vmem:[%s2054 + $0x28] sm:$0xff]
        %v2061 = vld [vmem:[%s2054 + $0x30] sm:$0xff]
        %v2062 = vld [vmem:[%s2054 + $0x38] sm:$0xff]
        %v2063 = vld [vmem:[%s2054 + $0x40] sm:$0xff]
        %v2064 = vld [vmem:[%s2054 + $0x48] sm:$0xff]
        %v2066 = vsel %vm2006, %v2053, 0
        %2068 = vmatpush.msra.mxu0 0.0
        %2069 = vmatpush.msra.mxu0 0.0
        %2070 = vmatpush.msra.mxu0 0.0
        %2071 = vmatpush.msra.mxu0 0.0
        %2072 = vmatpush.msra.mxu0 0.0
        %2073 = vmatpush.msra.mxu0 0.0
        %2074 = vmatpush.msra.mxu0 %v2064
        %2075 = vmatpush.msra.mxu0 %v2063
        %2076 = vmatpush.msra.mxu0 %v2062
        %2077 = vmatpush.msra.mxu0 %v2061
        %2078 = vmatpush.msra.mxu0 %v2060
        %2079 = vmatpush.msra.mxu0 %v2059
        %2080 = vmatpush.msra.mxu0 %v2058
        %2081 = vmatpush.msra.mxu0 %v2057
        %2082 = vmatpush.msra.mxu0 %v2056
        %2083 = vmatpush.msra.mxu0 %v2055
        %2084 = vmatmul.f32.gmra.mxu0 %v2066
        %v2085 = vpop.f32.mrf.mxu0
        %v2086 = vadd.f32 0.0, %v2085
        %2087 = vdwg.mxu0
        %v2088 = vadd.f32 %v2051, %v2086
        %v2089 = vld [vmem:[#allocation3 + $0x3] sm:$0x1]
        %s2090 = scalar_lea.vmem %s5, 240
        %v2091 = vld [vmem:[%s2090] sm:$0xff]
        %v2092 = vld [vmem:[%s2090 + $0x8] sm:$0xff]
        %v2093 = vld [vmem:[%s2090 + $0x10] sm:$0xff]
        %v2094 = vld [vmem:[%s2090 + $0x18] sm:$0xff]
        %v2095 = vld [vmem:[%s2090 + $0x20] sm:$0xff]
        %v2096 = vld [vmem:[%s2090 + $0x28] sm:$0xff]
        %v2097 = vld [vmem:[%s2090 + $0x30] sm:$0xff]
        %v2098 = vld [vmem:[%s2090 + $0x38] sm:$0xff]
        %v2099 = vld [vmem:[%s2090 + $0x40] sm:$0xff]
        %v2100 = vld [vmem:[%s2090 + $0x48] sm:$0xff]
        %v2102 = vsel %vm2006, %v2089, 0
        %2104 = vmatpush.msra.mxu0 0.0
        %2105 = vmatpush.msra.mxu0 0.0
        %2106 = vmatpush.msra.mxu0 0.0
        %2107 = vmatpush.msra.mxu0 0.0
        %2108 = vmatpush.msra.mxu0 0.0
        %2109 = vmatpush.msra.mxu0 0.0
        %2110 = vmatpush.msra.mxu0 %v2100
        %2111 = vmatpush.msra.mxu0 %v2099
        %2112 = vmatpush.msra.mxu0 %v2098
        %2113 = vmatpush.msra.mxu0 %v2097
        %2114 = vmatpush.msra.mxu0 %v2096
        %2115 = vmatpush.msra.mxu0 %v2095
        %2116 = vmatpush.msra.mxu0 %v2094
        %2117 = vmatpush.msra.mxu0 %v2093
        %2118 = vmatpush.msra.mxu0 %v2092
        %2119 = vmatpush.msra.mxu0 %v2091
        %2120 = vmatmul.f32.gmra.mxu0 %v2102
        %v2121 = vpop.f32.mrf.mxu0
        %v2122 = vadd.f32 0.0, %v2121
        %2123 = vdwg.mxu0
        %v2124 = vadd.f32 %v2088, %v2122
        %v2125 = vld [vmem:[#allocation3 + $0x4] sm:$0x1]
        %s2126 = scalar_lea.vmem %s5, 320
        %v2127 = vld [vmem:[%s2126] sm:$0xff]
        %v2128 = vld [vmem:[%s2126 + $0x8] sm:$0xff]
        %v2129 = vld [vmem:[%s2126 + $0x10] sm:$0xff]
        %v2130 = vld [vmem:[%s2126 + $0x18] sm:$0xff]
        %v2131 = vld [vmem:[%s2126 + $0x20] sm:$0xff]
        %v2132 = vld [vmem:[%s2126 + $0x28] sm:$0xff]
        %v2133 = vld [vmem:[%s2126 + $0x30] sm:$0xff]
        %v2134 = vld [vmem:[%s2126 + $0x38] sm:$0xff]
        %v2135 = vld [vmem:[%s2126 + $0x40] sm:$0xff]
        %v2136 = vld [vmem:[%s2126 + $0x48] sm:$0xff]
        %v2138 = vsel %vm2006, %v2125, 0
        %2140 = vmatpush.msra.mxu0 0.0
        %2141 = vmatpush.msra.mxu0 0.0
        %2142 = vmatpush.msra.mxu0 0.0
        %2143 = vmatpush.msra.mxu0 0.0
        %2144 = vmatpush.msra.mxu0 0.0
        %2145 = vmatpush.msra.mxu0 0.0
        %2146 = vmatpush.msra.mxu0 %v2136
        %2147 = vmatpush.msra.mxu0 %v2135
        %2148 = vmatpush.msra.mxu0 %v2134
        %2149 = vmatpush.msra.mxu0 %v2133
        %2150 = vmatpush.msra.mxu0 %v2132
        %2151 = vmatpush.msra.mxu0 %v2131
        %2152 = vmatpush.msra.mxu0 %v2130
        %2153 = vmatpush.msra.mxu0 %v2129
        %2154 = vmatpush.msra.mxu0 %v2128
        %2155 = vmatpush.msra.mxu0 %v2127
        %2156 = vmatmul.f32.gmra.mxu0 %v2138
        %v2157 = vpop.f32.mrf.mxu0
        %v2158 = vadd.f32 0.0, %v2157
        %2159 = vdwg.mxu0
        %v2160 = vadd.f32 %v2124, %v2158
        %v2161 = vld [vmem:[%s6] sm:$0x1]
        %v2162 = vadd.f32 %v2160, %v2161
        %v2163 = vmax.f32 %v2162, 0.0
        %v2164 = vld [vmem:[%s7] sm:$0xff]
        %v2165 = vld [vmem:[%s7 + $0x8] sm:$0xff]
        %v2166 = vld [vmem:[%s7 + $0x10] sm:$0xff]
        %v2167 = vld [vmem:[%s7 + $0x18] sm:$0xff]
        %v2168 = vld [vmem:[%s7 + $0x20] sm:$0xff]
        %v2169 = vld [vmem:[%s7 + $0x28] sm:$0xff]
        %v2170 = vld [vmem:[%s7 + $0x30] sm:$0xff]
        %v2171 = vld [vmem:[%s7 + $0x38] sm:$0xff]
        %v2172 = vld [vmem:[%s7 + $0x40] sm:$0xff]
        %v2173 = vld [vmem:[%s7 + $0x48] sm:$0xff]
        %v2174 = vld [vmem:[%s7 + $0x50] sm:$0xff]
        %v2175 = vld [vmem:[%s7 + $0x58] sm:$0xff]
        %v2176 = vld [vmem:[%s7 + $0x60] sm:$0xff]
        %v2177 = vld [vmem:[%s7 + $0x68] sm:$0xff]
        %v2178 = vld [vmem:[%s7 + $0x70] sm:$0xff]
        %v2179 = vld [vmem:[%s8] sm:$0x1]
        %vm2180 = vcmask 982016
        %v2182 = vsel %vm2180, %v2163, 0
        %2184 = vmatpush.msra.mxu0 0.0
        %2185 = vmatpush.msra.mxu0 %v2178
        %2186 = vmatpush.msra.mxu0 %v2177
        %2187 = vmatpush.msra.mxu0 %v2176
        %2188 = vmatpush.msra.mxu0 %v2175
        %2189 = vmatpush.msra.mxu0 %v2174
        %2190 = vmatpush.msra.mxu0 %v2173
        %2191 = vmatpush.msra.mxu0 %v2172
        %2192 = vmatpush.msra.mxu0 %v2171
        %2193 = vmatpush.msra.mxu0 %v2170
        %2194 = vmatpush.msra.mxu0 %v2169
        %2195 = vmatpush.msra.mxu0 %v2168
        %2196 = vmatpush.msra.mxu0 %v2167
        %2197 = vmatpush.msra.mxu0 %v2166
        %2198 = vmatpush.msra.mxu0 %v2165
        %2199 = vmatpush.msra.mxu0 %v2164
        %2200 = vmatmul.f32.gmra.mxu0 %v2182
        %v2201 = vpop.f32.mrf.mxu0
        %v2202 = vadd.f32 %v2179, %v2201
        %2203 = vdwg.mxu0
        %v2204 = vmax.f32 %v2202, 0.0
        %v2205 = vld [vmem:[%s9] sm:$0xff]
        %v2206 = vld [vmem:[%s9 + $0x8] sm:$0xff]
        %v2207 = vld [vmem:[%s9 + $0x10] sm:$0xff]
        %v2208 = vld [vmem:[%s9 + $0x18] sm:$0xff]
        %v2209 = vld [vmem:[%s9 + $0x20] sm:$0xff]
        %v2210 = vld [vmem:[%s9 + $0x28] sm:$0xff]
        %v2211 = vld [vmem:[%s9 + $0x30] sm:$0xff]
        %v2212 = vld [vmem:[%s9 + $0x38] sm:$0xff]
        %v2213 = vld [vmem:[%s9 + $0x40] sm:$0xff]
        %v2214 = vld [vmem:[%s9 + $0x48] sm:$0xff]
        %v2215 = vld [vmem:[%s9 + $0x50] sm:$0xf]
        %v2216 = vld [vmem:[%s10] sm:$0x1]
        %v2218 = vsel %vm1417, %v2204, 0
        %v2221 = vsel %vm1421, %v2215, 0
        %2223 = vmatpush.msra.mxu0 0.0
        %2224 = vmatpush.msra.mxu0 0.0
        %2225 = vmatpush.msra.mxu0 0.0
        %2226 = vmatpush.msra.mxu0 0.0
        %2227 = vmatpush.msra.mxu0 0.0
        %2228 = vmatpush.msra.mxu0 %v2221
        %2229 = vmatpush.msra.mxu0 %v2214
        %2230 = vmatpush.msra.mxu0 %v2213
        %2231 = vmatpush.msra.mxu0 %v2212
        %2232 = vmatpush.msra.mxu0 %v2211
        %2233 = vmatpush.msra.mxu0 %v2210
        %2234 = vmatpush.msra.mxu0 %v2209
        %2235 = vmatpush.msra.mxu0 %v2208
        %2236 = vmatpush.msra.mxu0 %v2207
        %2237 = vmatpush.msra.mxu0 %v2206
        %2238 = vmatpush.msra.mxu0 %v2205
        %2239 = vmatmul.f32.gmra.mxu0 %v2218
        %v2240 = vpop.f32.mrf.mxu0
        %v2241 = vadd.f32 %v2216, %v2240
        %2242 = vdwg.mxu0
        %vm2243 = vcmask 73728
        %v2244 = vsel %vm2243, %v2241, -inf
        %2245 = vmax.xlane.f32.xlu0 %v2244
        %v2246 = vpop.xlane.xlu0 %2245
        %v2247 = vsub.f32 %v2241, %v2246
        %v2248 = vmul.f32 %v2247, 1.442695
        %v2249 = vpow.pop %v2248
        %v2250 = vsel %vm2243, %v2249, 0.0
        %2251 = vadd.xlane.f32.xlu0 %v2250
        %v2252 = vpop.xlane.xlu0 %2251
        %v2253 = vlog2.pop %v2252
        %v2254 = vmul.f32 %v2253, 0.6931472
        %v2255 = vsub.f32 %v2247, %v2254
        %2256 = vst.msk [vmem:[%s378] sm:$0x1] %vm2243, %v2255
        %s2257 = sand.u32 %s269, 1
        %s2258 = scalar_lea.sflag [#allocation5], %s2257
        %s2259 = sand.u32 %s269, 1
        %s2260 = scalar_lea.vmem [#allocation4], %s2259
        // Predicated region
        $region65: #{lenet_apply.1} parent=63 // pred_check
          %p2261 = pneg %p279
        $region66: #{lenet_apply.1} parent=63 // pred_check_branch
          %2263 = sbr.rel (%p2261) target = $region68
        $region67: #{lenet_apply.1} parent=63 // pred_region
          %2265 = vsyncadd %s2258, 0
          %s2266 = scalar_lea.hbm %s11, %s25
          %s2268 = sshll.u32 %s2260, 4
          %s2269 = int_to_ptr.vmem [resolvable:$true] %s2268
          %s2270 = sshll.u32 %s2266, 4
          %s2271 = int_to_ptr.hbm [resolvable:$true] %s2270
          %2273 = dma.vmem_to_hbm [thread:$0]  %s2269, 16, %s2271, %s2258
        $region68: #{lenet_apply.1} parent=63 // pred_fallthru
          _
      $region64: #{lenet_apply.1} parent=5 // pred_fallthru
        _
      %p2274 = scmp.le.s32.totalorder 2, %s20
      // Predicated region
      $region69: #{lenet_apply.1} parent=5 // pred_check
        %p2275 = pneg %p2274
      $region70: #{lenet_apply.1} parent=5 // pred_check_branch
        %2277 = sbr.rel (%p2275) target = $region72
      $region71: #{lenet_apply.1} parent=5 // pred_region
        %s2278 = ssub.s32 %s20, 2
        // Predicated region
        $region73: #{lenet_apply.1} parent=71 // pred_check
          %p2279 = pneg %p285
        $region74: #{lenet_apply.1} parent=71 // pred_check_branch
          %2281 = sbr.rel (%p2279) target = $region76
        $region75: #{lenet_apply.1} parent=71 // pred_region
          %s2282 = sand.u32 %s270, 1
          %s2283 = scalar_lea.sflag [#allocation5], %s2282
          %s2284 = sand.u32 %s270, 1
          %s2285 = scalar_lea.vmem [#allocation4], %s2284
          %2287 = dma.done %s2283, 16
        $region76: #{lenet_apply.1} parent=71 // pred_fallthru
          _
      $region72: #{lenet_apply.1} parent=5 // pred_fallthru
        _
    $region6: #{lenet_apply.1} parent=1 // loop_footer
      %s24 = sadd.s32 1, %s20
    $region7: #{lenet_apply.1} parent=1 // loop_footer_branch
      %19 = sbr.rel target = $region3
    $region8: #{lenet_apply.1} parent=1 // loop_exit
      _
    %2288 = vsyncpa [#allocation5], 1
    %s2289 = scalar_lea.sflag [#allocation5], 1
    %2290 = vsyncpa %s2289, 1

</llo_original>
